<compile_context>
chip_gen: v7x
topology: tpu7x:2x2x1
jax: 0.10.0
libtpu: 0.0.40
codegen_flags: <defaults>
</compile_context>

<pallas_src>
import math

import jax
import jax.numpy as jnp
from jax.experimental import pallas as pl
from jax.experimental.pallas import tpu as pltpu

EPS = 1e-5

# MXU operand dtype for patches/weights.  float32 keeps the strict 1e-3 check
# below; on v6e/v7x set to jnp.bfloat16 for native MXU rate and half the
# patch-scratch VMEM (then relax the tolerance to ~1e-2 — bf16 operands give
# a few-1e-3 relative error before BN renormalization).
MXU_DTYPE = jnp.float32


def _div_const(x, d):
    """x // d for a trace-time-constant d (strength-reduced for powers of 2)."""
    if d & (d - 1) == 0:
        return jnp.right_shift(x, d.bit_length() - 1)
    return x // d


def _mod_const(x, d):
    if d & (d - 1) == 0:
        return jnp.bitwise_and(x, d - 1)
    return x % d


# ------------------------------ fused kernel ------------------------------- #

def _make_fused_kernel(n, c, h, w, kh, kw):
    m = n * h * w
    ph = (kh - 1) // 2
    pw = (kw - 1) // 2
    inv_m = 1.0 / m

    def kernel(x_ref, w1_ref, w2_ref, gb_ref, o_ref, p_scr):
        # ---- in-kernel im2col: shifted + masked copies into patch scratch ---
        def im2col(src):                         # src: (C, M) f32 value
            lane = jax.lax.broadcasted_iota(jnp.int32, (1, m), 1)
            h_idx = _mod_const(_div_const(lane, w), h)
            w_idx = _mod_const(lane, w)
            for tkh in range(kh):
                for tkw in range(kw):
                    dh = tkh - ph
                    dw = tkw - pw
                    off = dh * w + dw            # shift in flattened N*H*W idx
                    if off == 0:
                        shifted = src
                    else:
                        # shifted[:, p] = src[:, p + off]  (XLU lane rotation)
                        shifted = pltpu.roll(src, shift=(-off) % m, axis=1)
                    valid = ((h_idx >= -dh) & (h_idx < h - dh) &
                             (w_idx >= -dw) & (w_idx < w - dw))
                    tap = tkh * kw + tkw
                    p_scr[pl.ds(tap * c, c), :] = jnp.where(
                        valid, shifted, 0.0).astype(p_scr.dtype)

        # ---- conv (one MXU matmul) + training-mode BN folded to scale/shift -
        def conv_bn(src, w_ref, gamma, beta):
            im2col(src)
            y = jnp.dot(w_ref[...], p_scr[...],
                        preferred_element_type=jnp.float32)       # (C, M)
            s = jnp.sum(y, axis=1, keepdims=True)                 # (C, 1)
            sq = jnp.sum(y * y, axis=1, keepdims=True)            # single pass
            mean = s * inv_m
            var = sq * inv_m - mean * mean                        # biased var
            scale = gamma * jax.lax.rsqrt(var + EPS)              # EUP slot
            shift = beta - mean * scale
            return y * scale + shift                              # 2 VPU ops/el

        x = x_ref[...]                                            # (C, M) f32
        gb = gb_ref[...]                                          # (C, 4)
        g1, be1 = gb[:, 0:1], gb[:, 1:2]
        g2, be2 = gb[:, 2:3], gb[:, 3:4]

        h1 = jnp.maximum(conv_bn(x, w1_ref, g1, be1), 0.0)        # stays in VMEM
        y2 = conv_bn(h1, w2_ref, g2, be2)
        o_ref[...] = jnp.maximum(y2 + x, 0.0)                     # residual+ReLU

    return kernel


# ------------------------------ JAX wrapper -------------------------------- #

def resnet_module_forward(x_nchw, params):
    """Pallas implementation of ResNetModule.forward (PyTorch NCHW in/out)."""
    n, c, h, w = x_nchw.shape
    kh, kw = params["w1"].shape[2], params["w1"].shape[3]
    m = n * h * w

    # Layout plumbing only: channel-major, M-flattened (lane-dense) operands.
    x_cm = jnp.transpose(x_nchw, (1, 0, 2, 3)).reshape(c, m).astype(jnp.float32)

    def flat_w(w_pt):  # (Cout,Cin,KH,KW) -> (Cout, KH*KW*Cin), tap-major cols
        co, ci, a, b = w_pt.shape
        return (jnp.transpose(w_pt, (0, 2, 3, 1))
                .reshape(co, a * b * ci).astype(MXU_DTYPE))

    w1f = flat_w(params["w1"])
    w2f = flat_w(params["w2"])
    # NOTE: conv biases b1/b2 are intentionally NOT passed to the kernel:
    # training-mode BN subtracts the batch mean immediately after each conv,
    # which cancels any per-channel bias exactly (checked vs reference below).
    gb = jnp.stack([params["g1"], params["be1"], params["g2"], params["be2"]],
                   axis=1).astype(jnp.float32)                    # (C, 4)

    kernel = _make_fused_kernel(n, c, h, w, kh, kw)
    vmem = pltpu.MemorySpace.VMEM
    out_cm = pl.pallas_call(
        kernel,
        out_shape=jax.ShapeDtypeStruct((c, m), jnp.float32),
        in_specs=[pl.BlockSpec(memory_space=vmem)] * 4,
        out_specs=pl.BlockSpec(memory_space=vmem),
        scratch_shapes=[pltpu.VMEM((kh * kw * c, m), MXU_DTYPE)],
    )(x_cm, w1f, w2f, gb)

    # NOTE(v7x / large sizes): add a grid over M (tiles >= 512 lanes, marked
    # "parallel"), convert BN to two passes (per-tile sum/sumsq accumulated in
    # VMEM scratch over an "arbitrary" axis, then normalize) and set
    # vmem_limit_bytes.  At these toy shapes a single ungridded block is best.
    return jnp.transpose(out_cm.reshape(c, n, h, w), (1, 0, 2, 3))


# ------------------------------- reference --------------------------------- #

def reference_forward(x_nchw, params):
    """Pure-JAX/XLA reference with full module semantics (incl. conv bias)."""
    x = jnp.transpose(x_nchw, (0, 2, 3, 1)).astype(jnp.float32)

    def conv(hh, w_pt, b):
        w_hwio = jnp.transpose(w_pt, (2, 3, 1, 0))
        y = jax.lax.conv_general_dilated(
            hh, w_hwio, window_strides=(1, 1), padding="SAME",
            dimension_numbers=("NHWC", "HWIO", "NHWC"))
        return y + b[None, None, None, :]

    def bn(y, g, be):
        mu = jnp.mean(y, axis=(0, 1, 2), keepdims=True)
        var = jnp.mean((y - mu) ** 2, axis=(0, 1, 2), keepdims=True)
        return (y - mu) * jax.lax.rsqrt(var + EPS) * g[None, None, None, :] \
            + be[None, None, None, :]

    h1 = jax.nn.relu(bn(conv(x, params["w1"], params["b1"]),
                        params["g1"], params["be1"]))
    h2 = bn(conv(h1, params["w2"], params["b2"]), params["g2"], params["be2"])
    out = jax.nn.relu(h2 + x)
    return jnp.transpose(out, (0, 3, 1, 2))


# ---------------------------------- main ------------------------------------ #

if __name__ == "__main__":
    N, C, H, W = 2, 4, 16, 16
    K = 5  # kernel_size (odd)

    key = jax.random.PRNGKey(0)
    k_x, k_w1, k_b1, k_w2, k_b2 = jax.random.split(key, 5)

    fan_in = C * K * K
    bound = 1.0 / math.sqrt(fan_in)
    params = {
        "w1": jax.random.uniform(k_w1, (C, C, K, K), jnp.float32, -bound, bound),
        "b1": jax.random.uniform(k_b1, (C,), jnp.float32, -bound, bound),
        "w2": jax.random.uniform(k_w2, (C, C, K, K), jnp.float32, -bound, bound),
        "b2": jax.random.uniform(k_b2, (C,), jnp.float32, -bound, bound),
        "g1": jnp.ones((C,), jnp.float32),    # BatchNorm gamma init
        "be1": jnp.zeros((C,), jnp.float32),  # BatchNorm beta init
        "g2": jnp.ones((C,), jnp.float32),
        "be2": jnp.zeros((C,), jnp.float32),
    }

    x = jax.random.normal(k_x, (N, C, H, W), jnp.float32)

    out = jax.block_until_ready(resnet_module_forward(x, params))
    ref = jax.block_until_ready(reference_forward(x, params))

    assert out.shape == (N, C, H, W), out.shape
    assert jnp.allclose(out, ref, atol=1e-3, rtol=1e-3), \
        f"max abs diff = {float(jnp.max(jnp.abs(out - ref)))}"

    print("KERNEL_OK")
</pallas_src>

<mosaic_0001>
module attributes {stable_mosaic.version = 11 : i64} {
  func.func @kernel(%arg0: memref<4x512xf32, #tpu.memory_space<vmem>>, %arg1: memref<4x100xf32, #tpu.memory_space<vmem>>, %arg2: memref<4x100xf32, #tpu.memory_space<vmem>>, %arg3: memref<4x4xf32, #tpu.memory_space<vmem>>, %arg4: memref<4x512xf32, #tpu.memory_space<vmem>>, %arg5: memref<100x512xf32, #tpu.memory_space<vmem>>) attributes {dimension_semantics = [], scalar_prefetch = 0 : i64, scratch_operands = 1 : i64, tpu.core_type = #tpu.core_type<tc>} {
    %c0 = arith.constant 0 : index
    %c0_0 = arith.constant 0 : index
    %0 = vector.load %arg0[%c0, %c0_0] : memref<4x512xf32, #tpu.memory_space<vmem>>, vector<4x512xf32>
    %c0_1 = arith.constant 0 : index
    %c0_2 = arith.constant 0 : index
    %1 = vector.load %arg3[%c0_1, %c0_2] : memref<4x4xf32, #tpu.memory_space<vmem>>, vector<4x4xf32>
    %2 = vector.extract_strided_slice %1 {offsets = [0, 0], sizes = [4, 1], strides = [1, 1]} : vector<4x4xf32> to vector<4x1xf32>
    %3 = vector.extract_strided_slice %1 {offsets = [0, 1], sizes = [4, 1], strides = [1, 1]} : vector<4x4xf32> to vector<4x1xf32>
    %4 = vector.extract_strided_slice %1 {offsets = [0, 2], sizes = [4, 1], strides = [1, 1]} : vector<4x4xf32> to vector<4x1xf32>
    %5 = vector.extract_strided_slice %1 {offsets = [0, 3], sizes = [4, 1], strides = [1, 1]} : vector<4x4xf32> to vector<4x1xf32>
    %6 = tpu.iota {dimensions = array<i32: 1>} : vector<1x512xi32>
    %c4_i32 = arith.constant 4 : i32
    %7 = vector.broadcast %c4_i32 : i32 to vector<1x512xi32>
    %8 = arith.shrsi %6, %7 : vector<1x512xi32>
    %c15_i32 = arith.constant 15 : i32
    %9 = vector.broadcast %c15_i32 : i32 to vector<1x512xi32>
    %10 = arith.andi %8, %9 : vector<1x512xi32>
    %c15_i32_3 = arith.constant 15 : i32
    %11 = vector.broadcast %c15_i32_3 : i32 to vector<1x512xi32>
    %12 = arith.andi %6, %11 : vector<1x512xi32>
    %c34_i32 = arith.constant 34 : i32
    %13 = tpu.dynamic_rotate %0 by %c34_i32 dim 1 : vector<4x512xf32>, i32 -> vector<4x512xf32>
    %c2_i32 = arith.constant 2 : i32
    %14 = vector.broadcast %c2_i32 : i32 to vector<1x512xi32>
    %15 = arith.cmpi sge, %10, %14 : vector<1x512xi32>
    %c18_i32 = arith.constant 18 : i32
    %16 = vector.broadcast %c18_i32 : i32 to vector<1x512xi32>
    %17 = arith.cmpi slt, %10, %16 : vector<1x512xi32>
    %18 = arith.andi %15, %17 : vector<1x512xi1>
    %c2_i32_4 = arith.constant 2 : i32
    %19 = vector.broadcast %c2_i32_4 : i32 to vector<1x512xi32>
    %20 = arith.cmpi sge, %12, %19 : vector<1x512xi32>
    %21 = arith.andi %18, %20 : vector<1x512xi1>
    %c18_i32_5 = arith.constant 18 : i32
    %22 = vector.broadcast %c18_i32_5 : i32 to vector<1x512xi32>
    %23 = arith.cmpi slt, %12, %22 : vector<1x512xi32>
    %24 = arith.andi %21, %23 : vector<1x512xi1>
    %cst = arith.constant 0.000000e+00 : f32
    %25 = vector.shape_cast %24 : vector<1x512xi1> to vector<1x512xi1>
    %26 = vector.broadcast %25 : vector<1x512xi1> to vector<4x512xi1>
    %27 = vector.broadcast %cst : f32 to vector<4x512xf32>
    %28 = arith.select %26, %13, %27 : vector<4x512xi1>, vector<4x512xf32>
    %c0_6 = arith.constant 0 : index
    %c0_7 = arith.constant 0 : index
    %29 = vector.load %arg5[%c0_6, %c0_7] : memref<100x512xf32, #tpu.memory_space<vmem>>, vector<4x512xf32>
    tpu.vector_store %arg5[%c0_6, %c0_7], %28 {strides = array<i32>} : memref<100x512xf32, #tpu.memory_space<vmem>>, vector<4x512xf32>,
    %c33_i32 = arith.constant 33 : i32
    %30 = tpu.dynamic_rotate %0 by %c33_i32 dim 1 : vector<4x512xf32>, i32 -> vector<4x512xf32>
    %c2_i32_8 = arith.constant 2 : i32
    %31 = vector.broadcast %c2_i32_8 : i32 to vector<1x512xi32>
    %32 = arith.cmpi sge, %10, %31 : vector<1x512xi32>
    %c18_i32_9 = arith.constant 18 : i32
    %33 = vector.broadcast %c18_i32_9 : i32 to vector<1x512xi32>
    %34 = arith.cmpi slt, %10, %33 : vector<1x512xi32>
    %35 = arith.andi %32, %34 : vector<1x512xi1>
    %c1_i32 = arith.constant 1 : i32
    %36 = vector.broadcast %c1_i32 : i32 to vector<1x512xi32>
    %37 = arith.cmpi sge, %12, %36 : vector<1x512xi32>
    %38 = arith.andi %35, %37 : vector<1x512xi1>
    %c17_i32 = arith.constant 17 : i32
    %39 = vector.broadcast %c17_i32 : i32 to vector<1x512xi32>
    %40 = arith.cmpi slt, %12, %39 : vector<1x512xi32>
    %41 = arith.andi %38, %40 : vector<1x512xi1>
    %cst_10 = arith.constant 0.000000e+00 : f32
    %42 = vector.shape_cast %41 : vector<1x512xi1> to vector<1x512xi1>
    %43 = vector.broadcast %42 : vector<1x512xi1> to vector<4x512xi1>
    %44 = vector.broadcast %cst_10 : f32 to vector<4x512xf32>
    %45 = arith.select %43, %30, %44 : vector<4x512xi1>, vector<4x512xf32>
    %c4 = arith.constant 4 : index
    %c0_11 = arith.constant 0 : index
    %46 = vector.load %arg5[%c4, %c0_11] : memref<100x512xf32, #tpu.memory_space<vmem>>, vector<4x512xf32>
    tpu.vector_store %arg5[%c4, %c0_11], %45 {strides = array<i32>} : memref<100x512xf32, #tpu.memory_space<vmem>>, vector<4x512xf32>,
    %c32_i32 = arith.constant 32 : i32
    %47 = tpu.dynamic_rotate %0 by %c32_i32 dim 1 : vector<4x512xf32>, i32 -> vector<4x512xf32>
    %c2_i32_12 = arith.constant 2 : i32
    %48 = vector.broadcast %c2_i32_12 : i32 to vector<1x512xi32>
    %49 = arith.cmpi sge, %10, %48 : vector<1x512xi32>
    %c18_i32_13 = arith.constant 18 : i32
    %50 = vector.broadcast %c18_i32_13 : i32 to vector<1x512xi32>
    %51 = arith.cmpi slt, %10, %50 : vector<1x512xi32>
    %52 = arith.andi %49, %51 : vector<1x512xi1>
    %c0_i32 = arith.constant 0 : i32
    %53 = vector.broadcast %c0_i32 : i32 to vector<1x512xi32>
    %54 = arith.cmpi sge, %12, %53 : vector<1x512xi32>
    %55 = arith.andi %52, %54 : vector<1x512xi1>
    %c16_i32 = arith.constant 16 : i32
    %56 = vector.broadcast %c16_i32 : i32 to vector<1x512xi32>
    %57 = arith.cmpi slt, %12, %56 : vector<1x512xi32>
    %58 = arith.andi %55, %57 : vector<1x512xi1>
    %cst_14 = arith.constant 0.000000e+00 : f32
    %59 = vector.shape_cast %58 : vector<1x512xi1> to vector<1x512xi1>
    %60 = vector.broadcast %59 : vector<1x512xi1> to vector<4x512xi1>
    %61 = vector.broadcast %cst_14 : f32 to vector<4x512xf32>
    %62 = arith.select %60, %47, %61 : vector<4x512xi1>, vector<4x512xf32>
    %c8 = arith.constant 8 : index
    %c0_15 = arith.constant 0 : index
    %63 = vector.load %arg5[%c8, %c0_15] : memref<100x512xf32, #tpu.memory_space<vmem>>, vector<4x512xf32>
    tpu.vector_store %arg5[%c8, %c0_15], %62 {strides = array<i32>} : memref<100x512xf32, #tpu.memory_space<vmem>>, vector<4x512xf32>,
    %c31_i32 = arith.constant 31 : i32
    %64 = tpu.dynamic_rotate %0 by %c31_i32 dim 1 : vector<4x512xf32>, i32 -> vector<4x512xf32>
    %c2_i32_16 = arith.constant 2 : i32
    %65 = vector.broadcast %c2_i32_16 : i32 to vector<1x512xi32>
    %66 = arith.cmpi sge, %10, %65 : vector<1x512xi32>
    %c18_i32_17 = arith.constant 18 : i32
    %67 = vector.broadcast %c18_i32_17 : i32 to vector<1x512xi32>
    %68 = arith.cmpi slt, %10, %67 : vector<1x512xi32>
    %69 = arith.andi %66, %68 : vector<1x512xi1>
    %c-1_i32 = arith.constant -1 : i32
    %70 = vector.broadcast %c-1_i32 : i32 to vector<1x512xi32>
    %71 = arith.cmpi sge, %12, %70 : vector<1x512xi32>
    %72 = arith.andi %69, %71 : vector<1x512xi1>
    %c15_i32_18 = arith.constant 15 : i32
    %73 = vector.broadcast %c15_i32_18 : i32 to vector<1x512xi32>
    %74 = arith.cmpi slt, %12, %73 : vector<1x512xi32>
    %75 = arith.andi %72, %74 : vector<1x512xi1>
    %cst_19 = arith.constant 0.000000e+00 : f32
    %76 = vector.shape_cast %75 : vector<1x512xi1> to vector<1x512xi1>
    %77 = vector.broadcast %76 : vector<1x512xi1> to vector<4x512xi1>
    %78 = vector.broadcast %cst_19 : f32 to vector<4x512xf32>
    %79 = arith.select %77, %64, %78 : vector<4x512xi1>, vector<4x512xf32>
    %c12 = arith.constant 12 : index
    %c0_20 = arith.constant 0 : index
    %80 = vector.load %arg5[%c12, %c0_20] : memref<100x512xf32, #tpu.memory_space<vmem>>, vector<4x512xf32>
    tpu.vector_store %arg5[%c12, %c0_20], %79 {strides = array<i32>} : memref<100x512xf32, #tpu.memory_space<vmem>>, vector<4x512xf32>,
    %c30_i32 = arith.constant 30 : i32
    %81 = tpu.dynamic_rotate %0 by %c30_i32 dim 1 : vector<4x512xf32>, i32 -> vector<4x512xf32>
    %c2_i32_21 = arith.constant 2 : i32
    %82 = vector.broadcast %c2_i32_21 : i32 to vector<1x512xi32>
    %83 = arith.cmpi sge, %10, %82 : vector<1x512xi32>
    %c18_i32_22 = arith.constant 18 : i32
    %84 = vector.broadcast %c18_i32_22 : i32 to vector<1x512xi32>
    %85 = arith.cmpi slt, %10, %84 : vector<1x512xi32>
    %86 = arith.andi %83, %85 : vector<1x512xi1>
    %c-2_i32 = arith.constant -2 : i32
    %87 = vector.broadcast %c-2_i32 : i32 to vector<1x512xi32>
    %88 = arith.cmpi sge, %12, %87 : vector<1x512xi32>
    %89 = arith.andi %86, %88 : vector<1x512xi1>
    %c14_i32 = arith.constant 14 : i32
    %90 = vector.broadcast %c14_i32 : i32 to vector<1x512xi32>
    %91 = arith.cmpi slt, %12, %90 : vector<1x512xi32>
    %92 = arith.andi %89, %91 : vector<1x512xi1>
    %cst_23 = arith.constant 0.000000e+00 : f32
    %93 = vector.shape_cast %92 : vector<1x512xi1> to vector<1x512xi1>
    %94 = vector.broadcast %93 : vector<1x512xi1> to vector<4x512xi1>
    %95 = vector.broadcast %cst_23 : f32 to vector<4x512xf32>
    %96 = arith.select %94, %81, %95 : vector<4x512xi1>, vector<4x512xf32>
    %c16 = arith.constant 16 : index
    %c0_24 = arith.constant 0 : index
    %97 = vector.load %arg5[%c16, %c0_24] : memref<100x512xf32, #tpu.memory_space<vmem>>, vector<4x512xf32>
    tpu.vector_store %arg5[%c16, %c0_24], %96 {strides = array<i32>} : memref<100x512xf32, #tpu.memory_space<vmem>>, vector<4x512xf32>,
    %c18_i32_25 = arith.constant 18 : i32
    %98 = tpu.dynamic_rotate %0 by %c18_i32_25 dim 1 : vector<4x512xf32>, i32 -> vector<4x512xf32>
    %c1_i32_26 = arith.constant 1 : i32
    %99 = vector.broadcast %c1_i32_26 : i32 to vector<1x512xi32>
    %100 = arith.cmpi sge, %10, %99 : vector<1x512xi32>
    %c17_i32_27 = arith.constant 17 : i32
    %101 = vector.broadcast %c17_i32_27 : i32 to vector<1x512xi32>
    %102 = arith.cmpi slt, %10, %101 : vector<1x512xi32>
    %103 = arith.andi %100, %102 : vector<1x512xi1>
    %c2_i32_28 = arith.constant 2 : i32
    %104 = vector.broadcast %c2_i32_28 : i32 to vector<1x512xi32>
    %105 = arith.cmpi sge, %12, %104 : vector<1x512xi32>
    %106 = arith.andi %103, %105 : vector<1x512xi1>
    %c18_i32_29 = arith.constant 18 : i32
    %107 = vector.broadcast %c18_i32_29 : i32 to vector<1x512xi32>
    %108 = arith.cmpi slt, %12, %107 : vector<1x512xi32>
    %109 = arith.andi %106, %108 : vector<1x512xi1>
    %cst_30 = arith.constant 0.000000e+00 : f32
    %110 = vector.shape_cast %109 : vector<1x512xi1> to vector<1x512xi1>
    %111 = vector.broadcast %110 : vector<1x512xi1> to vector<4x512xi1>
    %112 = vector.broadcast %cst_30 : f32 to vector<4x512xf32>
    %113 = arith.select %111, %98, %112 : vector<4x512xi1>, vector<4x512xf32>
    %c20 = arith.constant 20 : index
    %c0_31 = arith.constant 0 : index
    %114 = vector.load %arg5[%c20, %c0_31] : memref<100x512xf32, #tpu.memory_space<vmem>>, vector<4x512xf32>
    tpu.vector_store %arg5[%c20, %c0_31], %113 {strides = array<i32>} : memref<100x512xf32, #tpu.memory_space<vmem>>, vector<4x512xf32>,
    %c17_i32_32 = arith.constant 17 : i32
    %115 = tpu.dynamic_rotate %0 by %c17_i32_32 dim 1 : vector<4x512xf32>, i32 -> vector<4x512xf32>
    %c1_i32_33 = arith.constant 1 : i32
    %116 = vector.broadcast %c1_i32_33 : i32 to vector<1x512xi32>
    %117 = arith.cmpi sge, %10, %116 : vector<1x512xi32>
    %c17_i32_34 = arith.constant 17 : i32
    %118 = vector.broadcast %c17_i32_34 : i32 to vector<1x512xi32>
    %119 = arith.cmpi slt, %10, %118 : vector<1x512xi32>
    %120 = arith.andi %117, %119 : vector<1x512xi1>
    %c1_i32_35 = arith.constant 1 : i32
    %121 = vector.broadcast %c1_i32_35 : i32 to vector<1x512xi32>
    %122 = arith.cmpi sge, %12, %121 : vector<1x512xi32>
    %123 = arith.andi %120, %122 : vector<1x512xi1>
    %c17_i32_36 = arith.constant 17 : i32
    %124 = vector.broadcast %c17_i32_36 : i32 to vector<1x512xi32>
    %125 = arith.cmpi slt, %12, %124 : vector<1x512xi32>
    %126 = arith.andi %123, %125 : vector<1x512xi1>
    %cst_37 = arith.constant 0.000000e+00 : f32
    %127 = vector.shape_cast %126 : vector<1x512xi1> to vector<1x512xi1>
    %128 = vector.broadcast %127 : vector<1x512xi1> to vector<4x512xi1>
    %129 = vector.broadcast %cst_37 : f32 to vector<4x512xf32>
    %130 = arith.select %128, %115, %129 : vector<4x512xi1>, vector<4x512xf32>
    %c24 = arith.constant 24 : index
    %c0_38 = arith.constant 0 : index
    %131 = vector.load %arg5[%c24, %c0_38] : memref<100x512xf32, #tpu.memory_space<vmem>>, vector<4x512xf32>
    tpu.vector_store %arg5[%c24, %c0_38], %130 {strides = array<i32>} : memref<100x512xf32, #tpu.memory_space<vmem>>, vector<4x512xf32>,
    %c16_i32_39 = arith.constant 16 : i32
    %132 = tpu.dynamic_rotate %0 by %c16_i32_39 dim 1 : vector<4x512xf32>, i32 -> vector<4x512xf32>
    %c1_i32_40 = arith.constant 1 : i32
    %133 = vector.broadcast %c1_i32_40 : i32 to vector<1x512xi32>
    %134 = arith.cmpi sge, %10, %133 : vector<1x512xi32>
    %c17_i32_41 = arith.constant 17 : i32
    %135 = vector.broadcast %c17_i32_41 : i32 to vector<1x512xi32>
    %136 = arith.cmpi slt, %10, %135 : vector<1x512xi32>
    %137 = arith.andi %134, %136 : vector<1x512xi1>
    %c0_i32_42 = arith.constant 0 : i32
    %138 = vector.broadcast %c0_i32_42 : i32 to vector<1x512xi32>
    %139 = arith.cmpi sge, %12, %138 : vector<1x512xi32>
    %140 = arith.andi %137, %139 : vector<1x512xi1>
    %c16_i32_43 = arith.constant 16 : i32
    %141 = vector.broadcast %c16_i32_43 : i32 to vector<1x512xi32>
    %142 = arith.cmpi slt, %12, %141 : vector<1x512xi32>
    %143 = arith.andi %140, %142 : vector<1x512xi1>
    %cst_44 = arith.constant 0.000000e+00 : f32
    %144 = vector.shape_cast %143 : vector<1x512xi1> to vector<1x512xi1>
    %145 = vector.broadcast %144 : vector<1x512xi1> to vector<4x512xi1>
    %146 = vector.broadcast %cst_44 : f32 to vector<4x512xf32>
    %147 = arith.select %145, %132, %146 : vector<4x512xi1>, vector<4x512xf32>
    %c28 = arith.constant 28 : index
    %c0_45 = arith.constant 0 : index
    %148 = vector.load %arg5[%c28, %c0_45] : memref<100x512xf32, #tpu.memory_space<vmem>>, vector<4x512xf32>
    tpu.vector_store %arg5[%c28, %c0_45], %147 {strides = array<i32>} : memref<100x512xf32, #tpu.memory_space<vmem>>, vector<4x512xf32>,
    %c15_i32_46 = arith.constant 15 : i32
    %149 = tpu.dynamic_rotate %0 by %c15_i32_46 dim 1 : vector<4x512xf32>, i32 -> vector<4x512xf32>
    %c1_i32_47 = arith.constant 1 : i32
    %150 = vector.broadcast %c1_i32_47 : i32 to vector<1x512xi32>
    %151 = arith.cmpi sge, %10, %150 : vector<1x512xi32>
    %c17_i32_48 = arith.constant 17 : i32
    %152 = vector.broadcast %c17_i32_48 : i32 to vector<1x512xi32>
    %153 = arith.cmpi slt, %10, %152 : vector<1x512xi32>
    %154 = arith.andi %151, %153 : vector<1x512xi1>
    %c-1_i32_49 = arith.constant -1 : i32
    %155 = vector.broadcast %c-1_i32_49 : i32 to vector<1x512xi32>
    %156 = arith.cmpi sge, %12, %155 : vector<1x512xi32>
    %157 = arith.andi %154, %156 : vector<1x512xi1>
    %c15_i32_50 = arith.constant 15 : i32
    %158 = vector.broadcast %c15_i32_50 : i32 to vector<1x512xi32>
    %159 = arith.cmpi slt, %12, %158 : vector<1x512xi32>
    %160 = arith.andi %157, %159 : vector<1x512xi1>
    %cst_51 = arith.constant 0.000000e+00 : f32
    %161 = vector.shape_cast %160 : vector<1x512xi1> to vector<1x512xi1>
    %162 = vector.broadcast %161 : vector<1x512xi1> to vector<4x512xi1>
    %163 = vector.broadcast %cst_51 : f32 to vector<4x512xf32>
    %164 = arith.select %162, %149, %163 : vector<4x512xi1>, vector<4x512xf32>
    %c32 = arith.constant 32 : index
    %c0_52 = arith.constant 0 : index
    %165 = vector.load %arg5[%c32, %c0_52] : memref<100x512xf32, #tpu.memory_space<vmem>>, vector<4x512xf32>
    tpu.vector_store %arg5[%c32, %c0_52], %164 {strides = array<i32>} : memref<100x512xf32, #tpu.memory_space<vmem>>, vector<4x512xf32>,
    %c14_i32_53 = arith.constant 14 : i32
    %166 = tpu.dynamic_rotate %0 by %c14_i32_53 dim 1 : vector<4x512xf32>, i32 -> vector<4x512xf32>
    %c1_i32_54 = arith.constant 1 : i32
    %167 = vector.broadcast %c1_i32_54 : i32 to vector<1x512xi32>
    %168 = arith.cmpi sge, %10, %167 : vector<1x512xi32>
    %c17_i32_55 = arith.constant 17 : i32
    %169 = vector.broadcast %c17_i32_55 : i32 to vector<1x512xi32>
    %170 = arith.cmpi slt, %10, %169 : vector<1x512xi32>
    %171 = arith.andi %168, %170 : vector<1x512xi1>
    %c-2_i32_56 = arith.constant -2 : i32
    %172 = vector.broadcast %c-2_i32_56 : i32 to vector<1x512xi32>
    %173 = arith.cmpi sge, %12, %172 : vector<1x512xi32>
    %174 = arith.andi %171, %173 : vector<1x512xi1>
    %c14_i32_57 = arith.constant 14 : i32
    %175 = vector.broadcast %c14_i32_57 : i32 to vector<1x512xi32>
    %176 = arith.cmpi slt, %12, %175 : vector<1x512xi32>
    %177 = arith.andi %174, %176 : vector<1x512xi1>
    %cst_58 = arith.constant 0.000000e+00 : f32
    %178 = vector.shape_cast %177 : vector<1x512xi1> to vector<1x512xi1>
    %179 = vector.broadcast %178 : vector<1x512xi1> to vector<4x512xi1>
    %180 = vector.broadcast %cst_58 : f32 to vector<4x512xf32>
    %181 = arith.select %179, %166, %180 : vector<4x512xi1>, vector<4x512xf32>
    %c36 = arith.constant 36 : index
    %c0_59 = arith.constant 0 : index
    %182 = vector.load %arg5[%c36, %c0_59] : memref<100x512xf32, #tpu.memory_space<vmem>>, vector<4x512xf32>
    tpu.vector_store %arg5[%c36, %c0_59], %181 {strides = array<i32>} : memref<100x512xf32, #tpu.memory_space<vmem>>, vector<4x512xf32>,
    %c2_i32_60 = arith.constant 2 : i32
    %183 = tpu.dynamic_rotate %0 by %c2_i32_60 dim 1 : vector<4x512xf32>, i32 -> vector<4x512xf32>
    %c0_i32_61 = arith.constant 0 : i32
    %184 = vector.broadcast %c0_i32_61 : i32 to vector<1x512xi32>
    %185 = arith.cmpi sge, %10, %184 : vector<1x512xi32>
    %c16_i32_62 = arith.constant 16 : i32
    %186 = vector.broadcast %c16_i32_62 : i32 to vector<1x512xi32>
    %187 = arith.cmpi slt, %10, %186 : vector<1x512xi32>
    %188 = arith.andi %185, %187 : vector<1x512xi1>
    %c2_i32_63 = arith.constant 2 : i32
    %189 = vector.broadcast %c2_i32_63 : i32 to vector<1x512xi32>
    %190 = arith.cmpi sge, %12, %189 : vector<1x512xi32>
    %191 = arith.andi %188, %190 : vector<1x512xi1>
    %c18_i32_64 = arith.constant 18 : i32
    %192 = vector.broadcast %c18_i32_64 : i32 to vector<1x512xi32>
    %193 = arith.cmpi slt, %12, %192 : vector<1x512xi32>
    %194 = arith.andi %191, %193 : vector<1x512xi1>
    %cst_65 = arith.constant 0.000000e+00 : f32
    %195 = vector.shape_cast %194 : vector<1x512xi1> to vector<1x512xi1>
    %196 = vector.broadcast %195 : vector<1x512xi1> to vector<4x512xi1>
    %197 = vector.broadcast %cst_65 : f32 to vector<4x512xf32>
    %198 = arith.select %196, %183, %197 : vector<4x512xi1>, vector<4x512xf32>
    %c40 = arith.constant 40 : index
    %c0_66 = arith.constant 0 : index
    %199 = vector.load %arg5[%c40, %c0_66] : memref<100x512xf32, #tpu.memory_space<vmem>>, vector<4x512xf32>
    tpu.vector_store %arg5[%c40, %c0_66], %198 {strides = array<i32>} : memref<100x512xf32, #tpu.memory_space<vmem>>, vector<4x512xf32>,
    %c1_i32_67 = arith.constant 1 : i32
    %200 = tpu.dynamic_rotate %0 by %c1_i32_67 dim 1 : vector<4x512xf32>, i32 -> vector<4x512xf32>
    %c0_i32_68 = arith.constant 0 : i32
    %201 = vector.broadcast %c0_i32_68 : i32 to vector<1x512xi32>
    %202 = arith.cmpi sge, %10, %201 : vector<1x512xi32>
    %c16_i32_69 = arith.constant 16 : i32
    %203 = vector.broadcast %c16_i32_69 : i32 to vector<1x512xi32>
    %204 = arith.cmpi slt, %10, %203 : vector<1x512xi32>
    %205 = arith.andi %202, %204 : vector<1x512xi1>
    %c1_i32_70 = arith.constant 1 : i32
    %206 = vector.broadcast %c1_i32_70 : i32 to vector<1x512xi32>
    %207 = arith.cmpi sge, %12, %206 : vector<1x512xi32>
    %208 = arith.andi %205, %207 : vector<1x512xi1>
    %c17_i32_71 = arith.constant 17 : i32
    %209 = vector.broadcast %c17_i32_71 : i32 to vector<1x512xi32>
    %210 = arith.cmpi slt, %12, %209 : vector<1x512xi32>
    %211 = arith.andi %208, %210 : vector<1x512xi1>
    %cst_72 = arith.constant 0.000000e+00 : f32
    %212 = vector.shape_cast %211 : vector<1x512xi1> to vector<1x512xi1>
    %213 = vector.broadcast %212 : vector<1x512xi1> to vector<4x512xi1>
    %214 = vector.broadcast %cst_72 : f32 to vector<4x512xf32>
    %215 = arith.select %213, %200, %214 : vector<4x512xi1>, vector<4x512xf32>
    %c44 = arith.constant 44 : index
    %c0_73 = arith.constant 0 : index
    %216 = vector.load %arg5[%c44, %c0_73] : memref<100x512xf32, #tpu.memory_space<vmem>>, vector<4x512xf32>
    tpu.vector_store %arg5[%c44, %c0_73], %215 {strides = array<i32>} : memref<100x512xf32, #tpu.memory_space<vmem>>, vector<4x512xf32>,
    %c0_i32_74 = arith.constant 0 : i32
    %217 = vector.broadcast %c0_i32_74 : i32 to vector<1x512xi32>
    %218 = arith.cmpi sge, %10, %217 : vector<1x512xi32>
    %c16_i32_75 = arith.constant 16 : i32
    %219 = vector.broadcast %c16_i32_75 : i32 to vector<1x512xi32>
    %220 = arith.cmpi slt, %10, %219 : vector<1x512xi32>
    %221 = arith.andi %218, %220 : vector<1x512xi1>
    %c0_i32_76 = arith.constant 0 : i32
    %222 = vector.broadcast %c0_i32_76 : i32 to vector<1x512xi32>
    %223 = arith.cmpi sge, %12, %222 : vector<1x512xi32>
    %224 = arith.andi %221, %223 : vector<1x512xi1>
    %c16_i32_77 = arith.constant 16 : i32
    %225 = vector.broadcast %c16_i32_77 : i32 to vector<1x512xi32>
    %226 = arith.cmpi slt, %12, %225 : vector<1x512xi32>
    %227 = arith.andi %224, %226 : vector<1x512xi1>
    %cst_78 = arith.constant 0.000000e+00 : f32
    %228 = vector.shape_cast %227 : vector<1x512xi1> to vector<1x512xi1>
    %229 = vector.broadcast %228 : vector<1x512xi1> to vector<4x512xi1>
    %230 = vector.broadcast %cst_78 : f32 to vector<4x512xf32>
    %231 = arith.select %229, %0, %230 : vector<4x512xi1>, vector<4x512xf32>
    %c48 = arith.constant 48 : index
    %c0_79 = arith.constant 0 : index
    %232 = vector.load %arg5[%c48, %c0_79] : memref<100x512xf32, #tpu.memory_space<vmem>>, vector<4x512xf32>
    tpu.vector_store %arg5[%c48, %c0_79], %231 {strides = array<i32>} : memref<100x512xf32, #tpu.memory_space<vmem>>, vector<4x512xf32>,
    %c511_i32 = arith.constant 511 : i32
    %233 = tpu.dynamic_rotate %0 by %c511_i32 dim 1 : vector<4x512xf32>, i32 -> vector<4x512xf32>
    %c0_i32_80 = arith.constant 0 : i32
    %234 = vector.broadcast %c0_i32_80 : i32 to vector<1x512xi32>
    %235 = arith.cmpi sge, %10, %234 : vector<1x512xi32>
    %c16_i32_81 = arith.constant 16 : i32
    %236 = vector.broadcast %c16_i32_81 : i32 to vector<1x512xi32>
    %237 = arith.cmpi slt, %10, %236 : vector<1x512xi32>
    %238 = arith.andi %235, %237 : vector<1x512xi1>
    %c-1_i32_82 = arith.constant -1 : i32
    %239 = vector.broadcast %c-1_i32_82 : i32 to vector<1x512xi32>
    %240 = arith.cmpi sge, %12, %239 : vector<1x512xi32>
    %241 = arith.andi %238, %240 : vector<1x512xi1>
    %c15_i32_83 = arith.constant 15 : i32
    %242 = vector.broadcast %c15_i32_83 : i32 to vector<1x512xi32>
    %243 = arith.cmpi slt, %12, %242 : vector<1x512xi32>
    %244 = arith.andi %241, %243 : vector<1x512xi1>
    %cst_84 = arith.constant 0.000000e+00 : f32
    %245 = vector.shape_cast %244 : vector<1x512xi1> to vector<1x512xi1>
    %246 = vector.broadcast %245 : vector<1x512xi1> to vector<4x512xi1>
    %247 = vector.broadcast %cst_84 : f32 to vector<4x512xf32>
    %248 = arith.select %246, %233, %247 : vector<4x512xi1>, vector<4x512xf32>
    %c52 = arith.constant 52 : index
    %c0_85 = arith.constant 0 : index
    %249 = vector.load %arg5[%c52, %c0_85] : memref<100x512xf32, #tpu.memory_space<vmem>>, vector<4x512xf32>
    tpu.vector_store %arg5[%c52, %c0_85], %248 {strides = array<i32>} : memref<100x512xf32, #tpu.memory_space<vmem>>, vector<4x512xf32>,
    %c510_i32 = arith.constant 510 : i32
    %250 = tpu.dynamic_rotate %0 by %c510_i32 dim 1 : vector<4x512xf32>, i32 -> vector<4x512xf32>
    %c0_i32_86 = arith.constant 0 : i32
    %251 = vector.broadcast %c0_i32_86 : i32 to vector<1x512xi32>
    %252 = arith.cmpi sge, %10, %251 : vector<1x512xi32>
    %c16_i32_87 = arith.constant 16 : i32
    %253 = vector.broadcast %c16_i32_87 : i32 to vector<1x512xi32>
    %254 = arith.cmpi slt, %10, %253 : vector<1x512xi32>
    %255 = arith.andi %252, %254 : vector<1x512xi1>
    %c-2_i32_88 = arith.constant -2 : i32
    %256 = vector.broadcast %c-2_i32_88 : i32 to vector<1x512xi32>
    %257 = arith.cmpi sge, %12, %256 : vector<1x512xi32>
    %258 = arith.andi %255, %257 : vector<1x512xi1>
    %c14_i32_89 = arith.constant 14 : i32
    %259 = vector.broadcast %c14_i32_89 : i32 to vector<1x512xi32>
    %260 = arith.cmpi slt, %12, %259 : vector<1x512xi32>
    %261 = arith.andi %258, %260 : vector<1x512xi1>
    %cst_90 = arith.constant 0.000000e+00 : f32
    %262 = vector.shape_cast %261 : vector<1x512xi1> to vector<1x512xi1>
    %263 = vector.broadcast %262 : vector<1x512xi1> to vector<4x512xi1>
    %264 = vector.broadcast %cst_90 : f32 to vector<4x512xf32>
    %265 = arith.select %263, %250, %264 : vector<4x512xi1>, vector<4x512xf32>
    %c56 = arith.constant 56 : index
    %c0_91 = arith.constant 0 : index
    %266 = vector.load %arg5[%c56, %c0_91] : memref<100x512xf32, #tpu.memory_space<vmem>>, vector<4x512xf32>
    tpu.vector_store %arg5[%c56, %c0_91], %265 {strides = array<i32>} : memref<100x512xf32, #tpu.memory_space<vmem>>, vector<4x512xf32>,
    %c498_i32 = arith.constant 498 : i32
    %267 = tpu.dynamic_rotate %0 by %c498_i32 dim 1 : vector<4x512xf32>, i32 -> vector<4x512xf32>
    %c-1_i32_92 = arith.constant -1 : i32
    %268 = vector.broadcast %c-1_i32_92 : i32 to vector<1x512xi32>
    %269 = arith.cmpi sge, %10, %268 : vector<1x512xi32>
    %c15_i32_93 = arith.constant 15 : i32
    %270 = vector.broadcast %c15_i32_93 : i32 to vector<1x512xi32>
    %271 = arith.cmpi slt, %10, %270 : vector<1x512xi32>
    %272 = arith.andi %269, %271 : vector<1x512xi1>
    %c2_i32_94 = arith.constant 2 : i32
    %273 = vector.broadcast %c2_i32_94 : i32 to vector<1x512xi32>
    %274 = arith.cmpi sge, %12, %273 : vector<1x512xi32>
    %275 = arith.andi %272, %274 : vector<1x512xi1>
    %c18_i32_95 = arith.constant 18 : i32
    %276 = vector.broadcast %c18_i32_95 : i32 to vector<1x512xi32>
    %277 = arith.cmpi slt, %12, %276 : vector<1x512xi32>
    %278 = arith.andi %275, %277 : vector<1x512xi1>
    %cst_96 = arith.constant 0.000000e+00 : f32
    %279 = vector.shape_cast %278 : vector<1x512xi1> to vector<1x512xi1>
    %280 = vector.broadcast %279 : vector<1x512xi1> to vector<4x512xi1>
    %281 = vector.broadcast %cst_96 : f32 to vector<4x512xf32>
    %282 = arith.select %280, %267, %281 : vector<4x512xi1>, vector<4x512xf32>
    %c60 = arith.constant 60 : index
    %c0_97 = arith.constant 0 : index
    %283 = vector.load %arg5[%c60, %c0_97] : memref<100x512xf32, #tpu.memory_space<vmem>>, vector<4x512xf32>
    tpu.vector_store %arg5[%c60, %c0_97], %282 {strides = array<i32>} : memref<100x512xf32, #tpu.memory_space<vmem>>, vector<4x512xf32>,
    %c497_i32 = arith.constant 497 : i32
    %284 = tpu.dynamic_rotate %0 by %c497_i32 dim 1 : vector<4x512xf32>, i32 -> vector<4x512xf32>
    %c-1_i32_98 = arith.constant -1 : i32
    %285 = vector.broadcast %c-1_i32_98 : i32 to vector<1x512xi32>
    %286 = arith.cmpi sge, %10, %285 : vector<1x512xi32>
    %c15_i32_99 = arith.constant 15 : i32
    %287 = vector.broadcast %c15_i32_99 : i32 to vector<1x512xi32>
    %288 = arith.cmpi slt, %10, %287 : vector<1x512xi32>
    %289 = arith.andi %286, %288 : vector<1x512xi1>
    %c1_i32_100 = arith.constant 1 : i32
    %290 = vector.broadcast %c1_i32_100 : i32 to vector<1x512xi32>
    %291 = arith.cmpi sge, %12, %290 : vector<1x512xi32>
    %292 = arith.andi %289, %291 : vector<1x512xi1>
    %c17_i32_101 = arith.constant 17 : i32
    %293 = vector.broadcast %c17_i32_101 : i32 to vector<1x512xi32>
    %294 = arith.cmpi slt, %12, %293 : vector<1x512xi32>
    %295 = arith.andi %292, %294 : vector<1x512xi1>
    %cst_102 = arith.constant 0.000000e+00 : f32
    %296 = vector.shape_cast %295 : vector<1x512xi1> to vector<1x512xi1>
    %297 = vector.broadcast %296 : vector<1x512xi1> to vector<4x512xi1>
    %298 = vector.broadcast %cst_102 : f32 to vector<4x512xf32>
    %299 = arith.select %297, %284, %298 : vector<4x512xi1>, vector<4x512xf32>
    %c64 = arith.constant 64 : index
    %c0_103 = arith.constant 0 : index
    %300 = vector.load %arg5[%c64, %c0_103] : memref<100x512xf32, #tpu.memory_space<vmem>>, vector<4x512xf32>
    tpu.vector_store %arg5[%c64, %c0_103], %299 {strides = array<i32>} : memref<100x512xf32, #tpu.memory_space<vmem>>, vector<4x512xf32>,
    %c496_i32 = arith.constant 496 : i32
    %301 = tpu.dynamic_rotate %0 by %c496_i32 dim 1 : vector<4x512xf32>, i32 -> vector<4x512xf32>
    %c-1_i32_104 = arith.constant -1 : i32
    %302 = vector.broadcast %c-1_i32_104 : i32 to vector<1x512xi32>
    %303 = arith.cmpi sge, %10, %302 : vector<1x512xi32>
    %c15_i32_105 = arith.constant 15 : i32
    %304 = vector.broadcast %c15_i32_105 : i32 to vector<1x512xi32>
    %305 = arith.cmpi slt, %10, %304 : vector<1x512xi32>
    %306 = arith.andi %303, %305 : vector<1x512xi1>
    %c0_i32_106 = arith.constant 0 : i32
    %307 = vector.broadcast %c0_i32_106 : i32 to vector<1x512xi32>
    %308 = arith.cmpi sge, %12, %307 : vector<1x512xi32>
    %309 = arith.andi %306, %308 : vector<1x512xi1>
    %c16_i32_107 = arith.constant 16 : i32
    %310 = vector.broadcast %c16_i32_107 : i32 to vector<1x512xi32>
    %311 = arith.cmpi slt, %12, %310 : vector<1x512xi32>
    %312 = arith.andi %309, %311 : vector<1x512xi1>
    %cst_108 = arith.constant 0.000000e+00 : f32
    %313 = vector.shape_cast %312 : vector<1x512xi1> to vector<1x512xi1>
    %314 = vector.broadcast %313 : vector<1x512xi1> to vector<4x512xi1>
    %315 = vector.broadcast %cst_108 : f32 to vector<4x512xf32>
    %316 = arith.select %314, %301, %315 : vector<4x512xi1>, vector<4x512xf32>
    %c68 = arith.constant 68 : index
    %c0_109 = arith.constant 0 : index
    %317 = vector.load %arg5[%c68, %c0_109] : memref<100x512xf32, #tpu.memory_space<vmem>>, vector<4x512xf32>
    tpu.vector_store %arg5[%c68, %c0_109], %316 {strides = array<i32>} : memref<100x512xf32, #tpu.memory_space<vmem>>, vector<4x512xf32>,
    %c495_i32 = arith.constant 495 : i32
    %318 = tpu.dynamic_rotate %0 by %c495_i32 dim 1 : vector<4x512xf32>, i32 -> vector<4x512xf32>
    %c-1_i32_110 = arith.constant -1 : i32
    %319 = vector.broadcast %c-1_i32_110 : i32 to vector<1x512xi32>
    %320 = arith.cmpi sge, %10, %319 : vector<1x512xi32>
    %c15_i32_111 = arith.constant 15 : i32
    %321 = vector.broadcast %c15_i32_111 : i32 to vector<1x512xi32>
    %322 = arith.cmpi slt, %10, %321 : vector<1x512xi32>
    %323 = arith.andi %320, %322 : vector<1x512xi1>
    %c-1_i32_112 = arith.constant -1 : i32
    %324 = vector.broadcast %c-1_i32_112 : i32 to vector<1x512xi32>
    %325 = arith.cmpi sge, %12, %324 : vector<1x512xi32>
    %326 = arith.andi %323, %325 : vector<1x512xi1>
    %c15_i32_113 = arith.constant 15 : i32
    %327 = vector.broadcast %c15_i32_113 : i32 to vector<1x512xi32>
    %328 = arith.cmpi slt, %12, %327 : vector<1x512xi32>
    %329 = arith.andi %326, %328 : vector<1x512xi1>
    %cst_114 = arith.constant 0.000000e+00 : f32
    %330 = vector.shape_cast %329 : vector<1x512xi1> to vector<1x512xi1>
    %331 = vector.broadcast %330 : vector<1x512xi1> to vector<4x512xi1>
    %332 = vector.broadcast %cst_114 : f32 to vector<4x512xf32>
    %333 = arith.select %331, %318, %332 : vector<4x512xi1>, vector<4x512xf32>
    %c72 = arith.constant 72 : index
    %c0_115 = arith.constant 0 : index
    %334 = vector.load %arg5[%c72, %c0_115] : memref<100x512xf32, #tpu.memory_space<vmem>>, vector<4x512xf32>
    tpu.vector_store %arg5[%c72, %c0_115], %333 {strides = array<i32>} : memref<100x512xf32, #tpu.memory_space<vmem>>, vector<4x512xf32>,
    %c494_i32 = arith.constant 494 : i32
    %335 = tpu.dynamic_rotate %0 by %c494_i32 dim 1 : vector<4x512xf32>, i32 -> vector<4x512xf32>
    %c-1_i32_116 = arith.constant -1 : i32
    %336 = vector.broadcast %c-1_i32_116 : i32 to vector<1x512xi32>
    %337 = arith.cmpi sge, %10, %336 : vector<1x512xi32>
    %c15_i32_117 = arith.constant 15 : i32
    %338 = vector.broadcast %c15_i32_117 : i32 to vector<1x512xi32>
    %339 = arith.cmpi slt, %10, %338 : vector<1x512xi32>
    %340 = arith.andi %337, %339 : vector<1x512xi1>
    %c-2_i32_118 = arith.constant -2 : i32
    %341 = vector.broadcast %c-2_i32_118 : i32 to vector<1x512xi32>
    %342 = arith.cmpi sge, %12, %341 : vector<1x512xi32>
    %343 = arith.andi %340, %342 : vector<1x512xi1>
    %c14_i32_119 = arith.constant 14 : i32
    %344 = vector.broadcast %c14_i32_119 : i32 to vector<1x512xi32>
    %345 = arith.cmpi slt, %12, %344 : vector<1x512xi32>
    %346 = arith.andi %343, %345 : vector<1x512xi1>
    %cst_120 = arith.constant 0.000000e+00 : f32
    %347 = vector.shape_cast %346 : vector<1x512xi1> to vector<1x512xi1>
    %348 = vector.broadcast %347 : vector<1x512xi1> to vector<4x512xi1>
    %349 = vector.broadcast %cst_120 : f32 to vector<4x512xf32>
    %350 = arith.select %348, %335, %349 : vector<4x512xi1>, vector<4x512xf32>
    %c76 = arith.constant 76 : index
    %c0_121 = arith.constant 0 : index
    %351 = vector.load %arg5[%c76, %c0_121] : memref<100x512xf32, #tpu.memory_space<vmem>>, vector<4x512xf32>
    tpu.vector_store %arg5[%c76, %c0_121], %350 {strides = array<i32>} : memref<100x512xf32, #tpu.memory_space<vmem>>, vector<4x512xf32>,
    %c482_i32 = arith.constant 482 : i32
    %352 = tpu.dynamic_rotate %0 by %c482_i32 dim 1 : vector<4x512xf32>, i32 -> vector<4x512xf32>
    %c-2_i32_122 = arith.constant -2 : i32
    %353 = vector.broadcast %c-2_i32_122 : i32 to vector<1x512xi32>
    %354 = arith.cmpi sge, %10, %353 : vector<1x512xi32>
    %c14_i32_123 = arith.constant 14 : i32
    %355 = vector.broadcast %c14_i32_123 : i32 to vector<1x512xi32>
    %356 = arith.cmpi slt, %10, %355 : vector<1x512xi32>
    %357 = arith.andi %354, %356 : vector<1x512xi1>
    %c2_i32_124 = arith.constant 2 : i32
    %358 = vector.broadcast %c2_i32_124 : i32 to vector<1x512xi32>
    %359 = arith.cmpi sge, %12, %358 : vector<1x512xi32>
    %360 = arith.andi %357, %359 : vector<1x512xi1>
    %c18_i32_125 = arith.constant 18 : i32
    %361 = vector.broadcast %c18_i32_125 : i32 to vector<1x512xi32>
    %362 = arith.cmpi slt, %12, %361 : vector<1x512xi32>
    %363 = arith.andi %360, %362 : vector<1x512xi1>
    %cst_126 = arith.constant 0.000000e+00 : f32
    %364 = vector.shape_cast %363 : vector<1x512xi1> to vector<1x512xi1>
    %365 = vector.broadcast %364 : vector<1x512xi1> to vector<4x512xi1>
    %366 = vector.broadcast %cst_126 : f32 to vector<4x512xf32>
    %367 = arith.select %365, %352, %366 : vector<4x512xi1>, vector<4x512xf32>
    %c80 = arith.constant 80 : index
    %c0_127 = arith.constant 0 : index
    %368 = vector.load %arg5[%c80, %c0_127] : memref<100x512xf32, #tpu.memory_space<vmem>>, vector<4x512xf32>
    tpu.vector_store %arg5[%c80, %c0_127], %367 {strides = array<i32>} : memref<100x512xf32, #tpu.memory_space<vmem>>, vector<4x512xf32>,
    %c481_i32 = arith.constant 481 : i32
    %369 = tpu.dynamic_rotate %0 by %c481_i32 dim 1 : vector<4x512xf32>, i32 -> vector<4x512xf32>
    %c-2_i32_128 = arith.constant -2 : i32
    %370 = vector.broadcast %c-2_i32_128 : i32 to vector<1x512xi32>
    %371 = arith.cmpi sge, %10, %370 : vector<1x512xi32>
    %c14_i32_129 = arith.constant 14 : i32
    %372 = vector.broadcast %c14_i32_129 : i32 to vector<1x512xi32>
    %373 = arith.cmpi slt, %10, %372 : vector<1x512xi32>
    %374 = arith.andi %371, %373 : vector<1x512xi1>
    %c1_i32_130 = arith.constant 1 : i32
    %375 = vector.broadcast %c1_i32_130 : i32 to vector<1x512xi32>
    %376 = arith.cmpi sge, %12, %375 : vector<1x512xi32>
    %377 = arith.andi %374, %376 : vector<1x512xi1>
    %c17_i32_131 = arith.constant 17 : i32
    %378 = vector.broadcast %c17_i32_131 : i32 to vector<1x512xi32>
    %379 = arith.cmpi slt, %12, %378 : vector<1x512xi32>
    %380 = arith.andi %377, %379 : vector<1x512xi1>
    %cst_132 = arith.constant 0.000000e+00 : f32
    %381 = vector.shape_cast %380 : vector<1x512xi1> to vector<1x512xi1>
    %382 = vector.broadcast %381 : vector<1x512xi1> to vector<4x512xi1>
    %383 = vector.broadcast %cst_132 : f32 to vector<4x512xf32>
    %384 = arith.select %382, %369, %383 : vector<4x512xi1>, vector<4x512xf32>
    %c84 = arith.constant 84 : index
    %c0_133 = arith.constant 0 : index
    %385 = vector.load %arg5[%c84, %c0_133] : memref<100x512xf32, #tpu.memory_space<vmem>>, vector<4x512xf32>
    tpu.vector_store %arg5[%c84, %c0_133], %384 {strides = array<i32>} : memref<100x512xf32, #tpu.memory_space<vmem>>, vector<4x512xf32>,
    %c480_i32 = arith.constant 480 : i32
    %386 = tpu.dynamic_rotate %0 by %c480_i32 dim 1 : vector<4x512xf32>, i32 -> vector<4x512xf32>
    %c-2_i32_134 = arith.constant -2 : i32
    %387 = vector.broadcast %c-2_i32_134 : i32 to vector<1x512xi32>
    %388 = arith.cmpi sge, %10, %387 : vector<1x512xi32>
    %c14_i32_135 = arith.constant 14 : i32
    %389 = vector.broadcast %c14_i32_135 : i32 to vector<1x512xi32>
    %390 = arith.cmpi slt, %10, %389 : vector<1x512xi32>
    %391 = arith.andi %388, %390 : vector<1x512xi1>
    %c0_i32_136 = arith.constant 0 : i32
    %392 = vector.broadcast %c0_i32_136 : i32 to vector<1x512xi32>
    %393 = arith.cmpi sge, %12, %392 : vector<1x512xi32>
    %394 = arith.andi %391, %393 : vector<1x512xi1>
    %c16_i32_137 = arith.constant 16 : i32
    %395 = vector.broadcast %c16_i32_137 : i32 to vector<1x512xi32>
    %396 = arith.cmpi slt, %12, %395 : vector<1x512xi32>
    %397 = arith.andi %394, %396 : vector<1x512xi1>
    %cst_138 = arith.constant 0.000000e+00 : f32
    %398 = vector.shape_cast %397 : vector<1x512xi1> to vector<1x512xi1>
    %399 = vector.broadcast %398 : vector<1x512xi1> to vector<4x512xi1>
    %400 = vector.broadcast %cst_138 : f32 to vector<4x512xf32>
    %401 = arith.select %399, %386, %400 : vector<4x512xi1>, vector<4x512xf32>
    %c88 = arith.constant 88 : index
    %c0_139 = arith.constant 0 : index
    %402 = vector.load %arg5[%c88, %c0_139] : memref<100x512xf32, #tpu.memory_space<vmem>>, vector<4x512xf32>
    tpu.vector_store %arg5[%c88, %c0_139], %401 {strides = array<i32>} : memref<100x512xf32, #tpu.memory_space<vmem>>, vector<4x512xf32>,
    %c479_i32 = arith.constant 479 : i32
    %403 = tpu.dynamic_rotate %0 by %c479_i32 dim 1 : vector<4x512xf32>, i32 -> vector<4x512xf32>
    %c-2_i32_140 = arith.constant -2 : i32
    %404 = vector.broadcast %c-2_i32_140 : i32 to vector<1x512xi32>
    %405 = arith.cmpi sge, %10, %404 : vector<1x512xi32>
    %c14_i32_141 = arith.constant 14 : i32
    %406 = vector.broadcast %c14_i32_141 : i32 to vector<1x512xi32>
    %407 = arith.cmpi slt, %10, %406 : vector<1x512xi32>
    %408 = arith.andi %405, %407 : vector<1x512xi1>
    %c-1_i32_142 = arith.constant -1 : i32
    %409 = vector.broadcast %c-1_i32_142 : i32 to vector<1x512xi32>
    %410 = arith.cmpi sge, %12, %409 : vector<1x512xi32>
    %411 = arith.andi %408, %410 : vector<1x512xi1>
    %c15_i32_143 = arith.constant 15 : i32
    %412 = vector.broadcast %c15_i32_143 : i32 to vector<1x512xi32>
    %413 = arith.cmpi slt, %12, %412 : vector<1x512xi32>
    %414 = arith.andi %411, %413 : vector<1x512xi1>
    %cst_144 = arith.constant 0.000000e+00 : f32
    %415 = vector.shape_cast %414 : vector<1x512xi1> to vector<1x512xi1>
    %416 = vector.broadcast %415 : vector<1x512xi1> to vector<4x512xi1>
    %417 = vector.broadcast %cst_144 : f32 to vector<4x512xf32>
    %418 = arith.select %416, %403, %417 : vector<4x512xi1>, vector<4x512xf32>
    %c92 = arith.constant 92 : index
    %c0_145 = arith.constant 0 : index
    %419 = vector.load %arg5[%c92, %c0_145] : memref<100x512xf32, #tpu.memory_space<vmem>>, vector<4x512xf32>
    tpu.vector_store %arg5[%c92, %c0_145], %418 {strides = array<i32>} : memref<100x512xf32, #tpu.memory_space<vmem>>, vector<4x512xf32>,
    %c478_i32 = arith.constant 478 : i32
    %420 = tpu.dynamic_rotate %0 by %c478_i32 dim 1 : vector<4x512xf32>, i32 -> vector<4x512xf32>
    %c-2_i32_146 = arith.constant -2 : i32
    %421 = vector.broadcast %c-2_i32_146 : i32 to vector<1x512xi32>
    %422 = arith.cmpi sge, %10, %421 : vector<1x512xi32>
    %c14_i32_147 = arith.constant 14 : i32
    %423 = vector.broadcast %c14_i32_147 : i32 to vector<1x512xi32>
    %424 = arith.cmpi slt, %10, %423 : vector<1x512xi32>
    %425 = arith.andi %422, %424 : vector<1x512xi1>
    %c-2_i32_148 = arith.constant -2 : i32
    %426 = vector.broadcast %c-2_i32_148 : i32 to vector<1x512xi32>
    %427 = arith.cmpi sge, %12, %426 : vector<1x512xi32>
    %428 = arith.andi %425, %427 : vector<1x512xi1>
    %c14_i32_149 = arith.constant 14 : i32
    %429 = vector.broadcast %c14_i32_149 : i32 to vector<1x512xi32>
    %430 = arith.cmpi slt, %12, %429 : vector<1x512xi32>
    %431 = arith.andi %428, %430 : vector<1x512xi1>
    %cst_150 = arith.constant 0.000000e+00 : f32
    %432 = vector.shape_cast %431 : vector<1x512xi1> to vector<1x512xi1>
    %433 = vector.broadcast %432 : vector<1x512xi1> to vector<4x512xi1>
    %434 = vector.broadcast %cst_150 : f32 to vector<4x512xf32>
    %435 = arith.select %433, %420, %434 : vector<4x512xi1>, vector<4x512xf32>
    %c96 = arith.constant 96 : index
    %c0_151 = arith.constant 0 : index
    %436 = vector.load %arg5[%c96, %c0_151] : memref<100x512xf32, #tpu.memory_space<vmem>>, vector<4x512xf32>
    tpu.vector_store %arg5[%c96, %c0_151], %435 {strides = array<i32>} : memref<100x512xf32, #tpu.memory_space<vmem>>, vector<4x512xf32>,
    %c0_152 = arith.constant 0 : index
    %c0_153 = arith.constant 0 : index
    %437 = vector.load %arg1[%c0_152, %c0_153] : memref<4x100xf32, #tpu.memory_space<vmem>>, vector<4x100xf32>
    %c0_154 = arith.constant 0 : index
    %c0_155 = arith.constant 0 : index
    %438 = vector.load %arg5[%c0_154, %c0_155] : memref<100x512xf32, #tpu.memory_space<vmem>>, vector<100x512xf32>
    %cst_156 = arith.constant dense<0.000000e+00> : vector<4x512xf32>
    %439 = tpu.matmul %437, %438, %cst_156 {dimension_numbers = #tpu.dot_dimension_numbers<[1], [0], [0], [1], [0, 0, 1, 1], [], []>} : vector<4x100xf32>, vector<100x512xf32>, vector<4x512xf32> -> vector<4x512xf32>
    %cst_157 = arith.constant dense<0.000000e+00> : vector<4xf32>
    %440 = vector.multi_reduction <add>, %439, %cst_157 [1] : vector<4x512xf32> to vector<4xf32>
    %441 = vector.shape_cast %440 : vector<4xf32> to vector<4x1xf32>
    %442 = arith.mulf %439, %439 : vector<4x512xf32>
    %cst_158 = arith.constant dense<0.000000e+00> : vector<4xf32>
    %443 = vector.multi_reduction <add>, %442, %cst_158 [1] : vector<4x512xf32> to vector<4xf32>
    %444 = vector.shape_cast %443 : vector<4xf32> to vector<4x1xf32>
    %cst_159 = arith.constant 0.001953125 : f32
    %445 = vector.broadcast %cst_159 : f32 to vector<4x1xf32>
    %446 = arith.mulf %441, %445 : vector<4x1xf32>
    %cst_160 = arith.constant 0.001953125 : f32
    %447 = vector.broadcast %cst_160 : f32 to vector<4x1xf32>
    %448 = arith.mulf %444, %447 : vector<4x1xf32>
    %449 = arith.mulf %446, %446 : vector<4x1xf32>
    %450 = arith.subf %448, %449 : vector<4x1xf32>
    %cst_161 = arith.constant 9.99999974E-6 : f32
    %451 = vector.broadcast %cst_161 : f32 to vector<4x1xf32>
    %452 = arith.addf %450, %451 : vector<4x1xf32>
    %453 = math.rsqrt %452 : vector<4x1xf32>
    %454 = arith.mulf %2, %453 : vector<4x1xf32>
    %455 = arith.mulf %446, %454 : vector<4x1xf32>
    %456 = arith.subf %3, %455 : vector<4x1xf32>
    %457 = vector.broadcast %454 : vector<4x1xf32> to vector<4x512xf32>
    %458 = arith.mulf %439, %457 : vector<4x512xf32>
    %459 = vector.broadcast %456 : vector<4x1xf32> to vector<4x512xf32>
    %460 = arith.addf %458, %459 : vector<4x512xf32>
    %cst_162 = arith.constant 0.000000e+00 : f32
    %461 = vector.broadcast %cst_162 : f32 to vector<4x512xf32>
    %462 = arith.maximumf %460, %461 : vector<4x512xf32>
    %463 = tpu.iota {dimensions = array<i32: 1>} : vector<1x512xi32>
    %c4_i32_163 = arith.constant 4 : i32
    %464 = vector.broadcast %c4_i32_163 : i32 to vector<1x512xi32>
    %465 = arith.shrsi %463, %464 : vector<1x512xi32>
    %c15_i32_164 = arith.constant 15 : i32
    %466 = vector.broadcast %c15_i32_164 : i32 to vector<1x512xi32>
    %467 = arith.andi %465, %466 : vector<1x512xi32>
    %c15_i32_165 = arith.constant 15 : i32
    %468 = vector.broadcast %c15_i32_165 : i32 to vector<1x512xi32>
    %469 = arith.andi %463, %468 : vector<1x512xi32>
    %c34_i32_166 = arith.constant 34 : i32
    %470 = tpu.dynamic_rotate %462 by %c34_i32_166 dim 1 : vector<4x512xf32>, i32 -> vector<4x512xf32>
    %c2_i32_167 = arith.constant 2 : i32
    %471 = vector.broadcast %c2_i32_167 : i32 to vector<1x512xi32>
    %472 = arith.cmpi sge, %467, %471 : vector<1x512xi32>
    %c18_i32_168 = arith.constant 18 : i32
    %473 = vector.broadcast %c18_i32_168 : i32 to vector<1x512xi32>
    %474 = arith.cmpi slt, %467, %473 : vector<1x512xi32>
    %475 = arith.andi %472, %474 : vector<1x512xi1>
    %c2_i32_169 = arith.constant 2 : i32
    %476 = vector.broadcast %c2_i32_169 : i32 to vector<1x512xi32>
    %477 = arith.cmpi sge, %469, %476 : vector<1x512xi32>
    %478 = arith.andi %475, %477 : vector<1x512xi1>
    %c18_i32_170 = arith.constant 18 : i32
    %479 = vector.broadcast %c18_i32_170 : i32 to vector<1x512xi32>
    %480 = arith.cmpi slt, %469, %479 : vector<1x512xi32>
    %481 = arith.andi %478, %480 : vector<1x512xi1>
    %cst_171 = arith.constant 0.000000e+00 : f32
    %482 = vector.shape_cast %481 : vector<1x512xi1> to vector<1x512xi1>
    %483 = vector.broadcast %482 : vector<1x512xi1> to vector<4x512xi1>
    %484 = vector.broadcast %cst_171 : f32 to vector<4x512xf32>
    %485 = arith.select %483, %470, %484 : vector<4x512xi1>, vector<4x512xf32>
    %c0_172 = arith.constant 0 : index
    %c0_173 = arith.constant 0 : index
    %486 = vector.load %arg5[%c0_172, %c0_173] : memref<100x512xf32, #tpu.memory_space<vmem>>, vector<4x512xf32>
    tpu.vector_store %arg5[%c0_172, %c0_173], %485 {strides = array<i32>} : memref<100x512xf32, #tpu.memory_space<vmem>>, vector<4x512xf32>,
    %c33_i32_174 = arith.constant 33 : i32
    %487 = tpu.dynamic_rotate %462 by %c33_i32_174 dim 1 : vector<4x512xf32>, i32 -> vector<4x512xf32>
    %c2_i32_175 = arith.constant 2 : i32
    %488 = vector.broadcast %c2_i32_175 : i32 to vector<1x512xi32>
    %489 = arith.cmpi sge, %467, %488 : vector<1x512xi32>
    %c18_i32_176 = arith.constant 18 : i32
    %490 = vector.broadcast %c18_i32_176 : i32 to vector<1x512xi32>
    %491 = arith.cmpi slt, %467, %490 : vector<1x512xi32>
    %492 = arith.andi %489, %491 : vector<1x512xi1>
    %c1_i32_177 = arith.constant 1 : i32
    %493 = vector.broadcast %c1_i32_177 : i32 to vector<1x512xi32>
    %494 = arith.cmpi sge, %469, %493 : vector<1x512xi32>
    %495 = arith.andi %492, %494 : vector<1x512xi1>
    %c17_i32_178 = arith.constant 17 : i32
    %496 = vector.broadcast %c17_i32_178 : i32 to vector<1x512xi32>
    %497 = arith.cmpi slt, %469, %496 : vector<1x512xi32>
    %498 = arith.andi %495, %497 : vector<1x512xi1>
    %cst_179 = arith.constant 0.000000e+00 : f32
    %499 = vector.shape_cast %498 : vector<1x512xi1> to vector<1x512xi1>
    %500 = vector.broadcast %499 : vector<1x512xi1> to vector<4x512xi1>
    %501 = vector.broadcast %cst_179 : f32 to vector<4x512xf32>
    %502 = arith.select %500, %487, %501 : vector<4x512xi1>, vector<4x512xf32>
    %c4_180 = arith.constant 4 : index
    %c0_181 = arith.constant 0 : index
    %503 = vector.load %arg5[%c4_180, %c0_181] : memref<100x512xf32, #tpu.memory_space<vmem>>, vector<4x512xf32>
    tpu.vector_store %arg5[%c4_180, %c0_181], %502 {strides = array<i32>} : memref<100x512xf32, #tpu.memory_space<vmem>>, vector<4x512xf32>,
    %c32_i32_182 = arith.constant 32 : i32
    %504 = tpu.dynamic_rotate %462 by %c32_i32_182 dim 1 : vector<4x512xf32>, i32 -> vector<4x512xf32>
    %c2_i32_183 = arith.constant 2 : i32
    %505 = vector.broadcast %c2_i32_183 : i32 to vector<1x512xi32>
    %506 = arith.cmpi sge, %467, %505 : vector<1x512xi32>
    %c18_i32_184 = arith.constant 18 : i32
    %507 = vector.broadcast %c18_i32_184 : i32 to vector<1x512xi32>
    %508 = arith.cmpi slt, %467, %507 : vector<1x512xi32>
    %509 = arith.andi %506, %508 : vector<1x512xi1>
    %c0_i32_185 = arith.constant 0 : i32
    %510 = vector.broadcast %c0_i32_185 : i32 to vector<1x512xi32>
    %511 = arith.cmpi sge, %469, %510 : vector<1x512xi32>
    %512 = arith.andi %509, %511 : vector<1x512xi1>
    %c16_i32_186 = arith.constant 16 : i32
    %513 = vector.broadcast %c16_i32_186 : i32 to vector<1x512xi32>
    %514 = arith.cmpi slt, %469, %513 : vector<1x512xi32>
    %515 = arith.andi %512, %514 : vector<1x512xi1>
    %cst_187 = arith.constant 0.000000e+00 : f32
    %516 = vector.shape_cast %515 : vector<1x512xi1> to vector<1x512xi1>
    %517 = vector.broadcast %516 : vector<1x512xi1> to vector<4x512xi1>
    %518 = vector.broadcast %cst_187 : f32 to vector<4x512xf32>
    %519 = arith.select %517, %504, %518 : vector<4x512xi1>, vector<4x512xf32>
    %c8_188 = arith.constant 8 : index
    %c0_189 = arith.constant 0 : index
    %520 = vector.load %arg5[%c8_188, %c0_189] : memref<100x512xf32, #tpu.memory_space<vmem>>, vector<4x512xf32>
    tpu.vector_store %arg5[%c8_188, %c0_189], %519 {strides = array<i32>} : memref<100x512xf32, #tpu.memory_space<vmem>>, vector<4x512xf32>,
    %c31_i32_190 = arith.constant 31 : i32
    %521 = tpu.dynamic_rotate %462 by %c31_i32_190 dim 1 : vector<4x512xf32>, i32 -> vector<4x512xf32>
    %c2_i32_191 = arith.constant 2 : i32
    %522 = vector.broadcast %c2_i32_191 : i32 to vector<1x512xi32>
    %523 = arith.cmpi sge, %467, %522 : vector<1x512xi32>
    %c18_i32_192 = arith.constant 18 : i32
    %524 = vector.broadcast %c18_i32_192 : i32 to vector<1x512xi32>
    %525 = arith.cmpi slt, %467, %524 : vector<1x512xi32>
    %526 = arith.andi %523, %525 : vector<1x512xi1>
    %c-1_i32_193 = arith.constant -1 : i32
    %527 = vector.broadcast %c-1_i32_193 : i32 to vector<1x512xi32>
    %528 = arith.cmpi sge, %469, %527 : vector<1x512xi32>
    %529 = arith.andi %526, %528 : vector<1x512xi1>
    %c15_i32_194 = arith.constant 15 : i32
    %530 = vector.broadcast %c15_i32_194 : i32 to vector<1x512xi32>
    %531 = arith.cmpi slt, %469, %530 : vector<1x512xi32>
    %532 = arith.andi %529, %531 : vector<1x512xi1>
    %cst_195 = arith.constant 0.000000e+00 : f32
    %533 = vector.shape_cast %532 : vector<1x512xi1> to vector<1x512xi1>
    %534 = vector.broadcast %533 : vector<1x512xi1> to vector<4x512xi1>
    %535 = vector.broadcast %cst_195 : f32 to vector<4x512xf32>
    %536 = arith.select %534, %521, %535 : vector<4x512xi1>, vector<4x512xf32>
    %c12_196 = arith.constant 12 : index
    %c0_197 = arith.constant 0 : index
    %537 = vector.load %arg5[%c12_196, %c0_197] : memref<100x512xf32, #tpu.memory_space<vmem>>, vector<4x512xf32>
    tpu.vector_store %arg5[%c12_196, %c0_197], %536 {strides = array<i32>} : memref<100x512xf32, #tpu.memory_space<vmem>>, vector<4x512xf32>,
    %c30_i32_198 = arith.constant 30 : i32
    %538 = tpu.dynamic_rotate %462 by %c30_i32_198 dim 1 : vector<4x512xf32>, i32 -> vector<4x512xf32>
    %c2_i32_199 = arith.constant 2 : i32
    %539 = vector.broadcast %c2_i32_199 : i32 to vector<1x512xi32>
    %540 = arith.cmpi sge, %467, %539 : vector<1x512xi32>
    %c18_i32_200 = arith.constant 18 : i32
    %541 = vector.broadcast %c18_i32_200 : i32 to vector<1x512xi32>
    %542 = arith.cmpi slt, %467, %541 : vector<1x512xi32>
    %543 = arith.andi %540, %542 : vector<1x512xi1>
    %c-2_i32_201 = arith.constant -2 : i32
    %544 = vector.broadcast %c-2_i32_201 : i32 to vector<1x512xi32>
    %545 = arith.cmpi sge, %469, %544 : vector<1x512xi32>
    %546 = arith.andi %543, %545 : vector<1x512xi1>
    %c14_i32_202 = arith.constant 14 : i32
    %547 = vector.broadcast %c14_i32_202 : i32 to vector<1x512xi32>
    %548 = arith.cmpi slt, %469, %547 : vector<1x512xi32>
    %549 = arith.andi %546, %548 : vector<1x512xi1>
    %cst_203 = arith.constant 0.000000e+00 : f32
    %550 = vector.shape_cast %549 : vector<1x512xi1> to vector<1x512xi1>
    %551 = vector.broadcast %550 : vector<1x512xi1> to vector<4x512xi1>
    %552 = vector.broadcast %cst_203 : f32 to vector<4x512xf32>
    %553 = arith.select %551, %538, %552 : vector<4x512xi1>, vector<4x512xf32>
    %c16_204 = arith.constant 16 : index
    %c0_205 = arith.constant 0 : index
    %554 = vector.load %arg5[%c16_204, %c0_205] : memref<100x512xf32, #tpu.memory_space<vmem>>, vector<4x512xf32>
    tpu.vector_store %arg5[%c16_204, %c0_205], %553 {strides = array<i32>} : memref<100x512xf32, #tpu.memory_space<vmem>>, vector<4x512xf32>,
    %c18_i32_206 = arith.constant 18 : i32
    %555 = tpu.dynamic_rotate %462 by %c18_i32_206 dim 1 : vector<4x512xf32>, i32 -> vector<4x512xf32>
    %c1_i32_207 = arith.constant 1 : i32
    %556 = vector.broadcast %c1_i32_207 : i32 to vector<1x512xi32>
    %557 = arith.cmpi sge, %467, %556 : vector<1x512xi32>
    %c17_i32_208 = arith.constant 17 : i32
    %558 = vector.broadcast %c17_i32_208 : i32 to vector<1x512xi32>
    %559 = arith.cmpi slt, %467, %558 : vector<1x512xi32>
    %560 = arith.andi %557, %559 : vector<1x512xi1>
    %c2_i32_209 = arith.constant 2 : i32
    %561 = vector.broadcast %c2_i32_209 : i32 to vector<1x512xi32>
    %562 = arith.cmpi sge, %469, %561 : vector<1x512xi32>
    %563 = arith.andi %560, %562 : vector<1x512xi1>
    %c18_i32_210 = arith.constant 18 : i32
    %564 = vector.broadcast %c18_i32_210 : i32 to vector<1x512xi32>
    %565 = arith.cmpi slt, %469, %564 : vector<1x512xi32>
    %566 = arith.andi %563, %565 : vector<1x512xi1>
    %cst_211 = arith.constant 0.000000e+00 : f32
    %567 = vector.shape_cast %566 : vector<1x512xi1> to vector<1x512xi1>
    %568 = vector.broadcast %567 : vector<1x512xi1> to vector<4x512xi1>
    %569 = vector.broadcast %cst_211 : f32 to vector<4x512xf32>
    %570 = arith.select %568, %555, %569 : vector<4x512xi1>, vector<4x512xf32>
    %c20_212 = arith.constant 20 : index
    %c0_213 = arith.constant 0 : index
    %571 = vector.load %arg5[%c20_212, %c0_213] : memref<100x512xf32, #tpu.memory_space<vmem>>, vector<4x512xf32>
    tpu.vector_store %arg5[%c20_212, %c0_213], %570 {strides = array<i32>} : memref<100x512xf32, #tpu.memory_space<vmem>>, vector<4x512xf32>,
    %c17_i32_214 = arith.constant 17 : i32
    %572 = tpu.dynamic_rotate %462 by %c17_i32_214 dim 1 : vector<4x512xf32>, i32 -> vector<4x512xf32>
    %c1_i32_215 = arith.constant 1 : i32
    %573 = vector.broadcast %c1_i32_215 : i32 to vector<1x512xi32>
    %574 = arith.cmpi sge, %467, %573 : vector<1x512xi32>
    %c17_i32_216 = arith.constant 17 : i32
    %575 = vector.broadcast %c17_i32_216 : i32 to vector<1x512xi32>
    %576 = arith.cmpi slt, %467, %575 : vector<1x512xi32>
    %577 = arith.andi %574, %576 : vector<1x512xi1>
    %c1_i32_217 = arith.constant 1 : i32
    %578 = vector.broadcast %c1_i32_217 : i32 to vector<1x512xi32>
    %579 = arith.cmpi sge, %469, %578 : vector<1x512xi32>
    %580 = arith.andi %577, %579 : vector<1x512xi1>
    %c17_i32_218 = arith.constant 17 : i32
    %581 = vector.broadcast %c17_i32_218 : i32 to vector<1x512xi32>
    %582 = arith.cmpi slt, %469, %581 : vector<1x512xi32>
    %583 = arith.andi %580, %582 : vector<1x512xi1>
    %cst_219 = arith.constant 0.000000e+00 : f32
    %584 = vector.shape_cast %583 : vector<1x512xi1> to vector<1x512xi1>
    %585 = vector.broadcast %584 : vector<1x512xi1> to vector<4x512xi1>
    %586 = vector.broadcast %cst_219 : f32 to vector<4x512xf32>
    %587 = arith.select %585, %572, %586 : vector<4x512xi1>, vector<4x512xf32>
    %c24_220 = arith.constant 24 : index
    %c0_221 = arith.constant 0 : index
    %588 = vector.load %arg5[%c24_220, %c0_221] : memref<100x512xf32, #tpu.memory_space<vmem>>, vector<4x512xf32>
    tpu.vector_store %arg5[%c24_220, %c0_221], %587 {strides = array<i32>} : memref<100x512xf32, #tpu.memory_space<vmem>>, vector<4x512xf32>,
    %c16_i32_222 = arith.constant 16 : i32
    %589 = tpu.dynamic_rotate %462 by %c16_i32_222 dim 1 : vector<4x512xf32>, i32 -> vector<4x512xf32>
    %c1_i32_223 = arith.constant 1 : i32
    %590 = vector.broadcast %c1_i32_223 : i32 to vector<1x512xi32>
    %591 = arith.cmpi sge, %467, %590 : vector<1x512xi32>
    %c17_i32_224 = arith.constant 17 : i32
    %592 = vector.broadcast %c17_i32_224 : i32 to vector<1x512xi32>
    %593 = arith.cmpi slt, %467, %592 : vector<1x512xi32>
    %594 = arith.andi %591, %593 : vector<1x512xi1>
    %c0_i32_225 = arith.constant 0 : i32
    %595 = vector.broadcast %c0_i32_225 : i32 to vector<1x512xi32>
    %596 = arith.cmpi sge, %469, %595 : vector<1x512xi32>
    %597 = arith.andi %594, %596 : vector<1x512xi1>
    %c16_i32_226 = arith.constant 16 : i32
    %598 = vector.broadcast %c16_i32_226 : i32 to vector<1x512xi32>
    %599 = arith.cmpi slt, %469, %598 : vector<1x512xi32>
    %600 = arith.andi %597, %599 : vector<1x512xi1>
    %cst_227 = arith.constant 0.000000e+00 : f32
    %601 = vector.shape_cast %600 : vector<1x512xi1> to vector<1x512xi1>
    %602 = vector.broadcast %601 : vector<1x512xi1> to vector<4x512xi1>
    %603 = vector.broadcast %cst_227 : f32 to vector<4x512xf32>
    %604 = arith.select %602, %589, %603 : vector<4x512xi1>, vector<4x512xf32>
    %c28_228 = arith.constant 28 : index
    %c0_229 = arith.constant 0 : index
    %605 = vector.load %arg5[%c28_228, %c0_229] : memref<100x512xf32, #tpu.memory_space<vmem>>, vector<4x512xf32>
    tpu.vector_store %arg5[%c28_228, %c0_229], %604 {strides = array<i32>} : memref<100x512xf32, #tpu.memory_space<vmem>>, vector<4x512xf32>,
    %c15_i32_230 = arith.constant 15 : i32
    %606 = tpu.dynamic_rotate %462 by %c15_i32_230 dim 1 : vector<4x512xf32>, i32 -> vector<4x512xf32>
    %c1_i32_231 = arith.constant 1 : i32
    %607 = vector.broadcast %c1_i32_231 : i32 to vector<1x512xi32>
    %608 = arith.cmpi sge, %467, %607 : vector<1x512xi32>
    %c17_i32_232 = arith.constant 17 : i32
    %609 = vector.broadcast %c17_i32_232 : i32 to vector<1x512xi32>
    %610 = arith.cmpi slt, %467, %609 : vector<1x512xi32>
    %611 = arith.andi %608, %610 : vector<1x512xi1>
    %c-1_i32_233 = arith.constant -1 : i32
    %612 = vector.broadcast %c-1_i32_233 : i32 to vector<1x512xi32>
    %613 = arith.cmpi sge, %469, %612 : vector<1x512xi32>
    %614 = arith.andi %611, %613 : vector<1x512xi1>
    %c15_i32_234 = arith.constant 15 : i32
    %615 = vector.broadcast %c15_i32_234 : i32 to vector<1x512xi32>
    %616 = arith.cmpi slt, %469, %615 : vector<1x512xi32>
    %617 = arith.andi %614, %616 : vector<1x512xi1>
    %cst_235 = arith.constant 0.000000e+00 : f32
    %618 = vector.shape_cast %617 : vector<1x512xi1> to vector<1x512xi1>
    %619 = vector.broadcast %618 : vector<1x512xi1> to vector<4x512xi1>
    %620 = vector.broadcast %cst_235 : f32 to vector<4x512xf32>
    %621 = arith.select %619, %606, %620 : vector<4x512xi1>, vector<4x512xf32>
    %c32_236 = arith.constant 32 : index
    %c0_237 = arith.constant 0 : index
    %622 = vector.load %arg5[%c32_236, %c0_237] : memref<100x512xf32, #tpu.memory_space<vmem>>, vector<4x512xf32>
    tpu.vector_store %arg5[%c32_236, %c0_237], %621 {strides = array<i32>} : memref<100x512xf32, #tpu.memory_space<vmem>>, vector<4x512xf32>,
    %c14_i32_238 = arith.constant 14 : i32
    %623 = tpu.dynamic_rotate %462 by %c14_i32_238 dim 1 : vector<4x512xf32>, i32 -> vector<4x512xf32>
    %c1_i32_239 = arith.constant 1 : i32
    %624 = vector.broadcast %c1_i32_239 : i32 to vector<1x512xi32>
    %625 = arith.cmpi sge, %467, %624 : vector<1x512xi32>
    %c17_i32_240 = arith.constant 17 : i32
    %626 = vector.broadcast %c17_i32_240 : i32 to vector<1x512xi32>
    %627 = arith.cmpi slt, %467, %626 : vector<1x512xi32>
    %628 = arith.andi %625, %627 : vector<1x512xi1>
    %c-2_i32_241 = arith.constant -2 : i32
    %629 = vector.broadcast %c-2_i32_241 : i32 to vector<1x512xi32>
    %630 = arith.cmpi sge, %469, %629 : vector<1x512xi32>
    %631 = arith.andi %628, %630 : vector<1x512xi1>
    %c14_i32_242 = arith.constant 14 : i32
    %632 = vector.broadcast %c14_i32_242 : i32 to vector<1x512xi32>
    %633 = arith.cmpi slt, %469, %632 : vector<1x512xi32>
    %634 = arith.andi %631, %633 : vector<1x512xi1>
    %cst_243 = arith.constant 0.000000e+00 : f32
    %635 = vector.shape_cast %634 : vector<1x512xi1> to vector<1x512xi1>
    %636 = vector.broadcast %635 : vector<1x512xi1> to vector<4x512xi1>
    %637 = vector.broadcast %cst_243 : f32 to vector<4x512xf32>
    %638 = arith.select %636, %623, %637 : vector<4x512xi1>, vector<4x512xf32>
    %c36_244 = arith.constant 36 : index
    %c0_245 = arith.constant 0 : index
    %639 = vector.load %arg5[%c36_244, %c0_245] : memref<100x512xf32, #tpu.memory_space<vmem>>, vector<4x512xf32>
    tpu.vector_store %arg5[%c36_244, %c0_245], %638 {strides = array<i32>} : memref<100x512xf32, #tpu.memory_space<vmem>>, vector<4x512xf32>,
    %c2_i32_246 = arith.constant 2 : i32
    %640 = tpu.dynamic_rotate %462 by %c2_i32_246 dim 1 : vector<4x512xf32>, i32 -> vector<4x512xf32>
    %c0_i32_247 = arith.constant 0 : i32
    %641 = vector.broadcast %c0_i32_247 : i32 to vector<1x512xi32>
    %642 = arith.cmpi sge, %467, %641 : vector<1x512xi32>
    %c16_i32_248 = arith.constant 16 : i32
    %643 = vector.broadcast %c16_i32_248 : i32 to vector<1x512xi32>
    %644 = arith.cmpi slt, %467, %643 : vector<1x512xi32>
    %645 = arith.andi %642, %644 : vector<1x512xi1>
    %c2_i32_249 = arith.constant 2 : i32
    %646 = vector.broadcast %c2_i32_249 : i32 to vector<1x512xi32>
    %647 = arith.cmpi sge, %469, %646 : vector<1x512xi32>
    %648 = arith.andi %645, %647 : vector<1x512xi1>
    %c18_i32_250 = arith.constant 18 : i32
    %649 = vector.broadcast %c18_i32_250 : i32 to vector<1x512xi32>
    %650 = arith.cmpi slt, %469, %649 : vector<1x512xi32>
    %651 = arith.andi %648, %650 : vector<1x512xi1>
    %cst_251 = arith.constant 0.000000e+00 : f32
    %652 = vector.shape_cast %651 : vector<1x512xi1> to vector<1x512xi1>
    %653 = vector.broadcast %652 : vector<1x512xi1> to vector<4x512xi1>
    %654 = vector.broadcast %cst_251 : f32 to vector<4x512xf32>
    %655 = arith.select %653, %640, %654 : vector<4x512xi1>, vector<4x512xf32>
    %c40_252 = arith.constant 40 : index
    %c0_253 = arith.constant 0 : index
    %656 = vector.load %arg5[%c40_252, %c0_253] : memref<100x512xf32, #tpu.memory_space<vmem>>, vector<4x512xf32>
    tpu.vector_store %arg5[%c40_252, %c0_253], %655 {strides = array<i32>} : memref<100x512xf32, #tpu.memory_space<vmem>>, vector<4x512xf32>,
    %c1_i32_254 = arith.constant 1 : i32
    %657 = tpu.dynamic_rotate %462 by %c1_i32_254 dim 1 : vector<4x512xf32>, i32 -> vector<4x512xf32>
    %c0_i32_255 = arith.constant 0 : i32
    %658 = vector.broadcast %c0_i32_255 : i32 to vector<1x512xi32>
    %659 = arith.cmpi sge, %467, %658 : vector<1x512xi32>
    %c16_i32_256 = arith.constant 16 : i32
    %660 = vector.broadcast %c16_i32_256 : i32 to vector<1x512xi32>
    %661 = arith.cmpi slt, %467, %660 : vector<1x512xi32>
    %662 = arith.andi %659, %661 : vector<1x512xi1>
    %c1_i32_257 = arith.constant 1 : i32
    %663 = vector.broadcast %c1_i32_257 : i32 to vector<1x512xi32>
    %664 = arith.cmpi sge, %469, %663 : vector<1x512xi32>
    %665 = arith.andi %662, %664 : vector<1x512xi1>
    %c17_i32_258 = arith.constant 17 : i32
    %666 = vector.broadcast %c17_i32_258 : i32 to vector<1x512xi32>
    %667 = arith.cmpi slt, %469, %666 : vector<1x512xi32>
    %668 = arith.andi %665, %667 : vector<1x512xi1>
    %cst_259 = arith.constant 0.000000e+00 : f32
    %669 = vector.shape_cast %668 : vector<1x512xi1> to vector<1x512xi1>
    %670 = vector.broadcast %669 : vector<1x512xi1> to vector<4x512xi1>
    %671 = vector.broadcast %cst_259 : f32 to vector<4x512xf32>
    %672 = arith.select %670, %657, %671 : vector<4x512xi1>, vector<4x512xf32>
    %c44_260 = arith.constant 44 : index
    %c0_261 = arith.constant 0 : index
    %673 = vector.load %arg5[%c44_260, %c0_261] : memref<100x512xf32, #tpu.memory_space<vmem>>, vector<4x512xf32>
    tpu.vector_store %arg5[%c44_260, %c0_261], %672 {strides = array<i32>} : memref<100x512xf32, #tpu.memory_space<vmem>>, vector<4x512xf32>,
    %c0_i32_262 = arith.constant 0 : i32
    %674 = vector.broadcast %c0_i32_262 : i32 to vector<1x512xi32>
    %675 = arith.cmpi sge, %467, %674 : vector<1x512xi32>
    %c16_i32_263 = arith.constant 16 : i32
    %676 = vector.broadcast %c16_i32_263 : i32 to vector<1x512xi32>
    %677 = arith.cmpi slt, %467, %676 : vector<1x512xi32>
    %678 = arith.andi %675, %677 : vector<1x512xi1>
    %c0_i32_264 = arith.constant 0 : i32
    %679 = vector.broadcast %c0_i32_264 : i32 to vector<1x512xi32>
    %680 = arith.cmpi sge, %469, %679 : vector<1x512xi32>
    %681 = arith.andi %678, %680 : vector<1x512xi1>
    %c16_i32_265 = arith.constant 16 : i32
    %682 = vector.broadcast %c16_i32_265 : i32 to vector<1x512xi32>
    %683 = arith.cmpi slt, %469, %682 : vector<1x512xi32>
    %684 = arith.andi %681, %683 : vector<1x512xi1>
    %cst_266 = arith.constant 0.000000e+00 : f32
    %685 = vector.shape_cast %684 : vector<1x512xi1> to vector<1x512xi1>
    %686 = vector.broadcast %685 : vector<1x512xi1> to vector<4x512xi1>
    %687 = vector.broadcast %cst_266 : f32 to vector<4x512xf32>
    %688 = arith.select %686, %462, %687 : vector<4x512xi1>, vector<4x512xf32>
    %c48_267 = arith.constant 48 : index
    %c0_268 = arith.constant 0 : index
    %689 = vector.load %arg5[%c48_267, %c0_268] : memref<100x512xf32, #tpu.memory_space<vmem>>, vector<4x512xf32>
    tpu.vector_store %arg5[%c48_267, %c0_268], %688 {strides = array<i32>} : memref<100x512xf32, #tpu.memory_space<vmem>>, vector<4x512xf32>,
    %c511_i32_269 = arith.constant 511 : i32
    %690 = tpu.dynamic_rotate %462 by %c511_i32_269 dim 1 : vector<4x512xf32>, i32 -> vector<4x512xf32>
    %c0_i32_270 = arith.constant 0 : i32
    %691 = vector.broadcast %c0_i32_270 : i32 to vector<1x512xi32>
    %692 = arith.cmpi sge, %467, %691 : vector<1x512xi32>
    %c16_i32_271 = arith.constant 16 : i32
    %693 = vector.broadcast %c16_i32_271 : i32 to vector<1x512xi32>
    %694 = arith.cmpi slt, %467, %693 : vector<1x512xi32>
    %695 = arith.andi %692, %694 : vector<1x512xi1>
    %c-1_i32_272 = arith.constant -1 : i32
    %696 = vector.broadcast %c-1_i32_272 : i32 to vector<1x512xi32>
    %697 = arith.cmpi sge, %469, %696 : vector<1x512xi32>
    %698 = arith.andi %695, %697 : vector<1x512xi1>
    %c15_i32_273 = arith.constant 15 : i32
    %699 = vector.broadcast %c15_i32_273 : i32 to vector<1x512xi32>
    %700 = arith.cmpi slt, %469, %699 : vector<1x512xi32>
    %701 = arith.andi %698, %700 : vector<1x512xi1>
    %cst_274 = arith.constant 0.000000e+00 : f32
    %702 = vector.shape_cast %701 : vector<1x512xi1> to vector<1x512xi1>
    %703 = vector.broadcast %702 : vector<1x512xi1> to vector<4x512xi1>
    %704 = vector.broadcast %cst_274 : f32 to vector<4x512xf32>
    %705 = arith.select %703, %690, %704 : vector<4x512xi1>, vector<4x512xf32>
    %c52_275 = arith.constant 52 : index
    %c0_276 = arith.constant 0 : index
    %706 = vector.load %arg5[%c52_275, %c0_276] : memref<100x512xf32, #tpu.memory_space<vmem>>, vector<4x512xf32>
    tpu.vector_store %arg5[%c52_275, %c0_276], %705 {strides = array<i32>} : memref<100x512xf32, #tpu.memory_space<vmem>>, vector<4x512xf32>,
    %c510_i32_277 = arith.constant 510 : i32
    %707 = tpu.dynamic_rotate %462 by %c510_i32_277 dim 1 : vector<4x512xf32>, i32 -> vector<4x512xf32>
    %c0_i32_278 = arith.constant 0 : i32
    %708 = vector.broadcast %c0_i32_278 : i32 to vector<1x512xi32>
    %709 = arith.cmpi sge, %467, %708 : vector<1x512xi32>
    %c16_i32_279 = arith.constant 16 : i32
    %710 = vector.broadcast %c16_i32_279 : i32 to vector<1x512xi32>
    %711 = arith.cmpi slt, %467, %710 : vector<1x512xi32>
    %712 = arith.andi %709, %711 : vector<1x512xi1>
    %c-2_i32_280 = arith.constant -2 : i32
    %713 = vector.broadcast %c-2_i32_280 : i32 to vector<1x512xi32>
    %714 = arith.cmpi sge, %469, %713 : vector<1x512xi32>
    %715 = arith.andi %712, %714 : vector<1x512xi1>
    %c14_i32_281 = arith.constant 14 : i32
    %716 = vector.broadcast %c14_i32_281 : i32 to vector<1x512xi32>
    %717 = arith.cmpi slt, %469, %716 : vector<1x512xi32>
    %718 = arith.andi %715, %717 : vector<1x512xi1>
    %cst_282 = arith.constant 0.000000e+00 : f32
    %719 = vector.shape_cast %718 : vector<1x512xi1> to vector<1x512xi1>
    %720 = vector.broadcast %719 : vector<1x512xi1> to vector<4x512xi1>
    %721 = vector.broadcast %cst_282 : f32 to vector<4x512xf32>
    %722 = arith.select %720, %707, %721 : vector<4x512xi1>, vector<4x512xf32>
    %c56_283 = arith.constant 56 : index
    %c0_284 = arith.constant 0 : index
    %723 = vector.load %arg5[%c56_283, %c0_284] : memref<100x512xf32, #tpu.memory_space<vmem>>, vector<4x512xf32>
    tpu.vector_store %arg5[%c56_283, %c0_284], %722 {strides = array<i32>} : memref<100x512xf32, #tpu.memory_space<vmem>>, vector<4x512xf32>,
    %c498_i32_285 = arith.constant 498 : i32
    %724 = tpu.dynamic_rotate %462 by %c498_i32_285 dim 1 : vector<4x512xf32>, i32 -> vector<4x512xf32>
    %c-1_i32_286 = arith.constant -1 : i32
    %725 = vector.broadcast %c-1_i32_286 : i32 to vector<1x512xi32>
    %726 = arith.cmpi sge, %467, %725 : vector<1x512xi32>
    %c15_i32_287 = arith.constant 15 : i32
    %727 = vector.broadcast %c15_i32_287 : i32 to vector<1x512xi32>
    %728 = arith.cmpi slt, %467, %727 : vector<1x512xi32>
    %729 = arith.andi %726, %728 : vector<1x512xi1>
    %c2_i32_288 = arith.constant 2 : i32
    %730 = vector.broadcast %c2_i32_288 : i32 to vector<1x512xi32>
    %731 = arith.cmpi sge, %469, %730 : vector<1x512xi32>
    %732 = arith.andi %729, %731 : vector<1x512xi1>
    %c18_i32_289 = arith.constant 18 : i32
    %733 = vector.broadcast %c18_i32_289 : i32 to vector<1x512xi32>
    %734 = arith.cmpi slt, %469, %733 : vector<1x512xi32>
    %735 = arith.andi %732, %734 : vector<1x512xi1>
    %cst_290 = arith.constant 0.000000e+00 : f32
    %736 = vector.shape_cast %735 : vector<1x512xi1> to vector<1x512xi1>
    %737 = vector.broadcast %736 : vector<1x512xi1> to vector<4x512xi1>
    %738 = vector.broadcast %cst_290 : f32 to vector<4x512xf32>
    %739 = arith.select %737, %724, %738 : vector<4x512xi1>, vector<4x512xf32>
    %c60_291 = arith.constant 60 : index
    %c0_292 = arith.constant 0 : index
    %740 = vector.load %arg5[%c60_291, %c0_292] : memref<100x512xf32, #tpu.memory_space<vmem>>, vector<4x512xf32>
    tpu.vector_store %arg5[%c60_291, %c0_292], %739 {strides = array<i32>} : memref<100x512xf32, #tpu.memory_space<vmem>>, vector<4x512xf32>,
    %c497_i32_293 = arith.constant 497 : i32
    %741 = tpu.dynamic_rotate %462 by %c497_i32_293 dim 1 : vector<4x512xf32>, i32 -> vector<4x512xf32>
    %c-1_i32_294 = arith.constant -1 : i32
    %742 = vector.broadcast %c-1_i32_294 : i32 to vector<1x512xi32>
    %743 = arith.cmpi sge, %467, %742 : vector<1x512xi32>
    %c15_i32_295 = arith.constant 15 : i32
    %744 = vector.broadcast %c15_i32_295 : i32 to vector<1x512xi32>
    %745 = arith.cmpi slt, %467, %744 : vector<1x512xi32>
    %746 = arith.andi %743, %745 : vector<1x512xi1>
    %c1_i32_296 = arith.constant 1 : i32
    %747 = vector.broadcast %c1_i32_296 : i32 to vector<1x512xi32>
    %748 = arith.cmpi sge, %469, %747 : vector<1x512xi32>
    %749 = arith.andi %746, %748 : vector<1x512xi1>
    %c17_i32_297 = arith.constant 17 : i32
    %750 = vector.broadcast %c17_i32_297 : i32 to vector<1x512xi32>
    %751 = arith.cmpi slt, %469, %750 : vector<1x512xi32>
    %752 = arith.andi %749, %751 : vector<1x512xi1>
    %cst_298 = arith.constant 0.000000e+00 : f32
    %753 = vector.shape_cast %752 : vector<1x512xi1> to vector<1x512xi1>
    %754 = vector.broadcast %753 : vector<1x512xi1> to vector<4x512xi1>
    %755 = vector.broadcast %cst_298 : f32 to vector<4x512xf32>
    %756 = arith.select %754, %741, %755 : vector<4x512xi1>, vector<4x512xf32>
    %c64_299 = arith.constant 64 : index
    %c0_300 = arith.constant 0 : index
    %757 = vector.load %arg5[%c64_299, %c0_300] : memref<100x512xf32, #tpu.memory_space<vmem>>, vector<4x512xf32>
    tpu.vector_store %arg5[%c64_299, %c0_300], %756 {strides = array<i32>} : memref<100x512xf32, #tpu.memory_space<vmem>>, vector<4x512xf32>,
    %c496_i32_301 = arith.constant 496 : i32
    %758 = tpu.dynamic_rotate %462 by %c496_i32_301 dim 1 : vector<4x512xf32>, i32 -> vector<4x512xf32>
    %c-1_i32_302 = arith.constant -1 : i32
    %759 = vector.broadcast %c-1_i32_302 : i32 to vector<1x512xi32>
    %760 = arith.cmpi sge, %467, %759 : vector<1x512xi32>
    %c15_i32_303 = arith.constant 15 : i32
    %761 = vector.broadcast %c15_i32_303 : i32 to vector<1x512xi32>
    %762 = arith.cmpi slt, %467, %761 : vector<1x512xi32>
    %763 = arith.andi %760, %762 : vector<1x512xi1>
    %c0_i32_304 = arith.constant 0 : i32
    %764 = vector.broadcast %c0_i32_304 : i32 to vector<1x512xi32>
    %765 = arith.cmpi sge, %469, %764 : vector<1x512xi32>
    %766 = arith.andi %763, %765 : vector<1x512xi1>
    %c16_i32_305 = arith.constant 16 : i32
    %767 = vector.broadcast %c16_i32_305 : i32 to vector<1x512xi32>
    %768 = arith.cmpi slt, %469, %767 : vector<1x512xi32>
    %769 = arith.andi %766, %768 : vector<1x512xi1>
    %cst_306 = arith.constant 0.000000e+00 : f32
    %770 = vector.shape_cast %769 : vector<1x512xi1> to vector<1x512xi1>
    %771 = vector.broadcast %770 : vector<1x512xi1> to vector<4x512xi1>
    %772 = vector.broadcast %cst_306 : f32 to vector<4x512xf32>
    %773 = arith.select %771, %758, %772 : vector<4x512xi1>, vector<4x512xf32>
    %c68_307 = arith.constant 68 : index
    %c0_308 = arith.constant 0 : index
    %774 = vector.load %arg5[%c68_307, %c0_308] : memref<100x512xf32, #tpu.memory_space<vmem>>, vector<4x512xf32>
    tpu.vector_store %arg5[%c68_307, %c0_308], %773 {strides = array<i32>} : memref<100x512xf32, #tpu.memory_space<vmem>>, vector<4x512xf32>,
    %c495_i32_309 = arith.constant 495 : i32
    %775 = tpu.dynamic_rotate %462 by %c495_i32_309 dim 1 : vector<4x512xf32>, i32 -> vector<4x512xf32>
    %c-1_i32_310 = arith.constant -1 : i32
    %776 = vector.broadcast %c-1_i32_310 : i32 to vector<1x512xi32>
    %777 = arith.cmpi sge, %467, %776 : vector<1x512xi32>
    %c15_i32_311 = arith.constant 15 : i32
    %778 = vector.broadcast %c15_i32_311 : i32 to vector<1x512xi32>
    %779 = arith.cmpi slt, %467, %778 : vector<1x512xi32>
    %780 = arith.andi %777, %779 : vector<1x512xi1>
    %c-1_i32_312 = arith.constant -1 : i32
    %781 = vector.broadcast %c-1_i32_312 : i32 to vector<1x512xi32>
    %782 = arith.cmpi sge, %469, %781 : vector<1x512xi32>
    %783 = arith.andi %780, %782 : vector<1x512xi1>
    %c15_i32_313 = arith.constant 15 : i32
    %784 = vector.broadcast %c15_i32_313 : i32 to vector<1x512xi32>
    %785 = arith.cmpi slt, %469, %784 : vector<1x512xi32>
    %786 = arith.andi %783, %785 : vector<1x512xi1>
    %cst_314 = arith.constant 0.000000e+00 : f32
    %787 = vector.shape_cast %786 : vector<1x512xi1> to vector<1x512xi1>
    %788 = vector.broadcast %787 : vector<1x512xi1> to vector<4x512xi1>
    %789 = vector.broadcast %cst_314 : f32 to vector<4x512xf32>
    %790 = arith.select %788, %775, %789 : vector<4x512xi1>, vector<4x512xf32>
    %c72_315 = arith.constant 72 : index
    %c0_316 = arith.constant 0 : index
    %791 = vector.load %arg5[%c72_315, %c0_316] : memref<100x512xf32, #tpu.memory_space<vmem>>, vector<4x512xf32>
    tpu.vector_store %arg5[%c72_315, %c0_316], %790 {strides = array<i32>} : memref<100x512xf32, #tpu.memory_space<vmem>>, vector<4x512xf32>,
    %c494_i32_317 = arith.constant 494 : i32
    %792 = tpu.dynamic_rotate %462 by %c494_i32_317 dim 1 : vector<4x512xf32>, i32 -> vector<4x512xf32>
    %c-1_i32_318 = arith.constant -1 : i32
    %793 = vector.broadcast %c-1_i32_318 : i32 to vector<1x512xi32>
    %794 = arith.cmpi sge, %467, %793 : vector<1x512xi32>
    %c15_i32_319 = arith.constant 15 : i32
    %795 = vector.broadcast %c15_i32_319 : i32 to vector<1x512xi32>
    %796 = arith.cmpi slt, %467, %795 : vector<1x512xi32>
    %797 = arith.andi %794, %796 : vector<1x512xi1>
    %c-2_i32_320 = arith.constant -2 : i32
    %798 = vector.broadcast %c-2_i32_320 : i32 to vector<1x512xi32>
    %799 = arith.cmpi sge, %469, %798 : vector<1x512xi32>
    %800 = arith.andi %797, %799 : vector<1x512xi1>
    %c14_i32_321 = arith.constant 14 : i32
    %801 = vector.broadcast %c14_i32_321 : i32 to vector<1x512xi32>
    %802 = arith.cmpi slt, %469, %801 : vector<1x512xi32>
    %803 = arith.andi %800, %802 : vector<1x512xi1>
    %cst_322 = arith.constant 0.000000e+00 : f32
    %804 = vector.shape_cast %803 : vector<1x512xi1> to vector<1x512xi1>
    %805 = vector.broadcast %804 : vector<1x512xi1> to vector<4x512xi1>
    %806 = vector.broadcast %cst_322 : f32 to vector<4x512xf32>
    %807 = arith.select %805, %792, %806 : vector<4x512xi1>, vector<4x512xf32>
    %c76_323 = arith.constant 76 : index
    %c0_324 = arith.constant 0 : index
    %808 = vector.load %arg5[%c76_323, %c0_324] : memref<100x512xf32, #tpu.memory_space<vmem>>, vector<4x512xf32>
    tpu.vector_store %arg5[%c76_323, %c0_324], %807 {strides = array<i32>} : memref<100x512xf32, #tpu.memory_space<vmem>>, vector<4x512xf32>,
    %c482_i32_325 = arith.constant 482 : i32
    %809 = tpu.dynamic_rotate %462 by %c482_i32_325 dim 1 : vector<4x512xf32>, i32 -> vector<4x512xf32>
    %c-2_i32_326 = arith.constant -2 : i32
    %810 = vector.broadcast %c-2_i32_326 : i32 to vector<1x512xi32>
    %811 = arith.cmpi sge, %467, %810 : vector<1x512xi32>
    %c14_i32_327 = arith.constant 14 : i32
    %812 = vector.broadcast %c14_i32_327 : i32 to vector<1x512xi32>
    %813 = arith.cmpi slt, %467, %812 : vector<1x512xi32>
    %814 = arith.andi %811, %813 : vector<1x512xi1>
    %c2_i32_328 = arith.constant 2 : i32
    %815 = vector.broadcast %c2_i32_328 : i32 to vector<1x512xi32>
    %816 = arith.cmpi sge, %469, %815 : vector<1x512xi32>
    %817 = arith.andi %814, %816 : vector<1x512xi1>
    %c18_i32_329 = arith.constant 18 : i32
    %818 = vector.broadcast %c18_i32_329 : i32 to vector<1x512xi32>
    %819 = arith.cmpi slt, %469, %818 : vector<1x512xi32>
    %820 = arith.andi %817, %819 : vector<1x512xi1>
    %cst_330 = arith.constant 0.000000e+00 : f32
    %821 = vector.shape_cast %820 : vector<1x512xi1> to vector<1x512xi1>
    %822 = vector.broadcast %821 : vector<1x512xi1> to vector<4x512xi1>
    %823 = vector.broadcast %cst_330 : f32 to vector<4x512xf32>
    %824 = arith.select %822, %809, %823 : vector<4x512xi1>, vector<4x512xf32>
    %c80_331 = arith.constant 80 : index
    %c0_332 = arith.constant 0 : index
    %825 = vector.load %arg5[%c80_331, %c0_332] : memref<100x512xf32, #tpu.memory_space<vmem>>, vector<4x512xf32>
    tpu.vector_store %arg5[%c80_331, %c0_332], %824 {strides = array<i32>} : memref<100x512xf32, #tpu.memory_space<vmem>>, vector<4x512xf32>,
    %c481_i32_333 = arith.constant 481 : i32
    %826 = tpu.dynamic_rotate %462 by %c481_i32_333 dim 1 : vector<4x512xf32>, i32 -> vector<4x512xf32>
    %c-2_i32_334 = arith.constant -2 : i32
    %827 = vector.broadcast %c-2_i32_334 : i32 to vector<1x512xi32>
    %828 = arith.cmpi sge, %467, %827 : vector<1x512xi32>
    %c14_i32_335 = arith.constant 14 : i32
    %829 = vector.broadcast %c14_i32_335 : i32 to vector<1x512xi32>
    %830 = arith.cmpi slt, %467, %829 : vector<1x512xi32>
    %831 = arith.andi %828, %830 : vector<1x512xi1>
    %c1_i32_336 = arith.constant 1 : i32
    %832 = vector.broadcast %c1_i32_336 : i32 to vector<1x512xi32>
    %833 = arith.cmpi sge, %469, %832 : vector<1x512xi32>
    %834 = arith.andi %831, %833 : vector<1x512xi1>
    %c17_i32_337 = arith.constant 17 : i32
    %835 = vector.broadcast %c17_i32_337 : i32 to vector<1x512xi32>
    %836 = arith.cmpi slt, %469, %835 : vector<1x512xi32>
    %837 = arith.andi %834, %836 : vector<1x512xi1>
    %cst_338 = arith.constant 0.000000e+00 : f32
    %838 = vector.shape_cast %837 : vector<1x512xi1> to vector<1x512xi1>
    %839 = vector.broadcast %838 : vector<1x512xi1> to vector<4x512xi1>
    %840 = vector.broadcast %cst_338 : f32 to vector<4x512xf32>
    %841 = arith.select %839, %826, %840 : vector<4x512xi1>, vector<4x512xf32>
    %c84_339 = arith.constant 84 : index
    %c0_340 = arith.constant 0 : index
    %842 = vector.load %arg5[%c84_339, %c0_340] : memref<100x512xf32, #tpu.memory_space<vmem>>, vector<4x512xf32>
    tpu.vector_store %arg5[%c84_339, %c0_340], %841 {strides = array<i32>} : memref<100x512xf32, #tpu.memory_space<vmem>>, vector<4x512xf32>,
    %c480_i32_341 = arith.constant 480 : i32
    %843 = tpu.dynamic_rotate %462 by %c480_i32_341 dim 1 : vector<4x512xf32>, i32 -> vector<4x512xf32>
    %c-2_i32_342 = arith.constant -2 : i32
    %844 = vector.broadcast %c-2_i32_342 : i32 to vector<1x512xi32>
    %845 = arith.cmpi sge, %467, %844 : vector<1x512xi32>
    %c14_i32_343 = arith.constant 14 : i32
    %846 = vector.broadcast %c14_i32_343 : i32 to vector<1x512xi32>
    %847 = arith.cmpi slt, %467, %846 : vector<1x512xi32>
    %848 = arith.andi %845, %847 : vector<1x512xi1>
    %c0_i32_344 = arith.constant 0 : i32
    %849 = vector.broadcast %c0_i32_344 : i32 to vector<1x512xi32>
    %850 = arith.cmpi sge, %469, %849 : vector<1x512xi32>
    %851 = arith.andi %848, %850 : vector<1x512xi1>
    %c16_i32_345 = arith.constant 16 : i32
    %852 = vector.broadcast %c16_i32_345 : i32 to vector<1x512xi32>
    %853 = arith.cmpi slt, %469, %852 : vector<1x512xi32>
    %854 = arith.andi %851, %853 : vector<1x512xi1>
    %cst_346 = arith.constant 0.000000e+00 : f32
    %855 = vector.shape_cast %854 : vector<1x512xi1> to vector<1x512xi1>
    %856 = vector.broadcast %855 : vector<1x512xi1> to vector<4x512xi1>
    %857 = vector.broadcast %cst_346 : f32 to vector<4x512xf32>
    %858 = arith.select %856, %843, %857 : vector<4x512xi1>, vector<4x512xf32>
    %c88_347 = arith.constant 88 : index
    %c0_348 = arith.constant 0 : index
    %859 = vector.load %arg5[%c88_347, %c0_348] : memref<100x512xf32, #tpu.memory_space<vmem>>, vector<4x512xf32>
    tpu.vector_store %arg5[%c88_347, %c0_348], %858 {strides = array<i32>} : memref<100x512xf32, #tpu.memory_space<vmem>>, vector<4x512xf32>,
    %c479_i32_349 = arith.constant 479 : i32
    %860 = tpu.dynamic_rotate %462 by %c479_i32_349 dim 1 : vector<4x512xf32>, i32 -> vector<4x512xf32>
    %c-2_i32_350 = arith.constant -2 : i32
    %861 = vector.broadcast %c-2_i32_350 : i32 to vector<1x512xi32>
    %862 = arith.cmpi sge, %467, %861 : vector<1x512xi32>
    %c14_i32_351 = arith.constant 14 : i32
    %863 = vector.broadcast %c14_i32_351 : i32 to vector<1x512xi32>
    %864 = arith.cmpi slt, %467, %863 : vector<1x512xi32>
    %865 = arith.andi %862, %864 : vector<1x512xi1>
    %c-1_i32_352 = arith.constant -1 : i32
    %866 = vector.broadcast %c-1_i32_352 : i32 to vector<1x512xi32>
    %867 = arith.cmpi sge, %469, %866 : vector<1x512xi32>
    %868 = arith.andi %865, %867 : vector<1x512xi1>
    %c15_i32_353 = arith.constant 15 : i32
    %869 = vector.broadcast %c15_i32_353 : i32 to vector<1x512xi32>
    %870 = arith.cmpi slt, %469, %869 : vector<1x512xi32>
    %871 = arith.andi %868, %870 : vector<1x512xi1>
    %cst_354 = arith.constant 0.000000e+00 : f32
    %872 = vector.shape_cast %871 : vector<1x512xi1> to vector<1x512xi1>
    %873 = vector.broadcast %872 : vector<1x512xi1> to vector<4x512xi1>
    %874 = vector.broadcast %cst_354 : f32 to vector<4x512xf32>
    %875 = arith.select %873, %860, %874 : vector<4x512xi1>, vector<4x512xf32>
    %c92_355 = arith.constant 92 : index
    %c0_356 = arith.constant 0 : index
    %876 = vector.load %arg5[%c92_355, %c0_356] : memref<100x512xf32, #tpu.memory_space<vmem>>, vector<4x512xf32>
    tpu.vector_store %arg5[%c92_355, %c0_356], %875 {strides = array<i32>} : memref<100x512xf32, #tpu.memory_space<vmem>>, vector<4x512xf32>,
    %c478_i32_357 = arith.constant 478 : i32
    %877 = tpu.dynamic_rotate %462 by %c478_i32_357 dim 1 : vector<4x512xf32>, i32 -> vector<4x512xf32>
    %c-2_i32_358 = arith.constant -2 : i32
    %878 = vector.broadcast %c-2_i32_358 : i32 to vector<1x512xi32>
    %879 = arith.cmpi sge, %467, %878 : vector<1x512xi32>
    %c14_i32_359 = arith.constant 14 : i32
    %880 = vector.broadcast %c14_i32_359 : i32 to vector<1x512xi32>
    %881 = arith.cmpi slt, %467, %880 : vector<1x512xi32>
    %882 = arith.andi %879, %881 : vector<1x512xi1>
    %c-2_i32_360 = arith.constant -2 : i32
    %883 = vector.broadcast %c-2_i32_360 : i32 to vector<1x512xi32>
    %884 = arith.cmpi sge, %469, %883 : vector<1x512xi32>
    %885 = arith.andi %882, %884 : vector<1x512xi1>
    %c14_i32_361 = arith.constant 14 : i32
    %886 = vector.broadcast %c14_i32_361 : i32 to vector<1x512xi32>
    %887 = arith.cmpi slt, %469, %886 : vector<1x512xi32>
    %888 = arith.andi %885, %887 : vector<1x512xi1>
    %cst_362 = arith.constant 0.000000e+00 : f32
    %889 = vector.shape_cast %888 : vector<1x512xi1> to vector<1x512xi1>
    %890 = vector.broadcast %889 : vector<1x512xi1> to vector<4x512xi1>
    %891 = vector.broadcast %cst_362 : f32 to vector<4x512xf32>
    %892 = arith.select %890, %877, %891 : vector<4x512xi1>, vector<4x512xf32>
    %c96_363 = arith.constant 96 : index
    %c0_364 = arith.constant 0 : index
    %893 = vector.load %arg5[%c96_363, %c0_364] : memref<100x512xf32, #tpu.memory_space<vmem>>, vector<4x512xf32>
    tpu.vector_store %arg5[%c96_363, %c0_364], %892 {strides = array<i32>} : memref<100x512xf32, #tpu.memory_space<vmem>>, vector<4x512xf32>,
    %c0_365 = arith.constant 0 : index
    %c0_366 = arith.constant 0 : index
    %894 = vector.load %arg2[%c0_365, %c0_366] : memref<4x100xf32, #tpu.memory_space<vmem>>, vector<4x100xf32>
    %c0_367 = arith.constant 0 : index
    %c0_368 = arith.constant 0 : index
    %895 = vector.load %arg5[%c0_367, %c0_368] : memref<100x512xf32, #tpu.memory_space<vmem>>, vector<100x512xf32>
    %cst_369 = arith.constant dense<0.000000e+00> : vector<4x512xf32>
    %896 = tpu.matmul %894, %895, %cst_369 {dimension_numbers = #tpu.dot_dimension_numbers<[1], [0], [0], [1], [0, 0, 1, 1], [], []>} : vector<4x100xf32>, vector<100x512xf32>, vector<4x512xf32> -> vector<4x512xf32>
    %cst_370 = arith.constant dense<0.000000e+00> : vector<4xf32>
    %897 = vector.multi_reduction <add>, %896, %cst_370 [1] : vector<4x512xf32> to vector<4xf32>
    %898 = vector.shape_cast %897 : vector<4xf32> to vector<4x1xf32>
    %899 = arith.mulf %896, %896 : vector<4x512xf32>
    %cst_371 = arith.constant dense<0.000000e+00> : vector<4xf32>
    %900 = vector.multi_reduction <add>, %899, %cst_371 [1] : vector<4x512xf32> to vector<4xf32>
    %901 = vector.shape_cast %900 : vector<4xf32> to vector<4x1xf32>
    %cst_372 = arith.constant 0.001953125 : f32
    %902 = vector.broadcast %cst_372 : f32 to vector<4x1xf32>
    %903 = arith.mulf %898, %902 : vector<4x1xf32>
    %cst_373 = arith.constant 0.001953125 : f32
    %904 = vector.broadcast %cst_373 : f32 to vector<4x1xf32>
    %905 = arith.mulf %901, %904 : vector<4x1xf32>
    %906 = arith.mulf %903, %903 : vector<4x1xf32>
    %907 = arith.subf %905, %906 : vector<4x1xf32>
    %cst_374 = arith.constant 9.99999974E-6 : f32
    %908 = vector.broadcast %cst_374 : f32 to vector<4x1xf32>
    %909 = arith.addf %907, %908 : vector<4x1xf32>
    %910 = math.rsqrt %909 : vector<4x1xf32>
    %911 = arith.mulf %4, %910 : vector<4x1xf32>
    %912 = arith.mulf %903, %911 : vector<4x1xf32>
    %913 = arith.subf %5, %912 : vector<4x1xf32>
    %914 = vector.broadcast %911 : vector<4x1xf32> to vector<4x512xf32>
    %915 = arith.mulf %896, %914 : vector<4x512xf32>
    %916 = vector.broadcast %913 : vector<4x1xf32> to vector<4x512xf32>
    %917 = arith.addf %915, %916 : vector<4x512xf32>
    %918 = arith.addf %917, %0 : vector<4x512xf32>
    %cst_375 = arith.constant 0.000000e+00 : f32
    %919 = vector.broadcast %cst_375 : f32 to vector<4x512xf32>
    %920 = arith.maximumf %918, %919 : vector<4x512xf32>
    %c0_376 = arith.constant 0 : index
    %c0_377 = arith.constant 0 : index
    %921 = vector.load %arg4[%c0_376, %c0_377] : memref<4x512xf32, #tpu.memory_space<vmem>>, vector<4x512xf32>
    tpu.vector_store %arg4[%c0_376, %c0_377], %920 {strides = array<i32>} : memref<4x512xf32, #tpu.memory_space<vmem>>, vector<4x512xf32>,
    return
  }
}

</mosaic_0001>

<llo_original>
// kernel: tpu_custom_call.1
$region0: #{tpu_custom_call.1}
  #allocation0 [shape = 'u32[]', space=smem, size = 0x4, offset = 0x4, fixed_abs, tag = 'smem constant byte address 0x4 - core index']
  #allocation1 [shape = 'u32[144,128]{1,0:T(1,128)}', space=vmem, size = 0x12000, scoped, tag = 'internal scratch']
  #allocation2 [shape = 'f32[100,512]{1,0:T(8,128)}', space=vmem, size = 0x34000, scoped, tag = 'scratch operand']
  %s0 = inlined_call_operand.hbm [shape: f32[4,512], index: 0, kind: input, shape index: {}]
  %s1 = inlined_call_operand.hbm [shape: f32[4,100], index: 1, kind: input, shape index: {}]
  %s2 = inlined_call_operand.vmem [shape: f32[4,100], index: 2, kind: input, shape index: {}]
  %s3 = inlined_call_operand.vmem [shape: f32[4,4], index: 3, kind: input, shape index: {}]
  %s4 = inlined_call_operand.hbm [shape: f32[4,512], index: 4, kind: output, shape index: {}]
  %s5 = sld [smem:[#allocation0]]
  $region34: #{tpu_custom_call.1} parent=0
    _
  %s7 = ssub.s32 1, %s5
  %s8 = scalar_select 0, %s7, %s5
  $region1: #{tpu_custom_call.1} parent=0
    #allocation3 [shape = 'u8[8192]{0}', space=vmem, size = 0x2000, scoped, tag = 'input window, operand 0, single buffered']
    #allocation4 [shape = 's32[1]{0}', space=sflag, size = 0x4, scoped, tag = 'scoped memory for tpu_custom_call.1']
    #allocation5 [shape = 's32[1]{0}', space=sflag, size = 0x4, scoped, tag = 'scoped memory for tpu_custom_call.1']
    #allocation6 [shape = 'u8[2048]{0}', space=vmem, size = 0x800, scoped, tag = 'input window, operand 1, single buffered']
    #allocation7 [shape = 's32[1]{0}', space=sflag, size = 0x4, scoped, tag = 'scoped memory for tpu_custom_call.1']
    #allocation8 [shape = 'u8[8192]{0}', space=vmem, size = 0x2000, scoped, tag = 'output window, operand 0, single buffered']
    %9 = vsyncpa [#allocation4], 0
    %10 = vsyncpa [#allocation7], 0
    %11 = vsyncpa [#allocation5], 0
    // Predicated region
    $region2: #{tpu_custom_call.1} parent=1 // pred_check
      _
    $region3: #{tpu_custom_call.1} parent=1 // pred_check_branch
      %13 = sbr.rel (0) target = $region5
    $region4: #{tpu_custom_call.1} parent=1 // pred_region
      %s15 = ssub.s32 256, 256
      %16 = vsyncadd [#allocation4], %s15
      %s18 = sshll.u32 [#allocation3], 4
      %s19 = int_to_ptr.vmem [resolvable:$true] %s18
      %21 = dma.hbm_to_vmem [thread:$0]  %s0, 256, %s19, [#allocation4]
    $region5: #{tpu_custom_call.1} parent=1 // pred_fallthru
      _
    // Predicated region
    $region6: #{tpu_custom_call.1} parent=1 // pred_check
      _
    $region7: #{tpu_custom_call.1} parent=1 // pred_check_branch
      %23 = sbr.rel (0) target = $region9
    $region8: #{tpu_custom_call.1} parent=1 // pred_region
      %s25 = ssub.s32 64, 64
      %26 = vsyncadd [#allocation7], %s25
      %s28 = sshll.u32 [#allocation6], 4
      %s29 = int_to_ptr.vmem [resolvable:$true] %s28
      %31 = dma.hbm_to_vmem [thread:$0]  %s1, 64, %s29, [#allocation7]
    $region9: #{tpu_custom_call.1} parent=1 // pred_fallthru
      _
    // Predicated region
    $region10: #{tpu_custom_call.1} parent=1 // pred_check
      _
    $region11: #{tpu_custom_call.1} parent=1 // pred_check_branch
      %33 = sbr.rel (0) target = $region13
    $region12: #{tpu_custom_call.1} parent=1 // pred_region
      _
    $region13: #{tpu_custom_call.1} parent=1 // pred_fallthru
      _
    // Predicated region
    $region14: #{tpu_custom_call.1} parent=1 // pred_check
      _
    $region15: #{tpu_custom_call.1} parent=1 // pred_check_branch
      %35 = sbr.rel (0) target = $region17
    $region16: #{tpu_custom_call.1} parent=1 // pred_region
      _
    $region17: #{tpu_custom_call.1} parent=1 // pred_fallthru
      _
    // Predicated region
    $region18: #{tpu_custom_call.1} parent=1 // pred_check
      _
    $region19: #{tpu_custom_call.1} parent=1 // pred_check_branch
      %37 = sbr.rel (0) target = $region21
    $region20: #{tpu_custom_call.1} parent=1 // pred_region
      %38 = dma.done [#allocation4], 256
    $region21: #{tpu_custom_call.1} parent=1 // pred_fallthru
      _
    // Predicated region
    $region22: #{tpu_custom_call.1} parent=1 // pred_check
      _
    $region23: #{tpu_custom_call.1} parent=1 // pred_check_branch
      %40 = sbr.rel (0) target = $region25
    $region24: #{tpu_custom_call.1} parent=1 // pred_region
      %41 = dma.done [#allocation7], 64
    $region25: #{tpu_custom_call.1} parent=1 // pred_fallthru
      _
    %v42 = vld [vmem:[#allocation3] sm:$0xff]
    %v43 = vld [vmem:[#allocation3 + $0x8] sm:$0xff]
    %v44 = vld [vmem:[%s3] sm:$0xf]
    %v45 = vlaneseq
    %v46 = vand.u32 %v45, 127
    %v47 = vadd.s32 %v46, 128
    %v48 = vadd.s32 %v46, 256
    %v49 = vadd.s32 %v46, 384
    %v50 = vshra.s32 %v46, 4
    %v51 = vshra.s32 %v47, 4
    %v52 = vshra.s32 %v48, 4
    %v53 = vshra.s32 %v49, 4
    %v54 = vand.u32 %v50, 15
    %v55 = vand.u32 %v51, 15
    %v56 = vand.u32 %v52, 15
    %v57 = vand.u32 %v53, 15
    %v58 = vand.u32 %v46, 15
    %v59 = vand.u32 %v47, 15
    %v60 = vand.u32 %v48, 15
    %v61 = vand.u32 %v49, 15
    %v64 = vcombine.high %v42, %v42
    %v65 = vcombine.high %v43, %v43
    %68 = vrot.lane.b32.xlu0 %v42, 34
    %v69 = vpop.permute.xlu0 %68
    %70 = vrot.lane.b32.xlu0 %v64, 34
    %v71 = vpop.permute.xlu0 %70
    %72 = vrot.lane.b32.xlu0 %v43, 34
    %v73 = vpop.permute.xlu0 %72
    %74 = vrot.lane.b32.xlu0 %v65, 34
    %v75 = vpop.permute.xlu0 %74
    %vm76 = vcmp.lt.s32.totalorder %v46, 34
    %v77 = vsel %vm76, %v73, %v75
    %v78 = vsel %vm76, %v71, %v73
    %v79 = vsel %vm76, %v69, %v71
    %v80 = vsel %vm76, %v75, %v69
    %vm81 = vcmp.ge.s32.totalorder %v54, 2
    %vm82 = vcmp.ge.s32.totalorder %v55, 2
    %vm83 = vcmp.ge.s32.totalorder %v56, 2
    %vm84 = vcmp.ge.s32.totalorder %v57, 2
    %vm85 = vcmp.lt.s32.totalorder %v54, 18
    %vm86 = vcmp.lt.s32.totalorder %v55, 18
    %vm87 = vcmp.lt.s32.totalorder %v56, 18
    %vm88 = vcmp.lt.s32.totalorder %v57, 18
    %vm89 = vmand %vm81, %vm85
    %vm90 = vmand %vm82, %vm86
    %vm91 = vmand %vm83, %vm87
    %vm92 = vmand %vm84, %vm88
    %vm93 = vcmp.ge.s32.totalorder %v58, 2
    %vm94 = vcmp.ge.s32.totalorder %v59, 2
    %vm95 = vcmp.ge.s32.totalorder %v60, 2
    %vm96 = vcmp.ge.s32.totalorder %v61, 2
    %vm97 = vmand %vm89, %vm93
    %vm98 = vmand %vm90, %vm94
    %vm99 = vmand %vm91, %vm95
    %vm100 = vmand %vm92, %vm96
    %vm101 = vcmp.lt.s32.totalorder %v58, 18
    %vm102 = vcmp.lt.s32.totalorder %v59, 18
    %vm103 = vcmp.lt.s32.totalorder %v60, 18
    %vm104 = vcmp.lt.s32.totalorder %v61, 18
    %vm105 = vmand %vm97, %vm101
    %vm106 = vmand %vm98, %vm102
    %vm107 = vmand %vm99, %vm103
    %vm108 = vmand %vm100, %vm104
    %v109 = vsel %vm105, 1, 0
    %v110 = vsel %vm106, 1, 0
    %v111 = vsel %vm107, 1, 0
    %v112 = vsel %vm108, 1, 0
    %vm113 = vcmp.eq.s32.totalorder %v109, 1
    %vm114 = vcmp.eq.s32.totalorder %v110, 1
    %vm115 = vcmp.eq.s32.totalorder %v111, 1
    %vm116 = vcmp.eq.s32.totalorder %v112, 1
    %v117 = vsel %vm113, %v80, 0.0
    %v118 = vsel %vm114, %v79, 0.0
    %v119 = vsel %vm115, %v78, 0.0
    %v120 = vsel %vm116, %v77, 0.0
    %121 = vst [vmem:[#allocation2] sm:$0xf] %v117
    %122 = vst [vmem:[#allocation2 + $0x8] sm:$0xf] %v118
    %123 = vst [vmem:[#allocation2 + $0x10] sm:$0xf] %v119
    %124 = vst [vmem:[#allocation2 + $0x18] sm:$0xf] %v120
    %125 = vrot.lane.b32.xlu0 %v42, 33
    %v126 = vpop.permute.xlu0 %125
    %127 = vrot.lane.b32.xlu0 %v64, 33
    %v128 = vpop.permute.xlu0 %127
    %129 = vrot.lane.b32.xlu0 %v43, 33
    %v130 = vpop.permute.xlu0 %129
    %131 = vrot.lane.b32.xlu0 %v65, 33
    %v132 = vpop.permute.xlu0 %131
    %vm133 = vcmp.lt.s32.totalorder %v46, 33
    %v134 = vsel %vm133, %v130, %v132
    %v135 = vsel %vm133, %v128, %v130
    %v136 = vsel %vm133, %v126, %v128
    %v137 = vsel %vm133, %v132, %v126
    %vm138 = vcmp.ge.s32.totalorder %v58, 1
    %vm139 = vcmp.ge.s32.totalorder %v59, 1
    %vm140 = vcmp.ge.s32.totalorder %v60, 1
    %vm141 = vcmp.ge.s32.totalorder %v61, 1
    %vm142 = vmand %vm89, %vm138
    %vm143 = vmand %vm90, %vm139
    %vm144 = vmand %vm91, %vm140
    %vm145 = vmand %vm92, %vm141
    %vm146 = vcmp.lt.s32.totalorder %v58, 17
    %vm147 = vcmp.lt.s32.totalorder %v59, 17
    %vm148 = vcmp.lt.s32.totalorder %v60, 17
    %vm149 = vcmp.lt.s32.totalorder %v61, 17
    %vm150 = vmand %vm142, %vm146
    %vm151 = vmand %vm143, %vm147
    %vm152 = vmand %vm144, %vm148
    %vm153 = vmand %vm145, %vm149
    %v154 = vsel %vm150, 1, 0
    %v155 = vsel %vm151, 1, 0
    %v156 = vsel %vm152, 1, 0
    %v157 = vsel %vm153, 1, 0
    %vm158 = vcmp.eq.s32.totalorder %v154, 1
    %vm159 = vcmp.eq.s32.totalorder %v155, 1
    %vm160 = vcmp.eq.s32.totalorder %v156, 1
    %vm161 = vcmp.eq.s32.totalorder %v157, 1
    %v162 = vsel %vm158, %v137, 0.0
    %v163 = vsel %vm159, %v136, 0.0
    %v164 = vsel %vm160, %v135, 0.0
    %v165 = vsel %vm161, %v134, 0.0
    %v170 = vrot.slane %v162, 4
    %v171 = vrot.slane %v163, 4
    %v172 = vrot.slane %v164, 4
    %v173 = vrot.slane %v165, 4
    %178 = vst [vmem:[#allocation2] sm:$0xf0] %v170
    %179 = vst [vmem:[#allocation2 + $0x8] sm:$0xf0] %v171
    %180 = vst [vmem:[#allocation2 + $0x10] sm:$0xf0] %v172
    %181 = vst [vmem:[#allocation2 + $0x18] sm:$0xf0] %v173
    %182 = vrot.lane.b32.xlu0 %v42, 32
    %v183 = vpop.permute.xlu0 %182
    %184 = vrot.lane.b32.xlu0 %v64, 32
    %v185 = vpop.permute.xlu0 %184
    %186 = vrot.lane.b32.xlu0 %v43, 32
    %v187 = vpop.permute.xlu0 %186
    %188 = vrot.lane.b32.xlu0 %v65, 32
    %v189 = vpop.permute.xlu0 %188
    %vm190 = vcmp.lt.s32.totalorder %v46, 32
    %v191 = vsel %vm190, %v187, %v189
    %v192 = vsel %vm190, %v185, %v187
    %v193 = vsel %vm190, %v183, %v185
    %v194 = vsel %vm190, %v189, %v183
    %vm195 = vcmp.ge.s32.totalorder %v58, 0
    %vm196 = vcmp.ge.s32.totalorder %v59, 0
    %vm197 = vcmp.ge.s32.totalorder %v60, 0
    %vm198 = vcmp.ge.s32.totalorder %v61, 0
    %vm199 = vmand %vm89, %vm195
    %vm200 = vmand %vm90, %vm196
    %vm201 = vmand %vm91, %vm197
    %vm202 = vmand %vm92, %vm198
    %vm203 = vcmp.lt.s32.totalorder %v58, 16
    %vm204 = vcmp.lt.s32.totalorder %v59, 16
    %vm205 = vcmp.lt.s32.totalorder %v60, 16
    %vm206 = vcmp.lt.s32.totalorder %v61, 16
    %vm207 = vmand %vm199, %vm203
    %vm208 = vmand %vm200, %vm204
    %vm209 = vmand %vm201, %vm205
    %vm210 = vmand %vm202, %vm206
    %v211 = vsel %vm207, 1, 0
    %v212 = vsel %vm208, 1, 0
    %v213 = vsel %vm209, 1, 0
    %v214 = vsel %vm210, 1, 0
    %vm215 = vcmp.eq.s32.totalorder %v211, 1
    %vm216 = vcmp.eq.s32.totalorder %v212, 1
    %vm217 = vcmp.eq.s32.totalorder %v213, 1
    %vm218 = vcmp.eq.s32.totalorder %v214, 1
    %v219 = vsel %vm215, %v194, 0.0
    %v220 = vsel %vm216, %v193, 0.0
    %v221 = vsel %vm217, %v192, 0.0
    %v222 = vsel %vm218, %v191, 0.0
    %223 = vst [vmem:[#allocation2 + $0x20] sm:$0xf] %v219
    %224 = vst [vmem:[#allocation2 + $0x28] sm:$0xf] %v220
    %225 = vst [vmem:[#allocation2 + $0x30] sm:$0xf] %v221
    %226 = vst [vmem:[#allocation2 + $0x38] sm:$0xf] %v222
    %227 = vrot.lane.b32.xlu0 %v42, 31
    %v228 = vpop.permute.xlu0 %227
    %229 = vrot.lane.b32.xlu0 %v64, 31
    %v230 = vpop.permute.xlu0 %229
    %231 = vrot.lane.b32.xlu0 %v43, 31
    %v232 = vpop.permute.xlu0 %231
    %233 = vrot.lane.b32.xlu0 %v65, 31
    %v234 = vpop.permute.xlu0 %233
    %vm235 = vcmp.lt.s32.totalorder %v46, 31
    %v236 = vsel %vm235, %v232, %v234
    %v237 = vsel %vm235, %v230, %v232
    %v238 = vsel %vm235, %v228, %v230
    %v239 = vsel %vm235, %v234, %v228
    %vm240 = vcmp.ge.s32.totalorder %v58, 4294967295
    %vm241 = vcmp.ge.s32.totalorder %v59, 4294967295
    %vm242 = vcmp.ge.s32.totalorder %v60, 4294967295
    %vm243 = vcmp.ge.s32.totalorder %v61, 4294967295
    %vm244 = vmand %vm89, %vm240
    %vm245 = vmand %vm90, %vm241
    %vm246 = vmand %vm91, %vm242
    %vm247 = vmand %vm92, %vm243
    %vm248 = vcmp.lt.s32.totalorder %v58, 15
    %vm249 = vcmp.lt.s32.totalorder %v59, 15
    %vm250 = vcmp.lt.s32.totalorder %v60, 15
    %vm251 = vcmp.lt.s32.totalorder %v61, 15
    %vm252 = vmand %vm244, %vm248
    %vm253 = vmand %vm245, %vm249
    %vm254 = vmand %vm246, %vm250
    %vm255 = vmand %vm247, %vm251
    %v256 = vsel %vm252, 1, 0
    %v257 = vsel %vm253, 1, 0
    %v258 = vsel %vm254, 1, 0
    %v259 = vsel %vm255, 1, 0
    %vm260 = vcmp.eq.s32.totalorder %v256, 1
    %vm261 = vcmp.eq.s32.totalorder %v257, 1
    %vm262 = vcmp.eq.s32.totalorder %v258, 1
    %vm263 = vcmp.eq.s32.totalorder %v259, 1
    %v264 = vsel %vm260, %v239, 0.0
    %v265 = vsel %vm261, %v238, 0.0
    %v266 = vsel %vm262, %v237, 0.0
    %v267 = vsel %vm263, %v236, 0.0
    %v272 = vrot.slane %v264, 4
    %v273 = vrot.slane %v265, 4
    %v274 = vrot.slane %v266, 4
    %v275 = vrot.slane %v267, 4
    %280 = vst [vmem:[#allocation2 + $0x20] sm:$0xf0] %v272
    %281 = vst [vmem:[#allocation2 + $0x28] sm:$0xf0] %v273
    %282 = vst [vmem:[#allocation2 + $0x30] sm:$0xf0] %v274
    %283 = vst [vmem:[#allocation2 + $0x38] sm:$0xf0] %v275
    %284 = vrot.lane.b32.xlu0 %v42, 30
    %v285 = vpop.permute.xlu0 %284
    %286 = vrot.lane.b32.xlu0 %v64, 30
    %v287 = vpop.permute.xlu0 %286
    %288 = vrot.lane.b32.xlu0 %v43, 30
    %v289 = vpop.permute.xlu0 %288
    %290 = vrot.lane.b32.xlu0 %v65, 30
    %v291 = vpop.permute.xlu0 %290
    %vm292 = vcmp.lt.s32.totalorder %v46, 30
    %v293 = vsel %vm292, %v289, %v291
    %v294 = vsel %vm292, %v287, %v289
    %v295 = vsel %vm292, %v285, %v287
    %v296 = vsel %vm292, %v291, %v285
    %vm297 = vcmp.ge.s32.totalorder %v58, 4294967294
    %vm298 = vcmp.ge.s32.totalorder %v59, 4294967294
    %vm299 = vcmp.ge.s32.totalorder %v60, 4294967294
    %vm300 = vcmp.ge.s32.totalorder %v61, 4294967294
    %vm301 = vmand %vm89, %vm297
    %vm302 = vmand %vm90, %vm298
    %vm303 = vmand %vm91, %vm299
    %vm304 = vmand %vm92, %vm300
    %vm305 = vcmp.lt.s32.totalorder %v58, 14
    %vm306 = vcmp.lt.s32.totalorder %v59, 14
    %vm307 = vcmp.lt.s32.totalorder %v60, 14
    %vm308 = vcmp.lt.s32.totalorder %v61, 14
    %vm309 = vmand %vm301, %vm305
    %vm310 = vmand %vm302, %vm306
    %vm311 = vmand %vm303, %vm307
    %vm312 = vmand %vm304, %vm308
    %v313 = vsel %vm309, 1, 0
    %v314 = vsel %vm310, 1, 0
    %v315 = vsel %vm311, 1, 0
    %v316 = vsel %vm312, 1, 0
    %vm317 = vcmp.eq.s32.totalorder %v313, 1
    %vm318 = vcmp.eq.s32.totalorder %v314, 1
    %vm319 = vcmp.eq.s32.totalorder %v315, 1
    %vm320 = vcmp.eq.s32.totalorder %v316, 1
    %v321 = vsel %vm317, %v296, 0.0
    %v322 = vsel %vm318, %v295, 0.0
    %v323 = vsel %vm319, %v294, 0.0
    %v324 = vsel %vm320, %v293, 0.0
    %325 = vst [vmem:[#allocation2 + $0x40] sm:$0xf] %v321
    %326 = vst [vmem:[#allocation2 + $0x48] sm:$0xf] %v322
    %327 = vst [vmem:[#allocation2 + $0x50] sm:$0xf] %v323
    %328 = vst [vmem:[#allocation2 + $0x58] sm:$0xf] %v324
    %329 = vrot.lane.b32.xlu0 %v42, 18
    %v330 = vpop.permute.xlu0 %329
    %331 = vrot.lane.b32.xlu0 %v64, 18
    %v332 = vpop.permute.xlu0 %331
    %333 = vrot.lane.b32.xlu0 %v43, 18
    %v334 = vpop.permute.xlu0 %333
    %335 = vrot.lane.b32.xlu0 %v65, 18
    %v336 = vpop.permute.xlu0 %335
    %vm337 = vcmp.lt.s32.totalorder %v46, 18
    %v338 = vsel %vm337, %v334, %v336
    %v339 = vsel %vm337, %v332, %v334
    %v340 = vsel %vm337, %v330, %v332
    %v341 = vsel %vm337, %v336, %v330
    %vm342 = vcmp.ge.s32.totalorder %v54, 1
    %vm343 = vcmp.ge.s32.totalorder %v55, 1
    %vm344 = vcmp.ge.s32.totalorder %v56, 1
    %vm345 = vcmp.ge.s32.totalorder %v57, 1
    %vm346 = vcmp.lt.s32.totalorder %v54, 17
    %vm347 = vcmp.lt.s32.totalorder %v55, 17
    %vm348 = vcmp.lt.s32.totalorder %v56, 17
    %vm349 = vcmp.lt.s32.totalorder %v57, 17
    %vm350 = vmand %vm342, %vm346
    %vm351 = vmand %vm343, %vm347
    %vm352 = vmand %vm344, %vm348
    %vm353 = vmand %vm345, %vm349
    %vm354 = vmand %vm350, %vm93
    %vm355 = vmand %vm351, %vm94
    %vm356 = vmand %vm352, %vm95
    %vm357 = vmand %vm353, %vm96
    %vm358 = vmand %vm354, %vm101
    %vm359 = vmand %vm355, %vm102
    %vm360 = vmand %vm356, %vm103
    %vm361 = vmand %vm357, %vm104
    %v362 = vsel %vm358, 1, 0
    %v363 = vsel %vm359, 1, 0
    %v364 = vsel %vm360, 1, 0
    %v365 = vsel %vm361, 1, 0
    %vm366 = vcmp.eq.s32.totalorder %v362, 1
    %vm367 = vcmp.eq.s32.totalorder %v363, 1
    %vm368 = vcmp.eq.s32.totalorder %v364, 1
    %vm369 = vcmp.eq.s32.totalorder %v365, 1
    %v370 = vsel %vm366, %v341, 0.0
    %v371 = vsel %vm367, %v340, 0.0
    %v372 = vsel %vm368, %v339, 0.0
    %v373 = vsel %vm369, %v338, 0.0
    %v378 = vrot.slane %v370, 4
    %v379 = vrot.slane %v371, 4
    %v380 = vrot.slane %v372, 4
    %v381 = vrot.slane %v373, 4
    %386 = vst [vmem:[#allocation2 + $0x40] sm:$0xf0] %v378
    %387 = vst [vmem:[#allocation2 + $0x48] sm:$0xf0] %v379
    %388 = vst [vmem:[#allocation2 + $0x50] sm:$0xf0] %v380
    %389 = vst [vmem:[#allocation2 + $0x58] sm:$0xf0] %v381
    %390 = vrot.lane.b32.xlu0 %v42, 17
    %v391 = vpop.permute.xlu0 %390
    %392 = vrot.lane.b32.xlu0 %v64, 17
    %v393 = vpop.permute.xlu0 %392
    %394 = vrot.lane.b32.xlu0 %v43, 17
    %v395 = vpop.permute.xlu0 %394
    %396 = vrot.lane.b32.xlu0 %v65, 17
    %v397 = vpop.permute.xlu0 %396
    %vm398 = vcmp.lt.s32.totalorder %v46, 17
    %v399 = vsel %vm398, %v395, %v397
    %v400 = vsel %vm398, %v393, %v395
    %v401 = vsel %vm398, %v391, %v393
    %v402 = vsel %vm398, %v397, %v391
    %vm403 = vmand %vm350, %vm138
    %vm404 = vmand %vm351, %vm139
    %vm405 = vmand %vm352, %vm140
    %vm406 = vmand %vm353, %vm141
    %vm407 = vmand %vm403, %vm146
    %vm408 = vmand %vm404, %vm147
    %vm409 = vmand %vm405, %vm148
    %vm410 = vmand %vm406, %vm149
    %v411 = vsel %vm407, 1, 0
    %v412 = vsel %vm408, 1, 0
    %v413 = vsel %vm409, 1, 0
    %v414 = vsel %vm410, 1, 0
    %vm415 = vcmp.eq.s32.totalorder %v411, 1
    %vm416 = vcmp.eq.s32.totalorder %v412, 1
    %vm417 = vcmp.eq.s32.totalorder %v413, 1
    %vm418 = vcmp.eq.s32.totalorder %v414, 1
    %v419 = vsel %vm415, %v402, 0.0
    %v420 = vsel %vm416, %v401, 0.0
    %v421 = vsel %vm417, %v400, 0.0
    %v422 = vsel %vm418, %v399, 0.0
    %423 = vst [vmem:[#allocation2 + $0x60] sm:$0xf] %v419
    %424 = vst [vmem:[#allocation2 + $0x68] sm:$0xf] %v420
    %425 = vst [vmem:[#allocation2 + $0x70] sm:$0xf] %v421
    %426 = vst [vmem:[#allocation2 + $0x78] sm:$0xf] %v422
    %427 = vrot.lane.b32.xlu0 %v42, 16
    %v428 = vpop.permute.xlu0 %427
    %429 = vrot.lane.b32.xlu0 %v64, 16
    %v430 = vpop.permute.xlu0 %429
    %431 = vrot.lane.b32.xlu0 %v43, 16
    %v432 = vpop.permute.xlu0 %431
    %433 = vrot.lane.b32.xlu0 %v65, 16
    %v434 = vpop.permute.xlu0 %433
    %vm435 = vcmp.lt.s32.totalorder %v46, 16
    %v436 = vsel %vm435, %v432, %v434
    %v437 = vsel %vm435, %v430, %v432
    %v438 = vsel %vm435, %v428, %v430
    %v439 = vsel %vm435, %v434, %v428
    %vm440 = vmand %vm350, %vm195
    %vm441 = vmand %vm351, %vm196
    %vm442 = vmand %vm352, %vm197
    %vm443 = vmand %vm353, %vm198
    %vm444 = vmand %vm440, %vm203
    %vm445 = vmand %vm441, %vm204
    %vm446 = vmand %vm442, %vm205
    %vm447 = vmand %vm443, %vm206
    %v448 = vsel %vm444, 1, 0
    %v449 = vsel %vm445, 1, 0
    %v450 = vsel %vm446, 1, 0
    %v451 = vsel %vm447, 1, 0
    %vm452 = vcmp.eq.s32.totalorder %v448, 1
    %vm453 = vcmp.eq.s32.totalorder %v449, 1
    %vm454 = vcmp.eq.s32.totalorder %v450, 1
    %vm455 = vcmp.eq.s32.totalorder %v451, 1
    %v456 = vsel %vm452, %v439, 0.0
    %v457 = vsel %vm453, %v438, 0.0
    %v458 = vsel %vm454, %v437, 0.0
    %v459 = vsel %vm455, %v436, 0.0
    %v464 = vrot.slane %v456, 4
    %v465 = vrot.slane %v457, 4
    %v466 = vrot.slane %v458, 4
    %v467 = vrot.slane %v459, 4
    %472 = vst [vmem:[#allocation2 + $0x60] sm:$0xf0] %v464
    %473 = vst [vmem:[#allocation2 + $0x68] sm:$0xf0] %v465
    %474 = vst [vmem:[#allocation2 + $0x70] sm:$0xf0] %v466
    %475 = vst [vmem:[#allocation2 + $0x78] sm:$0xf0] %v467
    %476 = vrot.lane.b32.xlu0 %v42, 15
    %v477 = vpop.permute.xlu0 %476
    %478 = vrot.lane.b32.xlu0 %v64, 15
    %v479 = vpop.permute.xlu0 %478
    %480 = vrot.lane.b32.xlu0 %v43, 15
    %v481 = vpop.permute.xlu0 %480
    %482 = vrot.lane.b32.xlu0 %v65, 15
    %v483 = vpop.permute.xlu0 %482
    %vm484 = vcmp.lt.s32.totalorder %v46, 15
    %v485 = vsel %vm484, %v481, %v483
    %v486 = vsel %vm484, %v479, %v481
    %v487 = vsel %vm484, %v477, %v479
    %v488 = vsel %vm484, %v483, %v477
    %vm489 = vmand %vm350, %vm240
    %vm490 = vmand %vm351, %vm241
    %vm491 = vmand %vm352, %vm242
    %vm492 = vmand %vm353, %vm243
    %vm493 = vmand %vm489, %vm248
    %vm494 = vmand %vm490, %vm249
    %vm495 = vmand %vm491, %vm250
    %vm496 = vmand %vm492, %vm251
    %v497 = vsel %vm493, 1, 0
    %v498 = vsel %vm494, 1, 0
    %v499 = vsel %vm495, 1, 0
    %v500 = vsel %vm496, 1, 0
    %vm501 = vcmp.eq.s32.totalorder %v497, 1
    %vm502 = vcmp.eq.s32.totalorder %v498, 1
    %vm503 = vcmp.eq.s32.totalorder %v499, 1
    %vm504 = vcmp.eq.s32.totalorder %v500, 1
    %v505 = vsel %vm501, %v488, 0.0
    %v506 = vsel %vm502, %v487, 0.0
    %v507 = vsel %vm503, %v486, 0.0
    %v508 = vsel %vm504, %v485, 0.0
    %509 = vst [vmem:[#allocation2 + $0x80] sm:$0xf] %v505
    %510 = vst [vmem:[#allocation2 + $0x88] sm:$0xf] %v506
    %511 = vst [vmem:[#allocation2 + $0x90] sm:$0xf] %v507
    %512 = vst [vmem:[#allocation2 + $0x98] sm:$0xf] %v508
    %513 = vrot.lane.b32.xlu0 %v42, 14
    %v514 = vpop.permute.xlu0 %513
    %515 = vrot.lane.b32.xlu0 %v64, 14
    %v516 = vpop.permute.xlu0 %515
    %517 = vrot.lane.b32.xlu0 %v43, 14
    %v518 = vpop.permute.xlu0 %517
    %519 = vrot.lane.b32.xlu0 %v65, 14
    %v520 = vpop.permute.xlu0 %519
    %vm521 = vcmp.lt.s32.totalorder %v46, 14
    %v522 = vsel %vm521, %v518, %v520
    %v523 = vsel %vm521, %v516, %v518
    %v524 = vsel %vm521, %v514, %v516
    %v525 = vsel %vm521, %v520, %v514
    %vm526 = vmand %vm350, %vm297
    %vm527 = vmand %vm351, %vm298
    %vm528 = vmand %vm352, %vm299
    %vm529 = vmand %vm353, %vm300
    %vm530 = vmand %vm526, %vm305
    %vm531 = vmand %vm527, %vm306
    %vm532 = vmand %vm528, %vm307
    %vm533 = vmand %vm529, %vm308
    %v534 = vsel %vm530, 1, 0
    %v535 = vsel %vm531, 1, 0
    %v536 = vsel %vm532, 1, 0
    %v537 = vsel %vm533, 1, 0
    %vm538 = vcmp.eq.s32.totalorder %v534, 1
    %vm539 = vcmp.eq.s32.totalorder %v535, 1
    %vm540 = vcmp.eq.s32.totalorder %v536, 1
    %vm541 = vcmp.eq.s32.totalorder %v537, 1
    %v542 = vsel %vm538, %v525, 0.0
    %v543 = vsel %vm539, %v524, 0.0
    %v544 = vsel %vm540, %v523, 0.0
    %v545 = vsel %vm541, %v522, 0.0
    %v550 = vrot.slane %v542, 4
    %v551 = vrot.slane %v543, 4
    %v552 = vrot.slane %v544, 4
    %v553 = vrot.slane %v545, 4
    %558 = vst [vmem:[#allocation2 + $0x80] sm:$0xf0] %v550
    %559 = vst [vmem:[#allocation2 + $0x88] sm:$0xf0] %v551
    %560 = vst [vmem:[#allocation2 + $0x90] sm:$0xf0] %v552
    %561 = vst [vmem:[#allocation2 + $0x98] sm:$0xf0] %v553
    %562 = vrot.lane.b32.xlu0 %v42, 2
    %v563 = vpop.permute.xlu0 %562
    %564 = vrot.lane.b32.xlu0 %v64, 2
    %v565 = vpop.permute.xlu0 %564
    %566 = vrot.lane.b32.xlu0 %v43, 2
    %v567 = vpop.permute.xlu0 %566
    %568 = vrot.lane.b32.xlu0 %v65, 2
    %v569 = vpop.permute.xlu0 %568
    %vm570 = vcmp.lt.s32.totalorder %v46, 2
    %v571 = vsel %vm570, %v567, %v569
    %v572 = vsel %vm570, %v565, %v567
    %v573 = vsel %vm570, %v563, %v565
    %v574 = vsel %vm570, %v569, %v563
    %vm575 = vcmp.ge.s32.totalorder %v54, 0
    %vm576 = vcmp.ge.s32.totalorder %v55, 0
    %vm577 = vcmp.ge.s32.totalorder %v56, 0
    %vm578 = vcmp.ge.s32.totalorder %v57, 0
    %vm579 = vcmp.lt.s32.totalorder %v54, 16
    %vm580 = vcmp.lt.s32.totalorder %v55, 16
    %vm581 = vcmp.lt.s32.totalorder %v56, 16
    %vm582 = vcmp.lt.s32.totalorder %v57, 16
    %vm583 = vmand %vm575, %vm579
    %vm584 = vmand %vm576, %vm580
    %vm585 = vmand %vm577, %vm581
    %vm586 = vmand %vm578, %vm582
    %vm587 = vmand %vm583, %vm93
    %vm588 = vmand %vm584, %vm94
    %vm589 = vmand %vm585, %vm95
    %vm590 = vmand %vm586, %vm96
    %vm591 = vmand %vm587, %vm101
    %vm592 = vmand %vm588, %vm102
    %vm593 = vmand %vm589, %vm103
    %vm594 = vmand %vm590, %vm104
    %v595 = vsel %vm591, 1, 0
    %v596 = vsel %vm592, 1, 0
    %v597 = vsel %vm593, 1, 0
    %v598 = vsel %vm594, 1, 0
    %vm599 = vcmp.eq.s32.totalorder %v595, 1
    %vm600 = vcmp.eq.s32.totalorder %v596, 1
    %vm601 = vcmp.eq.s32.totalorder %v597, 1
    %vm602 = vcmp.eq.s32.totalorder %v598, 1
    %v603 = vsel %vm599, %v574, 0.0
    %v604 = vsel %vm600, %v573, 0.0
    %v605 = vsel %vm601, %v572, 0.0
    %v606 = vsel %vm602, %v571, 0.0
    %607 = vst [vmem:[#allocation2 + $0xa0] sm:$0xf] %v603
    %608 = vst [vmem:[#allocation2 + $0xa8] sm:$0xf] %v604
    %609 = vst [vmem:[#allocation2 + $0xb0] sm:$0xf] %v605
    %610 = vst [vmem:[#allocation2 + $0xb8] sm:$0xf] %v606
    %611 = vrot.lane.b32.xlu0 %v42, 1
    %v612 = vpop.permute.xlu0 %611
    %613 = vrot.lane.b32.xlu0 %v64, 1
    %v614 = vpop.permute.xlu0 %613
    %615 = vrot.lane.b32.xlu0 %v43, 1
    %v616 = vpop.permute.xlu0 %615
    %617 = vrot.lane.b32.xlu0 %v65, 1
    %v618 = vpop.permute.xlu0 %617
    %vm619 = vcmp.lt.s32.totalorder %v46, 1
    %v620 = vsel %vm619, %v616, %v618
    %v621 = vsel %vm619, %v614, %v616
    %v622 = vsel %vm619, %v612, %v614
    %v623 = vsel %vm619, %v618, %v612
    %vm624 = vmand %vm583, %vm138
    %vm625 = vmand %vm584, %vm139
    %vm626 = vmand %vm585, %vm140
    %vm627 = vmand %vm586, %vm141
    %vm628 = vmand %vm624, %vm146
    %vm629 = vmand %vm625, %vm147
    %vm630 = vmand %vm626, %vm148
    %vm631 = vmand %vm627, %vm149
    %v632 = vsel %vm628, 1, 0
    %v633 = vsel %vm629, 1, 0
    %v634 = vsel %vm630, 1, 0
    %v635 = vsel %vm631, 1, 0
    %vm636 = vcmp.eq.s32.totalorder %v632, 1
    %vm637 = vcmp.eq.s32.totalorder %v633, 1
    %vm638 = vcmp.eq.s32.totalorder %v634, 1
    %vm639 = vcmp.eq.s32.totalorder %v635, 1
    %v640 = vsel %vm636, %v623, 0.0
    %v641 = vsel %vm637, %v622, 0.0
    %v642 = vsel %vm638, %v621, 0.0
    %v643 = vsel %vm639, %v620, 0.0
    %v648 = vrot.slane %v640, 4
    %v649 = vrot.slane %v641, 4
    %v650 = vrot.slane %v642, 4
    %v651 = vrot.slane %v643, 4
    %656 = vst [vmem:[#allocation2 + $0xa0] sm:$0xf0] %v648
    %657 = vst [vmem:[#allocation2 + $0xa8] sm:$0xf0] %v649
    %658 = vst [vmem:[#allocation2 + $0xb0] sm:$0xf0] %v650
    %659 = vst [vmem:[#allocation2 + $0xb8] sm:$0xf0] %v651
    %vm660 = vmand %vm583, %vm195
    %vm661 = vmand %vm584, %vm196
    %vm662 = vmand %vm585, %vm197
    %vm663 = vmand %vm586, %vm198
    %vm664 = vmand %vm660, %vm203
    %vm665 = vmand %vm661, %vm204
    %vm666 = vmand %vm662, %vm205
    %vm667 = vmand %vm663, %vm206
    %v668 = vsel %vm664, 1, 0
    %v669 = vsel %vm665, 1, 0
    %v670 = vsel %vm666, 1, 0
    %v671 = vsel %vm667, 1, 0
    %vm672 = vcmp.eq.s32.totalorder %v668, 1
    %vm673 = vcmp.eq.s32.totalorder %v669, 1
    %vm674 = vcmp.eq.s32.totalorder %v670, 1
    %vm675 = vcmp.eq.s32.totalorder %v671, 1
    %v676 = vsel %vm672, %v42, 0.0
    %v677 = vsel %vm673, %v64, 0.0
    %v678 = vsel %vm674, %v43, 0.0
    %v679 = vsel %vm675, %v65, 0.0
    %680 = vst [vmem:[#allocation2 + $0xc0] sm:$0xf] %v676
    %681 = vst [vmem:[#allocation2 + $0xc8] sm:$0xf] %v677
    %682 = vst [vmem:[#allocation2 + $0xd0] sm:$0xf] %v678
    %683 = vst [vmem:[#allocation2 + $0xd8] sm:$0xf] %v679
    %684 = vrot.lane.b32.xlu0 %v42, 127
    %v685 = vpop.permute.xlu0 %684
    %686 = vrot.lane.b32.xlu0 %v64, 127
    %v687 = vpop.permute.xlu0 %686
    %688 = vrot.lane.b32.xlu0 %v43, 127
    %v689 = vpop.permute.xlu0 %688
    %690 = vrot.lane.b32.xlu0 %v65, 127
    %v691 = vpop.permute.xlu0 %690
    %vm692 = vcmp.lt.s32.totalorder %v46, 127
    %v693 = vsel %vm692, %v689, %v691
    %v694 = vsel %vm692, %v687, %v689
    %v695 = vsel %vm692, %v685, %v687
    %v696 = vsel %vm692, %v691, %v685
    %vm697 = vmand %vm583, %vm240
    %vm698 = vmand %vm584, %vm241
    %vm699 = vmand %vm585, %vm242
    %vm700 = vmand %vm586, %vm243
    %vm701 = vmand %vm697, %vm248
    %vm702 = vmand %vm698, %vm249
    %vm703 = vmand %vm699, %vm250
    %vm704 = vmand %vm700, %vm251
    %v705 = vsel %vm701, 1, 0
    %v706 = vsel %vm702, 1, 0
    %v707 = vsel %vm703, 1, 0
    %v708 = vsel %vm704, 1, 0
    %vm709 = vcmp.eq.s32.totalorder %v705, 1
    %vm710 = vcmp.eq.s32.totalorder %v706, 1
    %vm711 = vcmp.eq.s32.totalorder %v707, 1
    %vm712 = vcmp.eq.s32.totalorder %v708, 1
    %v713 = vsel %vm709, %v695, 0.0
    %v714 = vsel %vm710, %v694, 0.0
    %v715 = vsel %vm711, %v693, 0.0
    %v716 = vsel %vm712, %v696, 0.0
    %v721 = vrot.slane %v713, 4
    %v722 = vrot.slane %v714, 4
    %v723 = vrot.slane %v715, 4
    %v724 = vrot.slane %v716, 4
    %729 = vst [vmem:[#allocation2 + $0xc0] sm:$0xf0] %v721
    %730 = vst [vmem:[#allocation2 + $0xc8] sm:$0xf0] %v722
    %731 = vst [vmem:[#allocation2 + $0xd0] sm:$0xf0] %v723
    %732 = vst [vmem:[#allocation2 + $0xd8] sm:$0xf0] %v724
    %733 = vrot.lane.b32.xlu0 %v42, 126
    %v734 = vpop.permute.xlu0 %733
    %735 = vrot.lane.b32.xlu0 %v64, 126
    %v736 = vpop.permute.xlu0 %735
    %737 = vrot.lane.b32.xlu0 %v43, 126
    %v738 = vpop.permute.xlu0 %737
    %739 = vrot.lane.b32.xlu0 %v65, 126
    %v740 = vpop.permute.xlu0 %739
    %vm741 = vcmp.lt.s32.totalorder %v46, 126
    %v742 = vsel %vm741, %v738, %v740
    %v743 = vsel %vm741, %v736, %v738
    %v744 = vsel %vm741, %v734, %v736
    %v745 = vsel %vm741, %v740, %v734
    %vm746 = vmand %vm583, %vm297
    %vm747 = vmand %vm584, %vm298
    %vm748 = vmand %vm585, %vm299
    %vm749 = vmand %vm586, %vm300
    %vm750 = vmand %vm746, %vm305
    %vm751 = vmand %vm747, %vm306
    %vm752 = vmand %vm748, %vm307
    %vm753 = vmand %vm749, %vm308
    %v754 = vsel %vm750, 1, 0
    %v755 = vsel %vm751, 1, 0
    %v756 = vsel %vm752, 1, 0
    %v757 = vsel %vm753, 1, 0
    %vm758 = vcmp.eq.s32.totalorder %v754, 1
    %vm759 = vcmp.eq.s32.totalorder %v755, 1
    %vm760 = vcmp.eq.s32.totalorder %v756, 1
    %vm761 = vcmp.eq.s32.totalorder %v757, 1
    %v762 = vsel %vm758, %v744, 0.0
    %v763 = vsel %vm759, %v743, 0.0
    %v764 = vsel %vm760, %v742, 0.0
    %v765 = vsel %vm761, %v745, 0.0
    %766 = vst [vmem:[#allocation2 + $0xe0] sm:$0xf] %v762
    %767 = vst [vmem:[#allocation2 + $0xe8] sm:$0xf] %v763
    %768 = vst [vmem:[#allocation2 + $0xf0] sm:$0xf] %v764
    %769 = vst [vmem:[#allocation2 + $0xf8] sm:$0xf] %v765
    %770 = vrot.lane.b32.xlu0 %v42, 114
    %v771 = vpop.permute.xlu0 %770
    %772 = vrot.lane.b32.xlu0 %v64, 114
    %v773 = vpop.permute.xlu0 %772
    %774 = vrot.lane.b32.xlu0 %v43, 114
    %v775 = vpop.permute.xlu0 %774
    %776 = vrot.lane.b32.xlu0 %v65, 114
    %v777 = vpop.permute.xlu0 %776
    %vm778 = vcmp.lt.s32.totalorder %v46, 114
    %v779 = vsel %vm778, %v775, %v777
    %v780 = vsel %vm778, %v773, %v775
    %v781 = vsel %vm778, %v771, %v773
    %v782 = vsel %vm778, %v777, %v771
    %vm783 = vcmp.ge.s32.totalorder %v54, 4294967295
    %vm784 = vcmp.ge.s32.totalorder %v55, 4294967295
    %vm785 = vcmp.ge.s32.totalorder %v56, 4294967295
    %vm786 = vcmp.ge.s32.totalorder %v57, 4294967295
    %vm787 = vcmp.lt.s32.totalorder %v54, 15
    %vm788 = vcmp.lt.s32.totalorder %v55, 15
    %vm789 = vcmp.lt.s32.totalorder %v56, 15
    %vm790 = vcmp.lt.s32.totalorder %v57, 15
    %vm791 = vmand %vm783, %vm787
    %vm792 = vmand %vm784, %vm788
    %vm793 = vmand %vm785, %vm789
    %vm794 = vmand %vm786, %vm790
    %vm795 = vmand %vm791, %vm93
    %vm796 = vmand %vm792, %vm94
    %vm797 = vmand %vm793, %vm95
    %vm798 = vmand %vm794, %vm96
    %vm799 = vmand %vm795, %vm101
    %vm800 = vmand %vm796, %vm102
    %vm801 = vmand %vm797, %vm103
    %vm802 = vmand %vm798, %vm104
    %v803 = vsel %vm799, 1, 0
    %v804 = vsel %vm800, 1, 0
    %v805 = vsel %vm801, 1, 0
    %v806 = vsel %vm802, 1, 0
    %vm807 = vcmp.eq.s32.totalorder %v803, 1
    %vm808 = vcmp.eq.s32.totalorder %v804, 1
    %vm809 = vcmp.eq.s32.totalorder %v805, 1
    %vm810 = vcmp.eq.s32.totalorder %v806, 1
    %v811 = vsel %vm807, %v781, 0.0
    %v812 = vsel %vm808, %v780, 0.0
    %v813 = vsel %vm809, %v779, 0.0
    %v814 = vsel %vm810, %v782, 0.0
    %v819 = vrot.slane %v811, 4
    %v820 = vrot.slane %v812, 4
    %v821 = vrot.slane %v813, 4
    %v822 = vrot.slane %v814, 4
    %827 = vst [vmem:[#allocation2 + $0xe0] sm:$0xf0] %v819
    %828 = vst [vmem:[#allocation2 + $0xe8] sm:$0xf0] %v820
    %829 = vst [vmem:[#allocation2 + $0xf0] sm:$0xf0] %v821
    %830 = vst [vmem:[#allocation2 + $0xf8] sm:$0xf0] %v822
    %831 = vrot.lane.b32.xlu0 %v42, 113
    %v832 = vpop.permute.xlu0 %831
    %833 = vrot.lane.b32.xlu0 %v64, 113
    %v834 = vpop.permute.xlu0 %833
    %835 = vrot.lane.b32.xlu0 %v43, 113
    %v836 = vpop.permute.xlu0 %835
    %837 = vrot.lane.b32.xlu0 %v65, 113
    %v838 = vpop.permute.xlu0 %837
    %vm839 = vcmp.lt.s32.totalorder %v46, 113
    %v840 = vsel %vm839, %v836, %v838
    %v841 = vsel %vm839, %v834, %v836
    %v842 = vsel %vm839, %v832, %v834
    %v843 = vsel %vm839, %v838, %v832
    %vm844 = vmand %vm791, %vm138
    %vm845 = vmand %vm792, %vm139
    %vm846 = vmand %vm793, %vm140
    %vm847 = vmand %vm794, %vm141
    %vm848 = vmand %vm844, %vm146
    %vm849 = vmand %vm845, %vm147
    %vm850 = vmand %vm846, %vm148
    %vm851 = vmand %vm847, %vm149
    %v852 = vsel %vm848, 1, 0
    %v853 = vsel %vm849, 1, 0
    %v854 = vsel %vm850, 1, 0
    %v855 = vsel %vm851, 1, 0
    %vm856 = vcmp.eq.s32.totalorder %v852, 1
    %vm857 = vcmp.eq.s32.totalorder %v853, 1
    %vm858 = vcmp.eq.s32.totalorder %v854, 1
    %vm859 = vcmp.eq.s32.totalorder %v855, 1
    %v860 = vsel %vm856, %v842, 0.0
    %v861 = vsel %vm857, %v841, 0.0
    %v862 = vsel %vm858, %v840, 0.0
    %v863 = vsel %vm859, %v843, 0.0
    %864 = vst [vmem:[#allocation2 + $0x100] sm:$0xf] %v860
    %865 = vst [vmem:[#allocation2 + $0x108] sm:$0xf] %v861
    %866 = vst [vmem:[#allocation2 + $0x110] sm:$0xf] %v862
    %867 = vst [vmem:[#allocation2 + $0x118] sm:$0xf] %v863
    %868 = vrot.lane.b32.xlu0 %v42, 112
    %v869 = vpop.permute.xlu0 %868
    %870 = vrot.lane.b32.xlu0 %v64, 112
    %v871 = vpop.permute.xlu0 %870
    %872 = vrot.lane.b32.xlu0 %v43, 112
    %v873 = vpop.permute.xlu0 %872
    %874 = vrot.lane.b32.xlu0 %v65, 112
    %v875 = vpop.permute.xlu0 %874
    %vm876 = vcmp.lt.s32.totalorder %v46, 112
    %v877 = vsel %vm876, %v873, %v875
    %v878 = vsel %vm876, %v871, %v873
    %v879 = vsel %vm876, %v869, %v871
    %v880 = vsel %vm876, %v875, %v869
    %vm881 = vmand %vm791, %vm195
    %vm882 = vmand %vm792, %vm196
    %vm883 = vmand %vm793, %vm197
    %vm884 = vmand %vm794, %vm198
    %vm885 = vmand %vm881, %vm203
    %vm886 = vmand %vm882, %vm204
    %vm887 = vmand %vm883, %vm205
    %vm888 = vmand %vm884, %vm206
    %v889 = vsel %vm885, 1, 0
    %v890 = vsel %vm886, 1, 0
    %v891 = vsel %vm887, 1, 0
    %v892 = vsel %vm888, 1, 0
    %vm893 = vcmp.eq.s32.totalorder %v889, 1
    %vm894 = vcmp.eq.s32.totalorder %v890, 1
    %vm895 = vcmp.eq.s32.totalorder %v891, 1
    %vm896 = vcmp.eq.s32.totalorder %v892, 1
    %v897 = vsel %vm893, %v879, 0.0
    %v898 = vsel %vm894, %v878, 0.0
    %v899 = vsel %vm895, %v877, 0.0
    %v900 = vsel %vm896, %v880, 0.0
    %v905 = vrot.slane %v897, 4
    %v906 = vrot.slane %v898, 4
    %v907 = vrot.slane %v899, 4
    %v908 = vrot.slane %v900, 4
    %913 = vst [vmem:[#allocation2 + $0x100] sm:$0xf0] %v905
    %914 = vst [vmem:[#allocation2 + $0x108] sm:$0xf0] %v906
    %915 = vst [vmem:[#allocation2 + $0x110] sm:$0xf0] %v907
    %916 = vst [vmem:[#allocation2 + $0x118] sm:$0xf0] %v908
    %917 = vrot.lane.b32.xlu0 %v42, 111
    %v918 = vpop.permute.xlu0 %917
    %919 = vrot.lane.b32.xlu0 %v64, 111
    %v920 = vpop.permute.xlu0 %919
    %921 = vrot.lane.b32.xlu0 %v43, 111
    %v922 = vpop.permute.xlu0 %921
    %923 = vrot.lane.b32.xlu0 %v65, 111
    %v924 = vpop.permute.xlu0 %923
    %vm925 = vcmp.lt.s32.totalorder %v46, 111
    %v926 = vsel %vm925, %v922, %v924
    %v927 = vsel %vm925, %v920, %v922
    %v928 = vsel %vm925, %v918, %v920
    %v929 = vsel %vm925, %v924, %v918
    %vm930 = vmand %vm791, %vm240
    %vm931 = vmand %vm792, %vm241
    %vm932 = vmand %vm793, %vm242
    %vm933 = vmand %vm794, %vm243
    %vm934 = vmand %vm930, %vm248
    %vm935 = vmand %vm931, %vm249
    %vm936 = vmand %vm932, %vm250
    %vm937 = vmand %vm933, %vm251
    %v938 = vsel %vm934, 1, 0
    %v939 = vsel %vm935, 1, 0
    %v940 = vsel %vm936, 1, 0
    %v941 = vsel %vm937, 1, 0
    %vm942 = vcmp.eq.s32.totalorder %v938, 1
    %vm943 = vcmp.eq.s32.totalorder %v939, 1
    %vm944 = vcmp.eq.s32.totalorder %v940, 1
    %vm945 = vcmp.eq.s32.totalorder %v941, 1
    %v946 = vsel %vm942, %v928, 0.0
    %v947 = vsel %vm943, %v927, 0.0
    %v948 = vsel %vm944, %v926, 0.0
    %v949 = vsel %vm945, %v929, 0.0
    %950 = vst [vmem:[#allocation2 + $0x120] sm:$0xf] %v946
    %951 = vst [vmem:[#allocation2 + $0x128] sm:$0xf] %v947
    %952 = vst [vmem:[#allocation2 + $0x130] sm:$0xf] %v948
    %953 = vst [vmem:[#allocation2 + $0x138] sm:$0xf] %v949
    %954 = vrot.lane.b32.xlu0 %v42, 110
    %v955 = vpop.permute.xlu0 %954
    %956 = vrot.lane.b32.xlu0 %v64, 110
    %v957 = vpop.permute.xlu0 %956
    %958 = vrot.lane.b32.xlu0 %v43, 110
    %v959 = vpop.permute.xlu0 %958
    %960 = vrot.lane.b32.xlu0 %v65, 110
    %v961 = vpop.permute.xlu0 %960
    %vm962 = vcmp.lt.s32.totalorder %v46, 110
    %v963 = vsel %vm962, %v959, %v961
    %v964 = vsel %vm962, %v957, %v959
    %v965 = vsel %vm962, %v955, %v957
    %v966 = vsel %vm962, %v961, %v955
    %vm967 = vmand %vm791, %vm297
    %vm968 = vmand %vm792, %vm298
    %vm969 = vmand %vm793, %vm299
    %vm970 = vmand %vm794, %vm300
    %vm971 = vmand %vm967, %vm305
    %vm972 = vmand %vm968, %vm306
    %vm973 = vmand %vm969, %vm307
    %vm974 = vmand %vm970, %vm308
    %v975 = vsel %vm971, 1, 0
    %v976 = vsel %vm972, 1, 0
    %v977 = vsel %vm973, 1, 0
    %v978 = vsel %vm974, 1, 0
    %vm979 = vcmp.eq.s32.totalorder %v975, 1
    %vm980 = vcmp.eq.s32.totalorder %v976, 1
    %vm981 = vcmp.eq.s32.totalorder %v977, 1
    %vm982 = vcmp.eq.s32.totalorder %v978, 1
    %v983 = vsel %vm979, %v965, 0.0
    %v984 = vsel %vm980, %v964, 0.0
    %v985 = vsel %vm981, %v963, 0.0
    %v986 = vsel %vm982, %v966, 0.0
    %v991 = vrot.slane %v983, 4
    %v992 = vrot.slane %v984, 4
    %v993 = vrot.slane %v985, 4
    %v994 = vrot.slane %v986, 4
    %999 = vst [vmem:[#allocation2 + $0x120] sm:$0xf0] %v991
    %1000 = vst [vmem:[#allocation2 + $0x128] sm:$0xf0] %v992
    %1001 = vst [vmem:[#allocation2 + $0x130] sm:$0xf0] %v993
    %1002 = vst [vmem:[#allocation2 + $0x138] sm:$0xf0] %v994
    %1003 = vrot.lane.b32.xlu0 %v42, 98
    %v1004 = vpop.permute.xlu0 %1003
    %1005 = vrot.lane.b32.xlu0 %v64, 98
    %v1006 = vpop.permute.xlu0 %1005
    %1007 = vrot.lane.b32.xlu0 %v43, 98
    %v1008 = vpop.permute.xlu0 %1007
    %1009 = vrot.lane.b32.xlu0 %v65, 98
    %v1010 = vpop.permute.xlu0 %1009
    %vm1011 = vcmp.lt.s32.totalorder %v46, 98
    %v1012 = vsel %vm1011, %v1008, %v1010
    %v1013 = vsel %vm1011, %v1006, %v1008
    %v1014 = vsel %vm1011, %v1004, %v1006
    %v1015 = vsel %vm1011, %v1010, %v1004
    %vm1016 = vcmp.ge.s32.totalorder %v54, 4294967294
    %vm1017 = vcmp.ge.s32.totalorder %v55, 4294967294
    %vm1018 = vcmp.ge.s32.totalorder %v56, 4294967294
    %vm1019 = vcmp.ge.s32.totalorder %v57, 4294967294
    %vm1020 = vcmp.lt.s32.totalorder %v54, 14
    %vm1021 = vcmp.lt.s32.totalorder %v55, 14
    %vm1022 = vcmp.lt.s32.totalorder %v56, 14
    %vm1023 = vcmp.lt.s32.totalorder %v57, 14
    %vm1024 = vmand %vm1016, %vm1020
    %vm1025 = vmand %vm1017, %vm1021
    %vm1026 = vmand %vm1018, %vm1022
    %vm1027 = vmand %vm1019, %vm1023
    %vm1028 = vmand %vm1024, %vm93
    %vm1029 = vmand %vm1025, %vm94
    %vm1030 = vmand %vm1026, %vm95
    %vm1031 = vmand %vm1027, %vm96
    %vm1032 = vmand %vm1028, %vm101
    %vm1033 = vmand %vm1029, %vm102
    %vm1034 = vmand %vm1030, %vm103
    %vm1035 = vmand %vm1031, %vm104
    %v1036 = vsel %vm1032, 1, 0
    %v1037 = vsel %vm1033, 1, 0
    %v1038 = vsel %vm1034, 1, 0
    %v1039 = vsel %vm1035, 1, 0
    %vm1040 = vcmp.eq.s32.totalorder %v1036, 1
    %vm1041 = vcmp.eq.s32.totalorder %v1037, 1
    %vm1042 = vcmp.eq.s32.totalorder %v1038, 1
    %vm1043 = vcmp.eq.s32.totalorder %v1039, 1
    %v1044 = vsel %vm1040, %v1014, 0.0
    %v1045 = vsel %vm1041, %v1013, 0.0
    %v1046 = vsel %vm1042, %v1012, 0.0
    %v1047 = vsel %vm1043, %v1015, 0.0
    %1048 = vst [vmem:[#allocation2 + $0x140] sm:$0xf] %v1044
    %1049 = vst [vmem:[#allocation2 + $0x148] sm:$0xf] %v1045
    %1050 = vst [vmem:[#allocation2 + $0x150] sm:$0xf] %v1046
    %1051 = vst [vmem:[#allocation2 + $0x158] sm:$0xf] %v1047
    %1052 = vrot.lane.b32.xlu0 %v42, 97
    %v1053 = vpop.permute.xlu0 %1052
    %1054 = vrot.lane.b32.xlu0 %v64, 97
    %v1055 = vpop.permute.xlu0 %1054
    %1056 = vrot.lane.b32.xlu0 %v43, 97
    %v1057 = vpop.permute.xlu0 %1056
    %1058 = vrot.lane.b32.xlu0 %v65, 97
    %v1059 = vpop.permute.xlu0 %1058
    %vm1060 = vcmp.lt.s32.totalorder %v46, 97
    %v1061 = vsel %vm1060, %v1057, %v1059
    %v1062 = vsel %vm1060, %v1055, %v1057
    %v1063 = vsel %vm1060, %v1053, %v1055
    %v1064 = vsel %vm1060, %v1059, %v1053
    %vm1065 = vmand %vm1024, %vm138
    %vm1066 = vmand %vm1025, %vm139
    %vm1067 = vmand %vm1026, %vm140
    %vm1068 = vmand %vm1027, %vm141
    %vm1069 = vmand %vm1065, %vm146
    %vm1070 = vmand %vm1066, %vm147
    %vm1071 = vmand %vm1067, %vm148
    %vm1072 = vmand %vm1068, %vm149
    %v1073 = vsel %vm1069, 1, 0
    %v1074 = vsel %vm1070, 1, 0
    %v1075 = vsel %vm1071, 1, 0
    %v1076 = vsel %vm1072, 1, 0
    %vm1077 = vcmp.eq.s32.totalorder %v1073, 1
    %vm1078 = vcmp.eq.s32.totalorder %v1074, 1
    %vm1079 = vcmp.eq.s32.totalorder %v1075, 1
    %vm1080 = vcmp.eq.s32.totalorder %v1076, 1
    %v1081 = vsel %vm1077, %v1063, 0.0
    %v1082 = vsel %vm1078, %v1062, 0.0
    %v1083 = vsel %vm1079, %v1061, 0.0
    %v1084 = vsel %vm1080, %v1064, 0.0
    %v1089 = vrot.slane %v1081, 4
    %v1090 = vrot.slane %v1082, 4
    %v1091 = vrot.slane %v1083, 4
    %v1092 = vrot.slane %v1084, 4
    %1097 = vst [vmem:[#allocation2 + $0x140] sm:$0xf0] %v1089
    %1098 = vst [vmem:[#allocation2 + $0x148] sm:$0xf0] %v1090
    %1099 = vst [vmem:[#allocation2 + $0x150] sm:$0xf0] %v1091
    %1100 = vst [vmem:[#allocation2 + $0x158] sm:$0xf0] %v1092
    %1101 = vrot.lane.b32.xlu0 %v42, 96
    %v1102 = vpop.permute.xlu0 %1101
    %1103 = vrot.lane.b32.xlu0 %v64, 96
    %v1104 = vpop.permute.xlu0 %1103
    %1105 = vrot.lane.b32.xlu0 %v43, 96
    %v1106 = vpop.permute.xlu0 %1105
    %1107 = vrot.lane.b32.xlu0 %v65, 96
    %v1108 = vpop.permute.xlu0 %1107
    %vm1109 = vcmp.lt.s32.totalorder %v46, 96
    %v1110 = vsel %vm1109, %v1106, %v1108
    %v1111 = vsel %vm1109, %v1104, %v1106
    %v1112 = vsel %vm1109, %v1102, %v1104
    %v1113 = vsel %vm1109, %v1108, %v1102
    %vm1114 = vmand %vm1024, %vm195
    %vm1115 = vmand %vm1025, %vm196
    %vm1116 = vmand %vm1026, %vm197
    %vm1117 = vmand %vm1027, %vm198
    %vm1118 = vmand %vm1114, %vm203
    %vm1119 = vmand %vm1115, %vm204
    %vm1120 = vmand %vm1116, %vm205
    %vm1121 = vmand %vm1117, %vm206
    %v1122 = vsel %vm1118, 1, 0
    %v1123 = vsel %vm1119, 1, 0
    %v1124 = vsel %vm1120, 1, 0
    %v1125 = vsel %vm1121, 1, 0
    %vm1126 = vcmp.eq.s32.totalorder %v1122, 1
    %vm1127 = vcmp.eq.s32.totalorder %v1123, 1
    %vm1128 = vcmp.eq.s32.totalorder %v1124, 1
    %vm1129 = vcmp.eq.s32.totalorder %v1125, 1
    %v1130 = vsel %vm1126, %v1112, 0.0
    %v1131 = vsel %vm1127, %v1111, 0.0
    %v1132 = vsel %vm1128, %v1110, 0.0
    %v1133 = vsel %vm1129, %v1113, 0.0
    %1134 = vst [vmem:[#allocation2 + $0x160] sm:$0xf] %v1130
    %1135 = vst [vmem:[#allocation2 + $0x168] sm:$0xf] %v1131
    %1136 = vst [vmem:[#allocation2 + $0x170] sm:$0xf] %v1132
    %1137 = vst [vmem:[#allocation2 + $0x178] sm:$0xf] %v1133
    %1138 = vrot.lane.b32.xlu0 %v42, 95
    %v1139 = vpop.permute.xlu0 %1138
    %1140 = vrot.lane.b32.xlu0 %v64, 95
    %v1141 = vpop.permute.xlu0 %1140
    %1142 = vrot.lane.b32.xlu0 %v43, 95
    %v1143 = vpop.permute.xlu0 %1142
    %1144 = vrot.lane.b32.xlu0 %v65, 95
    %v1145 = vpop.permute.xlu0 %1144
    %vm1146 = vcmp.lt.s32.totalorder %v46, 95
    %v1147 = vsel %vm1146, %v1143, %v1145
    %v1148 = vsel %vm1146, %v1141, %v1143
    %v1149 = vsel %vm1146, %v1139, %v1141
    %v1150 = vsel %vm1146, %v1145, %v1139
    %vm1151 = vmand %vm1024, %vm240
    %vm1152 = vmand %vm1025, %vm241
    %vm1153 = vmand %vm1026, %vm242
    %vm1154 = vmand %vm1027, %vm243
    %vm1155 = vmand %vm1151, %vm248
    %vm1156 = vmand %vm1152, %vm249
    %vm1157 = vmand %vm1153, %vm250
    %vm1158 = vmand %vm1154, %vm251
    %v1159 = vsel %vm1155, 1, 0
    %v1160 = vsel %vm1156, 1, 0
    %v1161 = vsel %vm1157, 1, 0
    %v1162 = vsel %vm1158, 1, 0
    %vm1163 = vcmp.eq.s32.totalorder %v1159, 1
    %vm1164 = vcmp.eq.s32.totalorder %v1160, 1
    %vm1165 = vcmp.eq.s32.totalorder %v1161, 1
    %vm1166 = vcmp.eq.s32.totalorder %v1162, 1
    %v1167 = vsel %vm1163, %v1149, 0.0
    %v1168 = vsel %vm1164, %v1148, 0.0
    %v1169 = vsel %vm1165, %v1147, 0.0
    %v1170 = vsel %vm1166, %v1150, 0.0
    %v1175 = vrot.slane %v1167, 4
    %v1176 = vrot.slane %v1168, 4
    %v1177 = vrot.slane %v1169, 4
    %v1178 = vrot.slane %v1170, 4
    %1183 = vst [vmem:[#allocation2 + $0x160] sm:$0xf0] %v1175
    %1184 = vst [vmem:[#allocation2 + $0x168] sm:$0xf0] %v1176
    %1185 = vst [vmem:[#allocation2 + $0x170] sm:$0xf0] %v1177
    %1186 = vst [vmem:[#allocation2 + $0x178] sm:$0xf0] %v1178
    %1187 = vrot.lane.b32.xlu0 %v42, 94
    %v1188 = vpop.permute.xlu0 %1187
    %1189 = vrot.lane.b32.xlu0 %v64, 94
    %v1190 = vpop.permute.xlu0 %1189
    %1191 = vrot.lane.b32.xlu0 %v43, 94
    %v1192 = vpop.permute.xlu0 %1191
    %1193 = vrot.lane.b32.xlu0 %v65, 94
    %v1194 = vpop.permute.xlu0 %1193
    %vm1195 = vcmp.lt.s32.totalorder %v46, 94
    %v1196 = vsel %vm1195, %v1192, %v1194
    %v1197 = vsel %vm1195, %v1190, %v1192
    %v1198 = vsel %vm1195, %v1188, %v1190
    %v1199 = vsel %vm1195, %v1194, %v1188
    %vm1200 = vmand %vm1024, %vm297
    %vm1201 = vmand %vm1025, %vm298
    %vm1202 = vmand %vm1026, %vm299
    %vm1203 = vmand %vm1027, %vm300
    %vm1204 = vmand %vm1200, %vm305
    %vm1205 = vmand %vm1201, %vm306
    %vm1206 = vmand %vm1202, %vm307
    %vm1207 = vmand %vm1203, %vm308
    %v1208 = vsel %vm1204, 1, 0
    %v1209 = vsel %vm1205, 1, 0
    %v1210 = vsel %vm1206, 1, 0
    %v1211 = vsel %vm1207, 1, 0
    %vm1212 = vcmp.eq.s32.totalorder %v1208, 1
    %vm1213 = vcmp.eq.s32.totalorder %v1209, 1
    %vm1214 = vcmp.eq.s32.totalorder %v1210, 1
    %vm1215 = vcmp.eq.s32.totalorder %v1211, 1
    %v1216 = vsel %vm1212, %v1198, 0.0
    %v1217 = vsel %vm1213, %v1197, 0.0
    %v1218 = vsel %vm1214, %v1196, 0.0
    %v1219 = vsel %vm1215, %v1199, 0.0
    %1220 = vst [vmem:[#allocation2 + $0x180] sm:$0xf] %v1216
    %1221 = vst [vmem:[#allocation2 + $0x188] sm:$0xf] %v1217
    %1222 = vst [vmem:[#allocation2 + $0x190] sm:$0xf] %v1218
    %1223 = vst [vmem:[#allocation2 + $0x198] sm:$0xf] %v1219
    %v1224 = vld [vmem:[#allocation6] sm:$0xf]
    %v1225 = vld [vmem:[#allocation2] sm:$0xff]
    %v1226 = vld [vmem:[#allocation2 + $0x8] sm:$0xff]
    %v1227 = vld [vmem:[#allocation2 + $0x10] sm:$0xff]
    %v1228 = vld [vmem:[#allocation2 + $0x18] sm:$0xff]
    %v1229 = vld [vmem:[#allocation2 + $0x20] sm:$0xff]
    %v1230 = vld [vmem:[#allocation2 + $0x28] sm:$0xff]
    %v1231 = vld [vmem:[#allocation2 + $0x30] sm:$0xff]
    %v1232 = vld [vmem:[#allocation2 + $0x38] sm:$0xff]
    %v1233 = vld [vmem:[#allocation2 + $0x40] sm:$0xff]
    %v1234 = vld [vmem:[#allocation2 + $0x48] sm:$0xff]
    %v1235 = vld [vmem:[#allocation2 + $0x50] sm:$0xff]
    %v1236 = vld [vmem:[#allocation2 + $0x58] sm:$0xff]
    %v1237 = vld [vmem:[#allocation2 + $0x60] sm:$0xff]
    %v1238 = vld [vmem:[#allocation2 + $0x68] sm:$0xff]
    %v1239 = vld [vmem:[#allocation2 + $0x70] sm:$0xff]
    %v1240 = vld [vmem:[#allocation2 + $0x78] sm:$0xff]
    %v1241 = vld [vmem:[#allocation2 + $0x80] sm:$0xff]
    %v1242 = vld [vmem:[#allocation2 + $0x88] sm:$0xff]
    %v1243 = vld [vmem:[#allocation2 + $0x90] sm:$0xff]
    %v1244 = vld [vmem:[#allocation2 + $0x98] sm:$0xff]
    %v1245 = vld [vmem:[#allocation2 + $0xa0] sm:$0xff]
    %v1246 = vld [vmem:[#allocation2 + $0xa8] sm:$0xff]
    %v1247 = vld [vmem:[#allocation2 + $0xb0] sm:$0xff]
    %v1248 = vld [vmem:[#allocation2 + $0xb8] sm:$0xff]
    %v1249 = vld [vmem:[#allocation2 + $0xc0] sm:$0xff]
    %v1250 = vld [vmem:[#allocation2 + $0xc8] sm:$0xff]
    %v1251 = vld [vmem:[#allocation2 + $0xd0] sm:$0xff]
    %v1252 = vld [vmem:[#allocation2 + $0xd8] sm:$0xff]
    %v1253 = vld [vmem:[#allocation2 + $0xe0] sm:$0xff]
    %v1254 = vld [vmem:[#allocation2 + $0xe8] sm:$0xff]
    %v1255 = vld [vmem:[#allocation2 + $0xf0] sm:$0xff]
    %v1256 = vld [vmem:[#allocation2 + $0xf8] sm:$0xff]
    %v1257 = vld [vmem:[#allocation2 + $0x100] sm:$0xff]
    %v1258 = vld [vmem:[#allocation2 + $0x108] sm:$0xff]
    %v1259 = vld [vmem:[#allocation2 + $0x110] sm:$0xff]
    %v1260 = vld [vmem:[#allocation2 + $0x118] sm:$0xff]
    %v1261 = vld [vmem:[#allocation2 + $0x120] sm:$0xff]
    %v1262 = vld [vmem:[#allocation2 + $0x128] sm:$0xff]
    %v1263 = vld [vmem:[#allocation2 + $0x130] sm:$0xff]
    %v1264 = vld [vmem:[#allocation2 + $0x138] sm:$0xff]
    %v1265 = vld [vmem:[#allocation2 + $0x140] sm:$0xff]
    %v1266 = vld [vmem:[#allocation2 + $0x148] sm:$0xff]
    %v1267 = vld [vmem:[#allocation2 + $0x150] sm:$0xff]
    %v1268 = vld [vmem:[#allocation2 + $0x158] sm:$0xff]
    %v1269 = vld [vmem:[#allocation2 + $0x160] sm:$0xff]
    %v1270 = vld [vmem:[#allocation2 + $0x168] sm:$0xff]
    %v1271 = vld [vmem:[#allocation2 + $0x170] sm:$0xff]
    %v1272 = vld [vmem:[#allocation2 + $0x178] sm:$0xff]
    %v1273 = vld [vmem:[#allocation2 + $0x180] sm:$0xf]
    %v1274 = vld [vmem:[#allocation2 + $0x188] sm:$0xf]
    %v1275 = vld [vmem:[#allocation2 + $0x190] sm:$0xf]
    %v1276 = vld [vmem:[#allocation2 + $0x198] sm:$0xf]
    %vm1277 = vcmask 818176
    %v1279 = vsel %vm1277, %v1224, 0
    %vm1281 = vcmask 1043456
    %v1283 = vsel %vm1281, %v1273, 0
    %v1286 = vsel %vm1281, %v1274, 0
    %v1289 = vsel %vm1281, %v1275, 0
    %v1292 = vsel %vm1281, %v1276, 0
    %1294 = vmatprep.subr.mxu0 %v1226
    %1295 = vmatpush1.msra.mxu0 %v1225
    %1296 = vmatprep.subr.mxu0 %v1230
    %1297 = vmatpush1.msra.mxu0 %v1229
    %1298 = vmatprep.subr.mxu0 %v1234
    %1299 = vmatpush1.msra.mxu0 %v1233
    %1300 = vmatprep.subr.mxu0 %v1238
    %1301 = vmatpush1.msra.mxu0 %v1237
    %1302 = vmatprep.subr.mxu0 %v1242
    %1303 = vmatpush1.msra.mxu0 %v1241
    %1304 = vmatprep.subr.mxu0 %v1246
    %1305 = vmatpush1.msra.mxu0 %v1245
    %1306 = vmatprep.subr.mxu0 %v1250
    %1307 = vmatpush1.msra.mxu0 %v1249
    %1308 = vmatprep.subr.mxu0 %v1254
    %1309 = vmatpush1.msra.mxu0 %v1253
    %1310 = vmatprep.subr.mxu0 %v1258
    %1311 = vmatpush1.msra.mxu0 %v1257
    %1312 = vmatprep.subr.mxu0 %v1262
    %1313 = vmatpush1.msra.mxu0 %v1261
    %1314 = vmatprep.subr.mxu0 %v1266
    %1315 = vmatpush1.msra.mxu0 %v1265
    %1316 = vmatprep.subr.mxu0 %v1270
    %1317 = vmatpush1.msra.mxu0 %v1269
    %1318 = vmatprep.subr.mxu0 %v1286
    %1319 = vmatpush1.msra.mxu0 %v1283
    %1320 = vmatprep.subr.mxu0 0.0
    %1321 = vmatpush1.msra.mxu0 0.0
    %1322 = vmatprep.subr.mxu0 0.0
    %1323 = vmatpush1.msra.mxu0 0.0
    %1324 = vmatprep.subr.mxu0 0.0
    %1325 = vmatpush1.msra.mxu0 0.0
    %1326 = vmatprep.subr.mxu0 0.0
    %1327 = vmatpush1.msra.mxu0 0.0
    %1328 = vmatprep.subr.mxu0 0.0
    %1329 = vmatpush1.msra.mxu0 0.0
    %1330 = vmatprep.subr.mxu0 0.0
    %1331 = vmatpush1.msra.mxu0 0.0
    %1332 = vmatprep.subr.mxu0 0.0
    %1333 = vmatpush1.msra.mxu0 0.0
    %1334 = vmatprep.subr.mxu0 0.0
    %1335 = vmatpush1.msra.mxu0 0.0
    %1336 = vmatprep.subr.mxu0 0.0
    %1337 = vmatpush1.msra.mxu0 0.0
    %1338 = vmatprep.subr.mxu0 0.0
    %1339 = vmatpush1.msra.mxu0 0.0
    %1340 = vmatprep.subr.mxu0 0.0
    %1341 = vmatpush1.msra.mxu0 0.0
    %1342 = vmatprep.subr.mxu0 0.0
    %1343 = vmatpush1.msra.mxu0 0.0
    %1344 = vmatprep.subr.mxu0 0.0
    %1345 = vmatpush1.msra.mxu0 0.0
    %1346 = vmatprep.subr.mxu0 0.0
    %1347 = vmatpush1.msra.mxu0 0.0
    %1348 = vmatprep.subr.mxu0 0.0
    %1349 = vmatpush1.msra.mxu0 0.0
    %1350 = vmatprep.subr.mxu0 0.0
    %1351 = vmatpush1.msra.mxu0 0.0
    %1352 = vmatprep.subr.mxu0 0.0
    %1353 = vmatpush1.msra.mxu0 0.0
    %1354 = vmatprep.subr.mxu0 0.0
    %1355 = vmatpush1.msra.mxu0 0.0
    %1356 = vmatprep.subr.mxu0 0.0
    %1357 = vmatpush1.msra.mxu0 0.0
    %1358 = vmatprep.mubr.f32.mxu0 0.0
    %1359 = vmatmul.mubr.f32.gmra.mrb[0].mxu0 %v1279
    %v1360 = vpop.f32.mrb[0].mxu0
    %v1361 = vadd.f32 0.0, %v1360
    %v1362 = vpop.f32.mrb[0].mxu0
    %v1363 = vadd.f32 0.0, %v1362
    %1364 = vdwg.mxu0
    %1365 = vmatprep.subr.mxu0 %v1228
    %1366 = vmatpush1.msra.mxu0 %v1227
    %1367 = vmatprep.subr.mxu0 %v1232
    %1368 = vmatpush1.msra.mxu0 %v1231
    %1369 = vmatprep.subr.mxu0 %v1236
    %1370 = vmatpush1.msra.mxu0 %v1235
    %1371 = vmatprep.subr.mxu0 %v1240
    %1372 = vmatpush1.msra.mxu0 %v1239
    %1373 = vmatprep.subr.mxu0 %v1244
    %1374 = vmatpush1.msra.mxu0 %v1243
    %1375 = vmatprep.subr.mxu0 %v1248
    %1376 = vmatpush1.msra.mxu0 %v1247
    %1377 = vmatprep.subr.mxu0 %v1252
    %1378 = vmatpush1.msra.mxu0 %v1251
    %1379 = vmatprep.subr.mxu0 %v1256
    %1380 = vmatpush1.msra.mxu0 %v1255
    %1381 = vmatprep.subr.mxu0 %v1260
    %1382 = vmatpush1.msra.mxu0 %v1259
    %1383 = vmatprep.subr.mxu0 %v1264
    %1384 = vmatpush1.msra.mxu0 %v1263
    %1385 = vmatprep.subr.mxu0 %v1268
    %1386 = vmatpush1.msra.mxu0 %v1267
    %1387 = vmatprep.subr.mxu0 %v1272
    %1388 = vmatpush1.msra.mxu0 %v1271
    %1389 = vmatprep.subr.mxu0 %v1292
    %1390 = vmatpush1.msra.mxu0 %v1289
    %1391 = vmatprep.subr.mxu0 0.0
    %1392 = vmatpush1.msra.mxu0 0.0
    %1393 = vmatprep.subr.mxu0 0.0
    %1394 = vmatpush1.msra.mxu0 0.0
    %1395 = vmatprep.subr.mxu0 0.0
    %1396 = vmatpush1.msra.mxu0 0.0
    %1397 = vmatprep.subr.mxu0 0.0
    %1398 = vmatpush1.msra.mxu0 0.0
    %1399 = vmatprep.subr.mxu0 0.0
    %1400 = vmatpush1.msra.mxu0 0.0
    %1401 = vmatprep.subr.mxu0 0.0
    %1402 = vmatpush1.msra.mxu0 0.0
    %1403 = vmatprep.subr.mxu0 0.0
    %1404 = vmatpush1.msra.mxu0 0.0
    %1405 = vmatprep.subr.mxu0 0.0
    %1406 = vmatpush1.msra.mxu0 0.0
    %1407 = vmatprep.subr.mxu0 0.0
    %1408 = vmatpush1.msra.mxu0 0.0
    %1409 = vmatprep.subr.mxu0 0.0
    %1410 = vmatpush1.msra.mxu0 0.0
    %1411 = vmatprep.subr.mxu0 0.0
    %1412 = vmatpush1.msra.mxu0 0.0
    %1413 = vmatprep.subr.mxu0 0.0
    %1414 = vmatpush1.msra.mxu0 0.0
    %1415 = vmatprep.subr.mxu0 0.0
    %1416 = vmatpush1.msra.mxu0 0.0
    %1417 = vmatprep.subr.mxu0 0.0
    %1418 = vmatpush1.msra.mxu0 0.0
    %1419 = vmatprep.subr.mxu0 0.0
    %1420 = vmatpush1.msra.mxu0 0.0
    %1421 = vmatprep.subr.mxu0 0.0
    %1422 = vmatpush1.msra.mxu0 0.0
    %1423 = vmatprep.subr.mxu0 0.0
    %1424 = vmatpush1.msra.mxu0 0.0
    %1425 = vmatprep.subr.mxu0 0.0
    %1426 = vmatpush1.msra.mxu0 0.0
    %1427 = vmatprep.subr.mxu0 0.0
    %1428 = vmatpush1.msra.mxu0 0.0
    %1429 = vmatprep.mubr.f32.mxu0 0.0
    %1430 = vmatmul.mubr.f32.gmra.mrb[0].mxu0 %v1279
    %v1431 = vpop.f32.mrb[0].mxu0
    %v1432 = vadd.f32 0.0, %v1431
    %v1433 = vpop.f32.mrb[0].mxu0
    %v1434 = vadd.f32 0.0, %v1433
    %1435 = vdwg.mxu0
    %v1436 = vsel %vm1281, %v1361, 0.0
    %v1437 = vsel %vm1281, %v1363, 0.0
    %v1438 = vadd.f32 %v1436, %v1437
    %v1439 = vsel %vm1281, %v1432, 0.0
    %v1440 = vadd.f32 %v1438, %v1439
    %v1441 = vsel %vm1281, %v1434, 0.0
    %v1442 = vadd.f32 %v1440, %v1441
    %1443 = vadd.xlane.f32.xlu0 %v1442
    %v1444 = vpop.xlane.xlu0 %1443
    %v1445 = vmul.f32 %v1361, %v1361
    %v1446 = vmul.f32 %v1363, %v1363
    %v1447 = vmul.f32 %v1432, %v1432
    %v1448 = vmul.f32 %v1434, %v1434
    %v1449 = vsel %vm1281, %v1445, 0.0
    %v1450 = vsel %vm1281, %v1446, 0.0
    %v1451 = vadd.f32 %v1449, %v1450
    %v1452 = vsel %vm1281, %v1447, 0.0
    %v1453 = vadd.f32 %v1451, %v1452
    %v1454 = vsel %vm1281, %v1448, 0.0
    %v1455 = vadd.f32 %v1453, %v1454
    %1456 = vadd.xlane.f32.xlu0 %v1455
    %v1457 = vpop.xlane.xlu0 %1456
    %v1458 = vmul.f32 %v1444, 0.001953125
    %v1459 = vmul.f32 %v1457, 0.001953125
    %v1460 = vmul.f32 %v1458, %v1458
    %v1461 = vsub.f32 %v1459, %v1460
    %v1462 = vadd.f32 %v1461, 1e-05
    %v1463 = vrsqrt.pop %v1462
    %v1464 = vmul.f32 %v44, %v1463
    %v1465 = vmul.f32 %v1458, %v1464
    %1467 = vrot.lane.b32.xlu0 %v1465, 1
    %v1468 = vpop.permute.xlu0 %1467
    %v1470 = vsub.f32 %v44, %v1468
    %1472 = vset.pattern.permute.xlu0 0
    %1473 = vperm.xlu0 %1472, %v1464
    %v1474 = vpop.permute.xlu0 %1473
    %v1476 = vmul.f32 %v1361, %v1474
    %v1477 = vmul.f32 %v1363, %v1474
    %v1478 = vmul.f32 %v1432, %v1474
    %v1479 = vmul.f32 %v1434, %v1474
    %1481 = vset.pattern.permute.xlu0 1
    %1482 = vperm.xlu0 %1481, %v1470
    %v1483 = vpop.permute.xlu0 %1482
    %v1485 = vadd.f32 %v1476, %v1483
    %v1486 = vadd.f32 %v1477, %v1483
    %v1487 = vadd.f32 %v1478, %v1483
    %v1488 = vadd.f32 %v1479, %v1483
    %v1489 = vmax.f32 %v1485, 0.0
    %v1490 = vmax.f32 %v1486, 0.0
    %v1491 = vmax.f32 %v1487, 0.0
    %v1492 = vmax.f32 %v1488, 0.0
    %1493 = vrot.lane.b32.xlu0 %v1489, 34
    %v1494 = vpop.permute.xlu0 %1493
    %1495 = vrot.lane.b32.xlu0 %v1490, 34
    %v1496 = vpop.permute.xlu0 %1495
    %1497 = vrot.lane.b32.xlu0 %v1491, 34
    %v1498 = vpop.permute.xlu0 %1497
    %1499 = vrot.lane.b32.xlu0 %v1492, 34
    %v1500 = vpop.permute.xlu0 %1499
    %v1501 = vsel %vm76, %v1498, %v1500
    %v1502 = vsel %vm76, %v1496, %v1498
    %v1503 = vsel %vm76, %v1494, %v1496
    %v1504 = vsel %vm76, %v1500, %v1494
    %v1505 = vsel %vm113, %v1504, 0.0
    %v1506 = vsel %vm114, %v1503, 0.0
    %v1507 = vsel %vm115, %v1502, 0.0
    %v1508 = vsel %vm116, %v1501, 0.0
    %1509 = vst [vmem:[#allocation2] sm:$0xf] %v1505
    %1510 = vst [vmem:[#allocation2 + $0x8] sm:$0xf] %v1506
    %1511 = vst [vmem:[#allocation2 + $0x10] sm:$0xf] %v1507
    %1512 = vst [vmem:[#allocation2 + $0x18] sm:$0xf] %v1508
    %1513 = vrot.lane.b32.xlu0 %v1489, 33
    %v1514 = vpop.permute.xlu0 %1513
    %1515 = vrot.lane.b32.xlu0 %v1490, 33
    %v1516 = vpop.permute.xlu0 %1515
    %1517 = vrot.lane.b32.xlu0 %v1491, 33
    %v1518 = vpop.permute.xlu0 %1517
    %1519 = vrot.lane.b32.xlu0 %v1492, 33
    %v1520 = vpop.permute.xlu0 %1519
    %v1521 = vsel %vm133, %v1518, %v1520
    %v1522 = vsel %vm133, %v1516, %v1518
    %v1523 = vsel %vm133, %v1514, %v1516
    %v1524 = vsel %vm133, %v1520, %v1514
    %v1525 = vsel %vm158, %v1524, 0.0
    %v1526 = vsel %vm159, %v1523, 0.0
    %v1527 = vsel %vm160, %v1522, 0.0
    %v1528 = vsel %vm161, %v1521, 0.0
    %v1533 = vrot.slane %v1525, 4
    %v1534 = vrot.slane %v1526, 4
    %v1535 = vrot.slane %v1527, 4
    %v1536 = vrot.slane %v1528, 4
    %1541 = vst [vmem:[#allocation2] sm:$0xf0] %v1533
    %1542 = vst [vmem:[#allocation2 + $0x8] sm:$0xf0] %v1534
    %1543 = vst [vmem:[#allocation2 + $0x10] sm:$0xf0] %v1535
    %1544 = vst [vmem:[#allocation2 + $0x18] sm:$0xf0] %v1536
    %1545 = vrot.lane.b32.xlu0 %v1489, 32
    %v1546 = vpop.permute.xlu0 %1545
    %1547 = vrot.lane.b32.xlu0 %v1490, 32
    %v1548 = vpop.permute.xlu0 %1547
    %1549 = vrot.lane.b32.xlu0 %v1491, 32
    %v1550 = vpop.permute.xlu0 %1549
    %1551 = vrot.lane.b32.xlu0 %v1492, 32
    %v1552 = vpop.permute.xlu0 %1551
    %v1553 = vsel %vm190, %v1550, %v1552
    %v1554 = vsel %vm190, %v1548, %v1550
    %v1555 = vsel %vm190, %v1546, %v1548
    %v1556 = vsel %vm190, %v1552, %v1546
    %v1557 = vsel %vm215, %v1556, 0.0
    %v1558 = vsel %vm216, %v1555, 0.0
    %v1559 = vsel %vm217, %v1554, 0.0
    %v1560 = vsel %vm218, %v1553, 0.0
    %1561 = vst [vmem:[#allocation2 + $0x20] sm:$0xf] %v1557
    %1562 = vst [vmem:[#allocation2 + $0x28] sm:$0xf] %v1558
    %1563 = vst [vmem:[#allocation2 + $0x30] sm:$0xf] %v1559
    %1564 = vst [vmem:[#allocation2 + $0x38] sm:$0xf] %v1560
    %1565 = vrot.lane.b32.xlu0 %v1489, 31
    %v1566 = vpop.permute.xlu0 %1565
    %1567 = vrot.lane.b32.xlu0 %v1490, 31
    %v1568 = vpop.permute.xlu0 %1567
    %1569 = vrot.lane.b32.xlu0 %v1491, 31
    %v1570 = vpop.permute.xlu0 %1569
    %1571 = vrot.lane.b32.xlu0 %v1492, 31
    %v1572 = vpop.permute.xlu0 %1571
    %v1573 = vsel %vm235, %v1570, %v1572
    %v1574 = vsel %vm235, %v1568, %v1570
    %v1575 = vsel %vm235, %v1566, %v1568
    %v1576 = vsel %vm235, %v1572, %v1566
    %v1577 = vsel %vm260, %v1576, 0.0
    %v1578 = vsel %vm261, %v1575, 0.0
    %v1579 = vsel %vm262, %v1574, 0.0
    %v1580 = vsel %vm263, %v1573, 0.0
    %v1585 = vrot.slane %v1577, 4
    %v1586 = vrot.slane %v1578, 4
    %v1587 = vrot.slane %v1579, 4
    %v1588 = vrot.slane %v1580, 4
    %1593 = vst [vmem:[#allocation2 + $0x20] sm:$0xf0] %v1585
    %1594 = vst [vmem:[#allocation2 + $0x28] sm:$0xf0] %v1586
    %1595 = vst [vmem:[#allocation2 + $0x30] sm:$0xf0] %v1587
    %1596 = vst [vmem:[#allocation2 + $0x38] sm:$0xf0] %v1588
    %1597 = vrot.lane.b32.xlu0 %v1489, 30
    %v1598 = vpop.permute.xlu0 %1597
    %1599 = vrot.lane.b32.xlu0 %v1490, 30
    %v1600 = vpop.permute.xlu0 %1599
    %1601 = vrot.lane.b32.xlu0 %v1491, 30
    %v1602 = vpop.permute.xlu0 %1601
    %1603 = vrot.lane.b32.xlu0 %v1492, 30
    %v1604 = vpop.permute.xlu0 %1603
    %v1605 = vsel %vm292, %v1602, %v1604
    %v1606 = vsel %vm292, %v1600, %v1602
    %v1607 = vsel %vm292, %v1598, %v1600
    %v1608 = vsel %vm292, %v1604, %v1598
    %v1609 = vsel %vm317, %v1608, 0.0
    %v1610 = vsel %vm318, %v1607, 0.0
    %v1611 = vsel %vm319, %v1606, 0.0
    %v1612 = vsel %vm320, %v1605, 0.0
    %1613 = vst [vmem:[#allocation2 + $0x40] sm:$0xf] %v1609
    %1614 = vst [vmem:[#allocation2 + $0x48] sm:$0xf] %v1610
    %1615 = vst [vmem:[#allocation2 + $0x50] sm:$0xf] %v1611
    %1616 = vst [vmem:[#allocation2 + $0x58] sm:$0xf] %v1612
    %1617 = vrot.lane.b32.xlu0 %v1489, 18
    %v1618 = vpop.permute.xlu0 %1617
    %1619 = vrot.lane.b32.xlu0 %v1490, 18
    %v1620 = vpop.permute.xlu0 %1619
    %1621 = vrot.lane.b32.xlu0 %v1491, 18
    %v1622 = vpop.permute.xlu0 %1621
    %1623 = vrot.lane.b32.xlu0 %v1492, 18
    %v1624 = vpop.permute.xlu0 %1623
    %v1625 = vsel %vm337, %v1622, %v1624
    %v1626 = vsel %vm337, %v1620, %v1622
    %v1627 = vsel %vm337, %v1618, %v1620
    %v1628 = vsel %vm337, %v1624, %v1618
    %v1629 = vsel %vm366, %v1628, 0.0
    %v1630 = vsel %vm367, %v1627, 0.0
    %v1631 = vsel %vm368, %v1626, 0.0
    %v1632 = vsel %vm369, %v1625, 0.0
    %v1637 = vrot.slane %v1629, 4
    %v1638 = vrot.slane %v1630, 4
    %v1639 = vrot.slane %v1631, 4
    %v1640 = vrot.slane %v1632, 4
    %1645 = vst [vmem:[#allocation2 + $0x40] sm:$0xf0] %v1637
    %1646 = vst [vmem:[#allocation2 + $0x48] sm:$0xf0] %v1638
    %1647 = vst [vmem:[#allocation2 + $0x50] sm:$0xf0] %v1639
    %1648 = vst [vmem:[#allocation2 + $0x58] sm:$0xf0] %v1640
    %1649 = vrot.lane.b32.xlu0 %v1489, 17
    %v1650 = vpop.permute.xlu0 %1649
    %1651 = vrot.lane.b32.xlu0 %v1490, 17
    %v1652 = vpop.permute.xlu0 %1651
    %1653 = vrot.lane.b32.xlu0 %v1491, 17
    %v1654 = vpop.permute.xlu0 %1653
    %1655 = vrot.lane.b32.xlu0 %v1492, 17
    %v1656 = vpop.permute.xlu0 %1655
    %v1657 = vsel %vm398, %v1654, %v1656
    %v1658 = vsel %vm398, %v1652, %v1654
    %v1659 = vsel %vm398, %v1650, %v1652
    %v1660 = vsel %vm398, %v1656, %v1650
    %v1661 = vsel %vm415, %v1660, 0.0
    %v1662 = vsel %vm416, %v1659, 0.0
    %v1663 = vsel %vm417, %v1658, 0.0
    %v1664 = vsel %vm418, %v1657, 0.0
    %1665 = vst [vmem:[#allocation2 + $0x60] sm:$0xf] %v1661
    %1666 = vst [vmem:[#allocation2 + $0x68] sm:$0xf] %v1662
    %1667 = vst [vmem:[#allocation2 + $0x70] sm:$0xf] %v1663
    %1668 = vst [vmem:[#allocation2 + $0x78] sm:$0xf] %v1664
    %1669 = vrot.lane.b32.xlu0 %v1489, 16
    %v1670 = vpop.permute.xlu0 %1669
    %1671 = vrot.lane.b32.xlu0 %v1490, 16
    %v1672 = vpop.permute.xlu0 %1671
    %1673 = vrot.lane.b32.xlu0 %v1491, 16
    %v1674 = vpop.permute.xlu0 %1673
    %1675 = vrot.lane.b32.xlu0 %v1492, 16
    %v1676 = vpop.permute.xlu0 %1675
    %v1677 = vsel %vm435, %v1674, %v1676
    %v1678 = vsel %vm435, %v1672, %v1674
    %v1679 = vsel %vm435, %v1670, %v1672
    %v1680 = vsel %vm435, %v1676, %v1670
    %v1681 = vsel %vm452, %v1680, 0.0
    %v1682 = vsel %vm453, %v1679, 0.0
    %v1683 = vsel %vm454, %v1678, 0.0
    %v1684 = vsel %vm455, %v1677, 0.0
    %v1689 = vrot.slane %v1681, 4
    %v1690 = vrot.slane %v1682, 4
    %v1691 = vrot.slane %v1683, 4
    %v1692 = vrot.slane %v1684, 4
    %1697 = vst [vmem:[#allocation2 + $0x60] sm:$0xf0] %v1689
    %1698 = vst [vmem:[#allocation2 + $0x68] sm:$0xf0] %v1690
    %1699 = vst [vmem:[#allocation2 + $0x70] sm:$0xf0] %v1691
    %1700 = vst [vmem:[#allocation2 + $0x78] sm:$0xf0] %v1692
    %1701 = vrot.lane.b32.xlu0 %v1489, 15
    %v1702 = vpop.permute.xlu0 %1701
    %1703 = vrot.lane.b32.xlu0 %v1490, 15
    %v1704 = vpop.permute.xlu0 %1703
    %1705 = vrot.lane.b32.xlu0 %v1491, 15
    %v1706 = vpop.permute.xlu0 %1705
    %1707 = vrot.lane.b32.xlu0 %v1492, 15
    %v1708 = vpop.permute.xlu0 %1707
    %v1709 = vsel %vm484, %v1706, %v1708
    %v1710 = vsel %vm484, %v1704, %v1706
    %v1711 = vsel %vm484, %v1702, %v1704
    %v1712 = vsel %vm484, %v1708, %v1702
    %v1713 = vsel %vm501, %v1712, 0.0
    %v1714 = vsel %vm502, %v1711, 0.0
    %v1715 = vsel %vm503, %v1710, 0.0
    %v1716 = vsel %vm504, %v1709, 0.0
    %1717 = vst [vmem:[#allocation2 + $0x80] sm:$0xf] %v1713
    %1718 = vst [vmem:[#allocation2 + $0x88] sm:$0xf] %v1714
    %1719 = vst [vmem:[#allocation2 + $0x90] sm:$0xf] %v1715
    %1720 = vst [vmem:[#allocation2 + $0x98] sm:$0xf] %v1716
    %1721 = vrot.lane.b32.xlu0 %v1489, 14
    %v1722 = vpop.permute.xlu0 %1721
    %1723 = vrot.lane.b32.xlu0 %v1490, 14
    %v1724 = vpop.permute.xlu0 %1723
    %1725 = vrot.lane.b32.xlu0 %v1491, 14
    %v1726 = vpop.permute.xlu0 %1725
    %1727 = vrot.lane.b32.xlu0 %v1492, 14
    %v1728 = vpop.permute.xlu0 %1727
    %v1729 = vsel %vm521, %v1726, %v1728
    %v1730 = vsel %vm521, %v1724, %v1726
    %v1731 = vsel %vm521, %v1722, %v1724
    %v1732 = vsel %vm521, %v1728, %v1722
    %v1733 = vsel %vm538, %v1732, 0.0
    %v1734 = vsel %vm539, %v1731, 0.0
    %v1735 = vsel %vm540, %v1730, 0.0
    %v1736 = vsel %vm541, %v1729, 0.0
    %v1741 = vrot.slane %v1733, 4
    %v1742 = vrot.slane %v1734, 4
    %v1743 = vrot.slane %v1735, 4
    %v1744 = vrot.slane %v1736, 4
    %1749 = vst [vmem:[#allocation2 + $0x80] sm:$0xf0] %v1741
    %1750 = vst [vmem:[#allocation2 + $0x88] sm:$0xf0] %v1742
    %1751 = vst [vmem:[#allocation2 + $0x90] sm:$0xf0] %v1743
    %1752 = vst [vmem:[#allocation2 + $0x98] sm:$0xf0] %v1744
    %1753 = vrot.lane.b32.xlu0 %v1489, 2
    %v1754 = vpop.permute.xlu0 %1753
    %1755 = vrot.lane.b32.xlu0 %v1490, 2
    %v1756 = vpop.permute.xlu0 %1755
    %1757 = vrot.lane.b32.xlu0 %v1491, 2
    %v1758 = vpop.permute.xlu0 %1757
    %1759 = vrot.lane.b32.xlu0 %v1492, 2
    %v1760 = vpop.permute.xlu0 %1759
    %v1761 = vsel %vm570, %v1758, %v1760
    %v1762 = vsel %vm570, %v1756, %v1758
    %v1763 = vsel %vm570, %v1754, %v1756
    %v1764 = vsel %vm570, %v1760, %v1754
    %v1765 = vsel %vm599, %v1764, 0.0
    %v1766 = vsel %vm600, %v1763, 0.0
    %v1767 = vsel %vm601, %v1762, 0.0
    %v1768 = vsel %vm602, %v1761, 0.0
    %1769 = vst [vmem:[#allocation2 + $0xa0] sm:$0xf] %v1765
    %1770 = vst [vmem:[#allocation2 + $0xa8] sm:$0xf] %v1766
    %1771 = vst [vmem:[#allocation2 + $0xb0] sm:$0xf] %v1767
    %1772 = vst [vmem:[#allocation2 + $0xb8] sm:$0xf] %v1768
    %1773 = vrot.lane.b32.xlu0 %v1489, 1
    %v1774 = vpop.permute.xlu0 %1773
    %1775 = vrot.lane.b32.xlu0 %v1490, 1
    %v1776 = vpop.permute.xlu0 %1775
    %1777 = vrot.lane.b32.xlu0 %v1491, 1
    %v1778 = vpop.permute.xlu0 %1777
    %1779 = vrot.lane.b32.xlu0 %v1492, 1
    %v1780 = vpop.permute.xlu0 %1779
    %v1781 = vsel %vm619, %v1778, %v1780
    %v1782 = vsel %vm619, %v1776, %v1778
    %v1783 = vsel %vm619, %v1774, %v1776
    %v1784 = vsel %vm619, %v1780, %v1774
    %v1785 = vsel %vm636, %v1784, 0.0
    %v1786 = vsel %vm637, %v1783, 0.0
    %v1787 = vsel %vm638, %v1782, 0.0
    %v1788 = vsel %vm639, %v1781, 0.0
    %v1793 = vrot.slane %v1785, 4
    %v1794 = vrot.slane %v1786, 4
    %v1795 = vrot.slane %v1787, 4
    %v1796 = vrot.slane %v1788, 4
    %1801 = vst [vmem:[#allocation2 + $0xa0] sm:$0xf0] %v1793
    %1802 = vst [vmem:[#allocation2 + $0xa8] sm:$0xf0] %v1794
    %1803 = vst [vmem:[#allocation2 + $0xb0] sm:$0xf0] %v1795
    %1804 = vst [vmem:[#allocation2 + $0xb8] sm:$0xf0] %v1796
    %v1805 = vsel %vm672, %v1489, 0.0
    %v1806 = vsel %vm673, %v1490, 0.0
    %v1807 = vsel %vm674, %v1491, 0.0
    %v1808 = vsel %vm675, %v1492, 0.0
    %1809 = vst [vmem:[#allocation2 + $0xc0] sm:$0xf] %v1805
    %1810 = vst [vmem:[#allocation2 + $0xc8] sm:$0xf] %v1806
    %1811 = vst [vmem:[#allocation2 + $0xd0] sm:$0xf] %v1807
    %1812 = vst [vmem:[#allocation2 + $0xd8] sm:$0xf] %v1808
    %1813 = vrot.lane.b32.xlu0 %v1489, 127
    %v1814 = vpop.permute.xlu0 %1813
    %1815 = vrot.lane.b32.xlu0 %v1490, 127
    %v1816 = vpop.permute.xlu0 %1815
    %1817 = vrot.lane.b32.xlu0 %v1491, 127
    %v1818 = vpop.permute.xlu0 %1817
    %1819 = vrot.lane.b32.xlu0 %v1492, 127
    %v1820 = vpop.permute.xlu0 %1819
    %v1821 = vsel %vm692, %v1818, %v1820
    %v1822 = vsel %vm692, %v1816, %v1818
    %v1823 = vsel %vm692, %v1814, %v1816
    %v1824 = vsel %vm692, %v1820, %v1814
    %v1825 = vsel %vm709, %v1823, 0.0
    %v1826 = vsel %vm710, %v1822, 0.0
    %v1827 = vsel %vm711, %v1821, 0.0
    %v1828 = vsel %vm712, %v1824, 0.0
    %v1833 = vrot.slane %v1825, 4
    %v1834 = vrot.slane %v1826, 4
    %v1835 = vrot.slane %v1827, 4
    %v1836 = vrot.slane %v1828, 4
    %1841 = vst [vmem:[#allocation2 + $0xc0] sm:$0xf0] %v1833
    %1842 = vst [vmem:[#allocation2 + $0xc8] sm:$0xf0] %v1834
    %1843 = vst [vmem:[#allocation2 + $0xd0] sm:$0xf0] %v1835
    %1844 = vst [vmem:[#allocation2 + $0xd8] sm:$0xf0] %v1836
    %1845 = vrot.lane.b32.xlu0 %v1489, 126
    %v1846 = vpop.permute.xlu0 %1845
    %1847 = vrot.lane.b32.xlu0 %v1490, 126
    %v1848 = vpop.permute.xlu0 %1847
    %1849 = vrot.lane.b32.xlu0 %v1491, 126
    %v1850 = vpop.permute.xlu0 %1849
    %1851 = vrot.lane.b32.xlu0 %v1492, 126
    %v1852 = vpop.permute.xlu0 %1851
    %v1853 = vsel %vm741, %v1850, %v1852
    %v1854 = vsel %vm741, %v1848, %v1850
    %v1855 = vsel %vm741, %v1846, %v1848
    %v1856 = vsel %vm741, %v1852, %v1846
    %v1857 = vsel %vm758, %v1855, 0.0
    %v1858 = vsel %vm759, %v1854, 0.0
    %v1859 = vsel %vm760, %v1853, 0.0
    %v1860 = vsel %vm761, %v1856, 0.0
    %1861 = vst [vmem:[#allocation2 + $0xe0] sm:$0xf] %v1857
    %1862 = vst [vmem:[#allocation2 + $0xe8] sm:$0xf] %v1858
    %1863 = vst [vmem:[#allocation2 + $0xf0] sm:$0xf] %v1859
    %1864 = vst [vmem:[#allocation2 + $0xf8] sm:$0xf] %v1860
    %1865 = vrot.lane.b32.xlu0 %v1489, 114
    %v1866 = vpop.permute.xlu0 %1865
    %1867 = vrot.lane.b32.xlu0 %v1490, 114
    %v1868 = vpop.permute.xlu0 %1867
    %1869 = vrot.lane.b32.xlu0 %v1491, 114
    %v1870 = vpop.permute.xlu0 %1869
    %1871 = vrot.lane.b32.xlu0 %v1492, 114
    %v1872 = vpop.permute.xlu0 %1871
    %v1873 = vsel %vm778, %v1870, %v1872
    %v1874 = vsel %vm778, %v1868, %v1870
    %v1875 = vsel %vm778, %v1866, %v1868
    %v1876 = vsel %vm778, %v1872, %v1866
    %v1877 = vsel %vm807, %v1875, 0.0
    %v1878 = vsel %vm808, %v1874, 0.0
    %v1879 = vsel %vm809, %v1873, 0.0
    %v1880 = vsel %vm810, %v1876, 0.0
    %v1885 = vrot.slane %v1877, 4
    %v1886 = vrot.slane %v1878, 4
    %v1887 = vrot.slane %v1879, 4
    %v1888 = vrot.slane %v1880, 4
    %1893 = vst [vmem:[#allocation2 + $0xe0] sm:$0xf0] %v1885
    %1894 = vst [vmem:[#allocation2 + $0xe8] sm:$0xf0] %v1886
    %1895 = vst [vmem:[#allocation2 + $0xf0] sm:$0xf0] %v1887
    %1896 = vst [vmem:[#allocation2 + $0xf8] sm:$0xf0] %v1888
    %1897 = vrot.lane.b32.xlu0 %v1489, 113
    %v1898 = vpop.permute.xlu0 %1897
    %1899 = vrot.lane.b32.xlu0 %v1490, 113
    %v1900 = vpop.permute.xlu0 %1899
    %1901 = vrot.lane.b32.xlu0 %v1491, 113
    %v1902 = vpop.permute.xlu0 %1901
    %1903 = vrot.lane.b32.xlu0 %v1492, 113
    %v1904 = vpop.permute.xlu0 %1903
    %v1905 = vsel %vm839, %v1902, %v1904
    %v1906 = vsel %vm839, %v1900, %v1902
    %v1907 = vsel %vm839, %v1898, %v1900
    %v1908 = vsel %vm839, %v1904, %v1898
    %v1909 = vsel %vm856, %v1907, 0.0
    %v1910 = vsel %vm857, %v1906, 0.0
    %v1911 = vsel %vm858, %v1905, 0.0
    %v1912 = vsel %vm859, %v1908, 0.0
    %1913 = vst [vmem:[#allocation2 + $0x100] sm:$0xf] %v1909
    %1914 = vst [vmem:[#allocation2 + $0x108] sm:$0xf] %v1910
    %1915 = vst [vmem:[#allocation2 + $0x110] sm:$0xf] %v1911
    %1916 = vst [vmem:[#allocation2 + $0x118] sm:$0xf] %v1912
    %1917 = vrot.lane.b32.xlu0 %v1489, 112
    %v1918 = vpop.permute.xlu0 %1917
    %1919 = vrot.lane.b32.xlu0 %v1490, 112
    %v1920 = vpop.permute.xlu0 %1919
    %1921 = vrot.lane.b32.xlu0 %v1491, 112
    %v1922 = vpop.permute.xlu0 %1921
    %1923 = vrot.lane.b32.xlu0 %v1492, 112
    %v1924 = vpop.permute.xlu0 %1923
    %v1925 = vsel %vm876, %v1922, %v1924
    %v1926 = vsel %vm876, %v1920, %v1922
    %v1927 = vsel %vm876, %v1918, %v1920
    %v1928 = vsel %vm876, %v1924, %v1918
    %v1929 = vsel %vm893, %v1927, 0.0
    %v1930 = vsel %vm894, %v1926, 0.0
    %v1931 = vsel %vm895, %v1925, 0.0
    %v1932 = vsel %vm896, %v1928, 0.0
    %v1937 = vrot.slane %v1929, 4
    %v1938 = vrot.slane %v1930, 4
    %v1939 = vrot.slane %v1931, 4
    %v1940 = vrot.slane %v1932, 4
    %1945 = vst [vmem:[#allocation2 + $0x100] sm:$0xf0] %v1937
    %1946 = vst [vmem:[#allocation2 + $0x108] sm:$0xf0] %v1938
    %1947 = vst [vmem:[#allocation2 + $0x110] sm:$0xf0] %v1939
    %1948 = vst [vmem:[#allocation2 + $0x118] sm:$0xf0] %v1940
    %1949 = vrot.lane.b32.xlu0 %v1489, 111
    %v1950 = vpop.permute.xlu0 %1949
    %1951 = vrot.lane.b32.xlu0 %v1490, 111
    %v1952 = vpop.permute.xlu0 %1951
    %1953 = vrot.lane.b32.xlu0 %v1491, 111
    %v1954 = vpop.permute.xlu0 %1953
    %1955 = vrot.lane.b32.xlu0 %v1492, 111
    %v1956 = vpop.permute.xlu0 %1955
    %v1957 = vsel %vm925, %v1954, %v1956
    %v1958 = vsel %vm925, %v1952, %v1954
    %v1959 = vsel %vm925, %v1950, %v1952
    %v1960 = vsel %vm925, %v1956, %v1950
    %v1961 = vsel %vm942, %v1959, 0.0
    %v1962 = vsel %vm943, %v1958, 0.0
    %v1963 = vsel %vm944, %v1957, 0.0
    %v1964 = vsel %vm945, %v1960, 0.0
    %1965 = vst [vmem:[#allocation2 + $0x120] sm:$0xf] %v1961
    %1966 = vst [vmem:[#allocation2 + $0x128] sm:$0xf] %v1962
    %1967 = vst [vmem:[#allocation2 + $0x130] sm:$0xf] %v1963
    %1968 = vst [vmem:[#allocation2 + $0x138] sm:$0xf] %v1964
    %1969 = vrot.lane.b32.xlu0 %v1489, 110
    %v1970 = vpop.permute.xlu0 %1969
    %1971 = vrot.lane.b32.xlu0 %v1490, 110
    %v1972 = vpop.permute.xlu0 %1971
    %1973 = vrot.lane.b32.xlu0 %v1491, 110
    %v1974 = vpop.permute.xlu0 %1973
    %1975 = vrot.lane.b32.xlu0 %v1492, 110
    %v1976 = vpop.permute.xlu0 %1975
    %v1977 = vsel %vm962, %v1974, %v1976
    %v1978 = vsel %vm962, %v1972, %v1974
    %v1979 = vsel %vm962, %v1970, %v1972
    %v1980 = vsel %vm962, %v1976, %v1970
    %v1981 = vsel %vm979, %v1979, 0.0
    %v1982 = vsel %vm980, %v1978, 0.0
    %v1983 = vsel %vm981, %v1977, 0.0
    %v1984 = vsel %vm982, %v1980, 0.0
    %v1989 = vrot.slane %v1981, 4
    %v1990 = vrot.slane %v1982, 4
    %v1991 = vrot.slane %v1983, 4
    %v1992 = vrot.slane %v1984, 4
    %1997 = vst [vmem:[#allocation2 + $0x120] sm:$0xf0] %v1989
    %1998 = vst [vmem:[#allocation2 + $0x128] sm:$0xf0] %v1990
    %1999 = vst [vmem:[#allocation2 + $0x130] sm:$0xf0] %v1991
    %2000 = vst [vmem:[#allocation2 + $0x138] sm:$0xf0] %v1992
    %2001 = vrot.lane.b32.xlu0 %v1489, 98
    %v2002 = vpop.permute.xlu0 %2001
    %2003 = vrot.lane.b32.xlu0 %v1490, 98
    %v2004 = vpop.permute.xlu0 %2003
    %2005 = vrot.lane.b32.xlu0 %v1491, 98
    %v2006 = vpop.permute.xlu0 %2005
    %2007 = vrot.lane.b32.xlu0 %v1492, 98
    %v2008 = vpop.permute.xlu0 %2007
    %v2009 = vsel %vm1011, %v2006, %v2008
    %v2010 = vsel %vm1011, %v2004, %v2006
    %v2011 = vsel %vm1011, %v2002, %v2004
    %v2012 = vsel %vm1011, %v2008, %v2002
    %v2013 = vsel %vm1040, %v2011, 0.0
    %v2014 = vsel %vm1041, %v2010, 0.0
    %v2015 = vsel %vm1042, %v2009, 0.0
    %v2016 = vsel %vm1043, %v2012, 0.0
    %2017 = vst [vmem:[#allocation2 + $0x140] sm:$0xf] %v2013
    %2018 = vst [vmem:[#allocation2 + $0x148] sm:$0xf] %v2014
    %2019 = vst [vmem:[#allocation2 + $0x150] sm:$0xf] %v2015
    %2020 = vst [vmem:[#allocation2 + $0x158] sm:$0xf] %v2016
    %2021 = vrot.lane.b32.xlu0 %v1489, 97
    %v2022 = vpop.permute.xlu0 %2021
    %2023 = vrot.lane.b32.xlu0 %v1490, 97
    %v2024 = vpop.permute.xlu0 %2023
    %2025 = vrot.lane.b32.xlu0 %v1491, 97
    %v2026 = vpop.permute.xlu0 %2025
    %2027 = vrot.lane.b32.xlu0 %v1492, 97
    %v2028 = vpop.permute.xlu0 %2027
    %v2029 = vsel %vm1060, %v2026, %v2028
    %v2030 = vsel %vm1060, %v2024, %v2026
    %v2031 = vsel %vm1060, %v2022, %v2024
    %v2032 = vsel %vm1060, %v2028, %v2022
    %v2033 = vsel %vm1077, %v2031, 0.0
    %v2034 = vsel %vm1078, %v2030, 0.0
    %v2035 = vsel %vm1079, %v2029, 0.0
    %v2036 = vsel %vm1080, %v2032, 0.0
    %v2041 = vrot.slane %v2033, 4
    %v2042 = vrot.slane %v2034, 4
    %v2043 = vrot.slane %v2035, 4
    %v2044 = vrot.slane %v2036, 4
    %2049 = vst [vmem:[#allocation2 + $0x140] sm:$0xf0] %v2041
    %2050 = vst [vmem:[#allocation2 + $0x148] sm:$0xf0] %v2042
    %2051 = vst [vmem:[#allocation2 + $0x150] sm:$0xf0] %v2043
    %2052 = vst [vmem:[#allocation2 + $0x158] sm:$0xf0] %v2044
    %2053 = vrot.lane.b32.xlu0 %v1489, 96
    %v2054 = vpop.permute.xlu0 %2053
    %2055 = vrot.lane.b32.xlu0 %v1490, 96
    %v2056 = vpop.permute.xlu0 %2055
    %2057 = vrot.lane.b32.xlu0 %v1491, 96
    %v2058 = vpop.permute.xlu0 %2057
    %2059 = vrot.lane.b32.xlu0 %v1492, 96
    %v2060 = vpop.permute.xlu0 %2059
    %v2061 = vsel %vm1109, %v2058, %v2060
    %v2062 = vsel %vm1109, %v2056, %v2058
    %v2063 = vsel %vm1109, %v2054, %v2056
    %v2064 = vsel %vm1109, %v2060, %v2054
    %v2065 = vsel %vm1126, %v2063, 0.0
    %v2066 = vsel %vm1127, %v2062, 0.0
    %v2067 = vsel %vm1128, %v2061, 0.0
    %v2068 = vsel %vm1129, %v2064, 0.0
    %2069 = vst [vmem:[#allocation2 + $0x160] sm:$0xf] %v2065
    %2070 = vst [vmem:[#allocation2 + $0x168] sm:$0xf] %v2066
    %2071 = vst [vmem:[#allocation2 + $0x170] sm:$0xf] %v2067
    %2072 = vst [vmem:[#allocation2 + $0x178] sm:$0xf] %v2068
    %2073 = vrot.lane.b32.xlu0 %v1489, 95
    %v2074 = vpop.permute.xlu0 %2073
    %2075 = vrot.lane.b32.xlu0 %v1490, 95
    %v2076 = vpop.permute.xlu0 %2075
    %2077 = vrot.lane.b32.xlu0 %v1491, 95
    %v2078 = vpop.permute.xlu0 %2077
    %2079 = vrot.lane.b32.xlu0 %v1492, 95
    %v2080 = vpop.permute.xlu0 %2079
    %v2081 = vsel %vm1146, %v2078, %v2080
    %v2082 = vsel %vm1146, %v2076, %v2078
    %v2083 = vsel %vm1146, %v2074, %v2076
    %v2084 = vsel %vm1146, %v2080, %v2074
    %v2085 = vsel %vm1163, %v2083, 0.0
    %v2086 = vsel %vm1164, %v2082, 0.0
    %v2087 = vsel %vm1165, %v2081, 0.0
    %v2088 = vsel %vm1166, %v2084, 0.0
    %v2093 = vrot.slane %v2085, 4
    %v2094 = vrot.slane %v2086, 4
    %v2095 = vrot.slane %v2087, 4
    %v2096 = vrot.slane %v2088, 4
    %2101 = vst [vmem:[#allocation2 + $0x160] sm:$0xf0] %v2093
    %2102 = vst [vmem:[#allocation2 + $0x168] sm:$0xf0] %v2094
    %2103 = vst [vmem:[#allocation2 + $0x170] sm:$0xf0] %v2095
    %2104 = vst [vmem:[#allocation2 + $0x178] sm:$0xf0] %v2096
    %2105 = vrot.lane.b32.xlu0 %v1489, 94
    %v2106 = vpop.permute.xlu0 %2105
    %2107 = vrot.lane.b32.xlu0 %v1490, 94
    %v2108 = vpop.permute.xlu0 %2107
    %2109 = vrot.lane.b32.xlu0 %v1491, 94
    %v2110 = vpop.permute.xlu0 %2109
    %2111 = vrot.lane.b32.xlu0 %v1492, 94
    %v2112 = vpop.permute.xlu0 %2111
    %v2113 = vsel %vm1195, %v2110, %v2112
    %v2114 = vsel %vm1195, %v2108, %v2110
    %v2115 = vsel %vm1195, %v2106, %v2108
    %v2116 = vsel %vm1195, %v2112, %v2106
    %v2117 = vsel %vm1212, %v2115, 0.0
    %v2118 = vsel %vm1213, %v2114, 0.0
    %v2119 = vsel %vm1214, %v2113, 0.0
    %v2120 = vsel %vm1215, %v2116, 0.0
    %2121 = vst [vmem:[#allocation2 + $0x180] sm:$0xf] %v2117
    %2122 = vst [vmem:[#allocation2 + $0x188] sm:$0xf] %v2118
    %2123 = vst [vmem:[#allocation2 + $0x190] sm:$0xf] %v2119
    %2124 = vst [vmem:[#allocation2 + $0x198] sm:$0xf] %v2120
    %v2125 = vld [vmem:[%s2] sm:$0xf]
    %v2126 = vld [vmem:[#allocation2] sm:$0xff]
    %v2127 = vld [vmem:[#allocation2 + $0x8] sm:$0xff]
    %v2128 = vld [vmem:[#allocation2 + $0x10] sm:$0xff]
    %v2129 = vld [vmem:[#allocation2 + $0x18] sm:$0xff]
    %v2130 = vld [vmem:[#allocation2 + $0x20] sm:$0xff]
    %v2131 = vld [vmem:[#allocation2 + $0x28] sm:$0xff]
    %v2132 = vld [vmem:[#allocation2 + $0x30] sm:$0xff]
    %v2133 = vld [vmem:[#allocation2 + $0x38] sm:$0xff]
    %v2134 = vld [vmem:[#allocation2 + $0x40] sm:$0xff]
    %v2135 = vld [vmem:[#allocation2 + $0x48] sm:$0xff]
    %v2136 = vld [vmem:[#allocation2 + $0x50] sm:$0xff]
    %v2137 = vld [vmem:[#allocation2 + $0x58] sm:$0xff]
    %v2138 = vld [vmem:[#allocation2 + $0x60] sm:$0xff]
    %v2139 = vld [vmem:[#allocation2 + $0x68] sm:$0xff]
    %v2140 = vld [vmem:[#allocation2 + $0x70] sm:$0xff]
    %v2141 = vld [vmem:[#allocation2 + $0x78] sm:$0xff]
    %v2142 = vld [vmem:[#allocation2 + $0x80] sm:$0xff]
    %v2143 = vld [vmem:[#allocation2 + $0x88] sm:$0xff]
    %v2144 = vld [vmem:[#allocation2 + $0x90] sm:$0xff]
    %v2145 = vld [vmem:[#allocation2 + $0x98] sm:$0xff]
    %v2146 = vld [vmem:[#allocation2 + $0xa0] sm:$0xff]
    %v2147 = vld [vmem:[#allocation2 + $0xa8] sm:$0xff]
    %v2148 = vld [vmem:[#allocation2 + $0xb0] sm:$0xff]
    %v2149 = vld [vmem:[#allocation2 + $0xb8] sm:$0xff]
    %v2150 = vld [vmem:[#allocation2 + $0xc0] sm:$0xff]
    %v2151 = vld [vmem:[#allocation2 + $0xc8] sm:$0xff]
    %v2152 = vld [vmem:[#allocation2 + $0xd0] sm:$0xff]
    %v2153 = vld [vmem:[#allocation2 + $0xd8] sm:$0xff]
    %v2154 = vld [vmem:[#allocation2 + $0xe0] sm:$0xff]
    %v2155 = vld [vmem:[#allocation2 + $0xe8] sm:$0xff]
    %v2156 = vld [vmem:[#allocation2 + $0xf0] sm:$0xff]
    %v2157 = vld [vmem:[#allocation2 + $0xf8] sm:$0xff]
    %v2158 = vld [vmem:[#allocation2 + $0x100] sm:$0xff]
    %v2159 = vld [vmem:[#allocation2 + $0x108] sm:$0xff]
    %v2160 = vld [vmem:[#allocation2 + $0x110] sm:$0xff]
    %v2161 = vld [vmem:[#allocation2 + $0x118] sm:$0xff]
    %v2162 = vld [vmem:[#allocation2 + $0x120] sm:$0xff]
    %v2163 = vld [vmem:[#allocation2 + $0x128] sm:$0xff]
    %v2164 = vld [vmem:[#allocation2 + $0x130] sm:$0xff]
    %v2165 = vld [vmem:[#allocation2 + $0x138] sm:$0xff]
    %v2166 = vld [vmem:[#allocation2 + $0x140] sm:$0xff]
    %v2167 = vld [vmem:[#allocation2 + $0x148] sm:$0xff]
    %v2168 = vld [vmem:[#allocation2 + $0x150] sm:$0xff]
    %v2169 = vld [vmem:[#allocation2 + $0x158] sm:$0xff]
    %v2170 = vld [vmem:[#allocation2 + $0x160] sm:$0xff]
    %v2171 = vld [vmem:[#allocation2 + $0x168] sm:$0xff]
    %v2172 = vld [vmem:[#allocation2 + $0x170] sm:$0xff]
    %v2173 = vld [vmem:[#allocation2 + $0x178] sm:$0xff]
    %v2174 = vld [vmem:[#allocation2 + $0x180] sm:$0xf]
    %v2175 = vld [vmem:[#allocation2 + $0x188] sm:$0xf]
    %v2176 = vld [vmem:[#allocation2 + $0x190] sm:$0xf]
    %v2177 = vld [vmem:[#allocation2 + $0x198] sm:$0xf]
    %v2179 = vsel %vm1277, %v2125, 0
    %v2182 = vsel %vm1281, %v2174, 0
    %v2185 = vsel %vm1281, %v2175, 0
    %v2188 = vsel %vm1281, %v2176, 0
    %v2191 = vsel %vm1281, %v2177, 0
    %2193 = vmatprep.subr.mxu0 %v2127
    %2194 = vmatpush1.msra.mxu0 %v2126
    %2195 = vmatprep.subr.mxu0 %v2131
    %2196 = vmatpush1.msra.mxu0 %v2130
    %2197 = vmatprep.subr.mxu0 %v2135
    %2198 = vmatpush1.msra.mxu0 %v2134
    %2199 = vmatprep.subr.mxu0 %v2139
    %2200 = vmatpush1.msra.mxu0 %v2138
    %2201 = vmatprep.subr.mxu0 %v2143
    %2202 = vmatpush1.msra.mxu0 %v2142
    %2203 = vmatprep.subr.mxu0 %v2147
    %2204 = vmatpush1.msra.mxu0 %v2146
    %2205 = vmatprep.subr.mxu0 %v2151
    %2206 = vmatpush1.msra.mxu0 %v2150
    %2207 = vmatprep.subr.mxu0 %v2155
    %2208 = vmatpush1.msra.mxu0 %v2154
    %2209 = vmatprep.subr.mxu0 %v2159
    %2210 = vmatpush1.msra.mxu0 %v2158
    %2211 = vmatprep.subr.mxu0 %v2163
    %2212 = vmatpush1.msra.mxu0 %v2162
    %2213 = vmatprep.subr.mxu0 %v2167
    %2214 = vmatpush1.msra.mxu0 %v2166
    %2215 = vmatprep.subr.mxu0 %v2171
    %2216 = vmatpush1.msra.mxu0 %v2170
    %2217 = vmatprep.subr.mxu0 %v2185
    %2218 = vmatpush1.msra.mxu0 %v2182
    %2219 = vmatprep.subr.mxu0 0.0
    %2220 = vmatpush1.msra.mxu0 0.0
    %2221 = vmatprep.subr.mxu0 0.0
    %2222 = vmatpush1.msra.mxu0 0.0
    %2223 = vmatprep.subr.mxu0 0.0
    %2224 = vmatpush1.msra.mxu0 0.0
    %2225 = vmatprep.subr.mxu0 0.0
    %2226 = vmatpush1.msra.mxu0 0.0
    %2227 = vmatprep.subr.mxu0 0.0
    %2228 = vmatpush1.msra.mxu0 0.0
    %2229 = vmatprep.subr.mxu0 0.0
    %2230 = vmatpush1.msra.mxu0 0.0
    %2231 = vmatprep.subr.mxu0 0.0
    %2232 = vmatpush1.msra.mxu0 0.0
    %2233 = vmatprep.subr.mxu0 0.0
    %2234 = vmatpush1.msra.mxu0 0.0
    %2235 = vmatprep.subr.mxu0 0.0
    %2236 = vmatpush1.msra.mxu0 0.0
    %2237 = vmatprep.subr.mxu0 0.0
    %2238 = vmatpush1.msra.mxu0 0.0
    %2239 = vmatprep.subr.mxu0 0.0
    %2240 = vmatpush1.msra.mxu0 0.0
    %2241 = vmatprep.subr.mxu0 0.0
    %2242 = vmatpush1.msra.mxu0 0.0
    %2243 = vmatprep.subr.mxu0 0.0
    %2244 = vmatpush1.msra.mxu0 0.0
    %2245 = vmatprep.subr.mxu0 0.0
    %2246 = vmatpush1.msra.mxu0 0.0
    %2247 = vmatprep.subr.mxu0 0.0
    %2248 = vmatpush1.msra.mxu0 0.0
    %2249 = vmatprep.subr.mxu0 0.0
    %2250 = vmatpush1.msra.mxu0 0.0
    %2251 = vmatprep.subr.mxu0 0.0
    %2252 = vmatpush1.msra.mxu0 0.0
    %2253 = vmatprep.subr.mxu0 0.0
    %2254 = vmatpush1.msra.mxu0 0.0
    %2255 = vmatprep.subr.mxu0 0.0
    %2256 = vmatpush1.msra.mxu0 0.0
    %2257 = vmatprep.mubr.f32.mxu0 0.0
    %2258 = vmatmul.mubr.f32.gmra.mrb[0].mxu0 %v2179
    %v2259 = vpop.f32.mrb[0].mxu0
    %v2260 = vadd.f32 0.0, %v2259
    %v2261 = vpop.f32.mrb[0].mxu0
    %v2262 = vadd.f32 0.0, %v2261
    %2263 = vdwg.mxu0
    %2264 = vmatprep.subr.mxu0 %v2129
    %2265 = vmatpush1.msra.mxu0 %v2128
    %2266 = vmatprep.subr.mxu0 %v2133
    %2267 = vmatpush1.msra.mxu0 %v2132
    %2268 = vmatprep.subr.mxu0 %v2137
    %2269 = vmatpush1.msra.mxu0 %v2136
    %2270 = vmatprep.subr.mxu0 %v2141
    %2271 = vmatpush1.msra.mxu0 %v2140
    %2272 = vmatprep.subr.mxu0 %v2145
    %2273 = vmatpush1.msra.mxu0 %v2144
    %2274 = vmatprep.subr.mxu0 %v2149
    %2275 = vmatpush1.msra.mxu0 %v2148
    %2276 = vmatprep.subr.mxu0 %v2153
    %2277 = vmatpush1.msra.mxu0 %v2152
    %2278 = vmatprep.subr.mxu0 %v2157
    %2279 = vmatpush1.msra.mxu0 %v2156
    %2280 = vmatprep.subr.mxu0 %v2161
    %2281 = vmatpush1.msra.mxu0 %v2160
    %2282 = vmatprep.subr.mxu0 %v2165
    %2283 = vmatpush1.msra.mxu0 %v2164
    %2284 = vmatprep.subr.mxu0 %v2169
    %2285 = vmatpush1.msra.mxu0 %v2168
    %2286 = vmatprep.subr.mxu0 %v2173
    %2287 = vmatpush1.msra.mxu0 %v2172
    %2288 = vmatprep.subr.mxu0 %v2191
    %2289 = vmatpush1.msra.mxu0 %v2188
    %2290 = vmatprep.subr.mxu0 0.0
    %2291 = vmatpush1.msra.mxu0 0.0
    %2292 = vmatprep.subr.mxu0 0.0
    %2293 = vmatpush1.msra.mxu0 0.0
    %2294 = vmatprep.subr.mxu0 0.0
    %2295 = vmatpush1.msra.mxu0 0.0
    %2296 = vmatprep.subr.mxu0 0.0
    %2297 = vmatpush1.msra.mxu0 0.0
    %2298 = vmatprep.subr.mxu0 0.0
    %2299 = vmatpush1.msra.mxu0 0.0
    %2300 = vmatprep.subr.mxu0 0.0
    %2301 = vmatpush1.msra.mxu0 0.0
    %2302 = vmatprep.subr.mxu0 0.0
    %2303 = vmatpush1.msra.mxu0 0.0
    %2304 = vmatprep.subr.mxu0 0.0
    %2305 = vmatpush1.msra.mxu0 0.0
    %2306 = vmatprep.subr.mxu0 0.0
    %2307 = vmatpush1.msra.mxu0 0.0
    %2308 = vmatprep.subr.mxu0 0.0
    %2309 = vmatpush1.msra.mxu0 0.0
    %2310 = vmatprep.subr.mxu0 0.0
    %2311 = vmatpush1.msra.mxu0 0.0
    %2312 = vmatprep.subr.mxu0 0.0
    %2313 = vmatpush1.msra.mxu0 0.0
    %2314 = vmatprep.subr.mxu0 0.0
    %2315 = vmatpush1.msra.mxu0 0.0
    %2316 = vmatprep.subr.mxu0 0.0
    %2317 = vmatpush1.msra.mxu0 0.0
    %2318 = vmatprep.subr.mxu0 0.0
    %2319 = vmatpush1.msra.mxu0 0.0
    %2320 = vmatprep.subr.mxu0 0.0
    %2321 = vmatpush1.msra.mxu0 0.0
    %2322 = vmatprep.subr.mxu0 0.0
    %2323 = vmatpush1.msra.mxu0 0.0
    %2324 = vmatprep.subr.mxu0 0.0
    %2325 = vmatpush1.msra.mxu0 0.0
    %2326 = vmatprep.subr.mxu0 0.0
    %2327 = vmatpush1.msra.mxu0 0.0
    %2328 = vmatprep.mubr.f32.mxu0 0.0
    %2329 = vmatmul.mubr.f32.gmra.mrb[0].mxu0 %v2179
    %v2330 = vpop.f32.mrb[0].mxu0
    %v2331 = vadd.f32 0.0, %v2330
    %v2332 = vpop.f32.mrb[0].mxu0
    %v2333 = vadd.f32 0.0, %v2332
    %2334 = vdwg.mxu0
    %v2335 = vsel %vm1281, %v2260, 0.0
    %v2336 = vsel %vm1281, %v2262, 0.0
    %v2337 = vadd.f32 %v2335, %v2336
    %v2338 = vsel %vm1281, %v2331, 0.0
    %v2339 = vadd.f32 %v2337, %v2338
    %v2340 = vsel %vm1281, %v2333, 0.0
    %v2341 = vadd.f32 %v2339, %v2340
    %2342 = vadd.xlane.f32.xlu0 %v2341
    %v2343 = vpop.xlane.xlu0 %2342
    %v2344 = vmul.f32 %v2260, %v2260
    %v2345 = vmul.f32 %v2262, %v2262
    %v2346 = vmul.f32 %v2331, %v2331
    %v2347 = vmul.f32 %v2333, %v2333
    %v2348 = vsel %vm1281, %v2344, 0.0
    %v2349 = vsel %vm1281, %v2345, 0.0
    %v2350 = vadd.f32 %v2348, %v2349
    %v2351 = vsel %vm1281, %v2346, 0.0
    %v2352 = vadd.f32 %v2350, %v2351
    %v2353 = vsel %vm1281, %v2347, 0.0
    %v2354 = vadd.f32 %v2352, %v2353
    %2355 = vadd.xlane.f32.xlu0 %v2354
    %v2356 = vpop.xlane.xlu0 %2355
    %v2357 = vmul.f32 %v2343, 0.001953125
    %v2358 = vmul.f32 %v2356, 0.001953125
    %v2359 = vmul.f32 %v2357, %v2357
    %v2360 = vsub.f32 %v2358, %v2359
    %v2361 = vadd.f32 %v2360, 1e-05
    %v2362 = vrsqrt.pop %v2361
    %v2363 = vmul.f32 %v44, %v2362
    %v2364 = vmul.f32 %v2357, %v2363
    %2366 = vrot.lane.b32.xlu0 %v2364, 1
    %v2367 = vpop.permute.xlu0 %2366
    %v2369 = vsub.f32 %v44, %v2367
    %2371 = vset.pattern.permute.xlu0 2
    %2372 = vperm.xlu0 %2371, %v2363
    %v2373 = vpop.permute.xlu0 %2372
    %v2375 = vmul.f32 %v2260, %v2373
    %v2376 = vmul.f32 %v2262, %v2373
    %v2377 = vmul.f32 %v2331, %v2373
    %v2378 = vmul.f32 %v2333, %v2373
    %2380 = vset.pattern.permute.xlu0 3
    %2381 = vperm.xlu0 %2380, %v2369
    %v2382 = vpop.permute.xlu0 %2381
    %v2384 = vadd.f32 %v2375, %v2382
    %v2385 = vadd.f32 %v2376, %v2382
    %v2386 = vadd.f32 %v2377, %v2382
    %v2387 = vadd.f32 %v2378, %v2382
    %v2388 = vadd.f32 %v2384, %v42
    %v2389 = vadd.f32 %v2385, %v64
    %v2390 = vadd.f32 %v2386, %v43
    %v2391 = vadd.f32 %v2387, %v65
    %v2392 = vmax.f32 %v2388, 0.0
    %v2393 = vmax.f32 %v2389, 0.0
    %v2394 = vmax.f32 %v2390, 0.0
    %v2395 = vmax.f32 %v2391, 0.0
    %v2400 = vcombine.low %v2392, %v2393
    %v2401 = vcombine.low %v2394, %v2395
    %2404 = vst [vmem:[#allocation8] sm:$0xff] %v2400
    %2405 = vst [vmem:[#allocation8 + $0x8] sm:$0xff] %v2401
    // Predicated region
    $region26: #{tpu_custom_call.1} parent=1 // pred_check
      _
    $region27: #{tpu_custom_call.1} parent=1 // pred_check_branch
      %2407 = sbr.rel (0) target = $region29
    $region28: #{tpu_custom_call.1} parent=1 // pred_region
      %s2409 = ssub.s32 256, 256
      %2410 = vsyncadd [#allocation5], %s2409
      %s2412 = sshll.u32 [#allocation8], 4
      %s2413 = int_to_ptr.vmem [resolvable:$true] %s2412
      %2415 = dma.vmem_to_hbm [thread:$0]  %s2413, 256, %s4, [#allocation5]
    $region29: #{tpu_custom_call.1} parent=1 // pred_fallthru
      _
    // Predicated region
    $region30: #{tpu_custom_call.1} parent=1 // pred_check
      _
    $region31: #{tpu_custom_call.1} parent=1 // pred_check_branch
      %2417 = sbr.rel (0) target = $region33
    $region32: #{tpu_custom_call.1} parent=1 // pred_region
      %2418 = dma.done [#allocation5], 256
    $region33: #{tpu_custom_call.1} parent=1 // pred_fallthru
      _
    %2419 = vsyncpa [#allocation4], 1
    %2420 = vsyncpa [#allocation7], 1
    %2421 = vsyncpa [#allocation5], 1

</llo_original>
